<compile_context>
chip_gen: v7x
topology: tpu7x:2x2x1
jax: 0.10.0
libtpu: 0.0.40
codegen_flags: <defaults>
</compile_context>

<pallas_src>
import math
import functools

import jax
import jax.numpy as jnp
from jax import lax
from jax.experimental import pallas as pl
from jax.experimental.pallas import tpu as pltpu


def _rpe_attn_kernel(x_ref, xq_ref, wq_ref, bq_ref, wk_ref, bk_ref, wv_ref,
                     bv_ref, er_ref, o_ref, kt_scr, v_scr, *,
                     heads_per_step, d_head, q_tile, scale, matmul_dtype):
    """One (head-group, query-tile) step of RPE attention.

    Shapes: x (S, D); xq (tq, D); w* (D, G*dh); b* (1, G*dh);
            er (1, dh, S) pre-rolled by qi*tq; o (tq, G*dh);
            kt_scr (G*dh, S); v_scr (S, G*dh).
    """
    qi = pl.program_id(1)
    s_len = x_ref.shape[0]

    # ---- K / V projections: once per head group (first query tile) --------
    @pl.when(qi == 0)
    def _():
        x = x_ref[...]                                               # (S, D) bf16
        k = jnp.dot(x, wk_ref[...], preferred_element_type=jnp.float32) + bk_ref[...]
        v = jnp.dot(x, wv_ref[...], preferred_element_type=jnp.float32) + bv_ref[...]
        # Single transpose per group; per-head q@k^T then needs no XLU work.
        kt_scr[...] = k.T.astype(matmul_dtype)                       # (gdh, S)
        v_scr[...] = v.astype(matmul_dtype)                          # (S, gdh)

    # ---- Q projection for this query tile (scale folded in once) ----------
    q = jnp.dot(xq_ref[...], wq_ref[...], preferred_element_type=jnp.float32)
    q = ((q + bq_ref[...]) * scale).astype(matmul_dtype)             # (tq, gdh)

    er_t = er_ref[0]                                                 # (dh, S)

    # ---- Causal additive bias for this tile, shared by every head ---------
    row = lax.broadcasted_iota(jnp.int32, (q_tile, s_len), 0) + qi * q_tile
    col = lax.broadcasted_iota(jnp.int32, (q_tile, s_len), 1)
    neg_bias = jnp.where(col <= row, 0.0, -1e30).astype(jnp.float32)

    for h in range(heads_per_step):                   # static, unrolled
        lo = h * d_head
        qh = q[:, lo:lo + d_head]                                    # (tq, dh)

        # Content term: plain MXU matmul against the pre-transposed K.
        qk = jnp.dot(qh, kt_scr[pl.ds(lo, d_head), :],
                     preferred_element_type=jnp.float32)             # (tq, S)
        # Relative term against the per-tile pre-rolled Er_s^T.
        qe = jnp.dot(qh, er_t, preferred_element_type=jnp.float32)   # (tq, S)
        # Skew: local row r must be rolled by (global_row + 1); the tile
        # offset qi*tq is already folded into er_t, so only the static
        # per-row strided roll by (r + 1) remains (XLU slot, nearly free).
        srel = pltpu.roll(qe, shift=1, axis=1, stride=1, stride_axis=0)

        logits = qk + srel + neg_bias                                # f32
        m = jnp.max(logits, axis=-1, keepdims=True)
        e = jnp.exp(logits - m)
        denom = jnp.sum(e, axis=-1, keepdims=True)
        # Normalize the (tq, dh) PV result, not the (tq, S) probabilities.
        pv = jnp.dot(e.astype(matmul_dtype), v_scr[:, pl.ds(lo, d_head)],
                     preferred_element_type=jnp.float32)
        o_ref[:, pl.ds(lo, d_head)] = (
            pv * pl.reciprocal(denom, approx=True)).astype(o_ref.dtype)


def _pick_heads_per_step(num_heads, d_head):
    """Smallest head group G with (G*d_head) % 128 == 0 (full lane width)."""
    for g in range(1, num_heads + 1):
        if num_heads % g == 0 and (g * d_head) % 128 == 0:
            return g
    return num_heads


def _pick_query_tile(seq_len):
    """Largest query-tile (<= 256, multiple of 8) that divides seq_len."""
    for t in (256, 128, 64, 32, 16, 8):
        if seq_len % t == 0:
            return t
    return seq_len          # fall back to full (unblocked) dimension


def rpe_forward(x, params, num_heads, max_len, *, heads_per_step=None,
                query_tile=None, matmul_dtype=jnp.bfloat16):
    """Pallas equivalent of RPE.forward.  x: (1, S, d_model) float32."""
    b, S, D = x.shape
    assert b == 1, "module hard-codes batch_size = 1"
    assert S <= max_len, "sequence length exceeds model capacity"
    H = num_heads
    dh = D // H

    G = heads_per_step if heads_per_step is not None else _pick_heads_per_step(H, dh)
    assert H % G == 0
    gdh = G * dh
    assert gdh % 128 == 0 or gdh == D, (
        f"head group lane width {gdh} must be a multiple of 128 or == d_model")
    n_groups = H // G

    tq = query_tile if query_tile is not None else _pick_query_tile(S)
    assert S % tq == 0, "query tile must divide the sequence length"
    n_q = S // tq

    scale = 1.0 / math.sqrt(dh)

    # bf16 operands in HBM (bf16-native MXUs, half the DMA bytes); f32 biases.
    x2 = x[0].astype(matmul_dtype)                               # (S, D)
    Wq = params["Wq"].astype(matmul_dtype)
    Wk = params["Wk"].astype(matmul_dtype)
    Wv = params["Wv"].astype(matmul_dtype)
    bq = params["bq"].reshape(1, D).astype(jnp.float32)
    bk = params["bk"].reshape(1, D).astype(jnp.float32)
    bv = params["bv"].reshape(1, D).astype(jnp.float32)

    # Only the last S rows of Er are used.  Pre-roll one copy of Er_s^T per
    # query tile (roll by qi*tq along the key axis) so the kernel's skew stays
    # a single static strided roll.  Size: (n_q, dh, S) bf16 — tiny.
    er_t = params["Er"][max_len - S:, :].T.astype(matmul_dtype)  # (dh, S)
    er_stack = jnp.stack([jnp.roll(er_t, t * tq, axis=1) for t in range(n_q)])

    kernel = functools.partial(
        _rpe_attn_kernel, heads_per_step=G, d_head=dh, q_tile=tq,
        scale=scale, matmul_dtype=matmul_dtype)

    # Shape-aware VMEM budget (32..64 MiB keeps v5e/v6e/v7x all safe).
    mm = jnp.dtype(matmul_dtype).itemsize
    vmem_est = (
        2 * S * D * mm            # resident x (pipeline holds 2 buffers)
        + 2 * tq * D * mm         # x query-tile blocks
        + 6 * D * gdh * mm        # Wq/Wk/Wv column blocks (double buffered)
        + 6 * gdh * 4             # biases
        + 2 * dh * S * mm         # pre-rolled Er tile
        + 2 * tq * gdh * 4        # output blocks
        + 2 * S * gdh * mm        # K^T / V scratch
        + 2 * S * gdh * 4         # f32 K/V before the cast (qi == 0 only)
        + 8 * tq * S * 4          # logits / exp / bias / srel live values
        + 4 * tq * gdh * 4        # q and per-head PV temporaries
    )
    vmem_limit = int(min(64 * 1024 * 1024,
                         max(32 * 1024 * 1024, vmem_est * 5 // 4)))

    out = pl.pallas_call(
        kernel,
        out_shape=jax.ShapeDtypeStruct((S, D), x.dtype),
        grid_spec=pltpu.PrefetchScalarGridSpec(
            num_scalar_prefetch=0,
            grid=(n_groups, n_q),
            in_specs=[
                pl.BlockSpec((S, D), lambda g, q: (0, 0)),        # x (resident)
                pl.BlockSpec((tq, D), lambda g, q: (q, 0)),       # x query tile
                pl.BlockSpec((D, gdh), lambda g, q: (0, g)),      # Wq cols
                pl.BlockSpec((1, gdh), lambda g, q: (0, g)),      # bq
                pl.BlockSpec((D, gdh), lambda g, q: (0, g)),      # Wk cols
                pl.BlockSpec((1, gdh), lambda g, q: (0, g)),      # bk
                pl.BlockSpec((D, gdh), lambda g, q: (0, g)),      # Wv cols
                pl.BlockSpec((1, gdh), lambda g, q: (0, g)),      # bv
                pl.BlockSpec((1, dh, S), lambda g, q: (q, 0, 0)), # rolled Er_s^T
            ],
            # Lane-dense (tq, gdh) output blocks tiling the (S, D) slab in
            # exactly torch's transpose+reshape layout (no wrapper transpose).
            out_specs=pl.BlockSpec((tq, gdh), lambda g, q: (q, g)),
            scratch_shapes=[
                pltpu.VMEM((gdh, S), matmul_dtype),   # K^T for current group
                pltpu.VMEM((S, gdh), matmul_dtype),   # V for current group
            ],
        ),
        compiler_params=pltpu.CompilerParams(
            # Head groups shard across TensorCores; the query-tile axis is
            # sequential so K/V scratch can be reused across it.
            dimension_semantics=("parallel", "arbitrary"),
            vmem_limit_bytes=vmem_limit,
        ),
    )(x2, x2, Wq, bq, Wk, bk, Wv, bv, er_stack)

    return out[None]                                              # (1, S, D)


def rpe_reference(x, params, num_heads, max_len):
    """Pure-JAX reference following the PyTorch code literally (incl. skew)."""
    b, S, D = x.shape
    H = num_heads
    dh = D // H
    q = (x @ params["Wq"] + params["bq"]).reshape(1, S, H, dh).transpose(0, 2, 1, 3)
    k_t = (x @ params["Wk"] + params["bk"]).reshape(1, S, H, dh).transpose(0, 2, 3, 1)
    v = (x @ params["Wv"] + params["bv"]).reshape(1, S, H, dh).transpose(0, 2, 1, 3)
    start = max_len - S
    Er_t = params["Er"][start:, :].T                                  # (dh, S)
    QEr = jnp.einsum("bhqd,ds->bhqs", q, Er_t)                        # (1,H,S,S)
    padded = jnp.pad(QEr, ((0, 0), (0, 0), (0, 0), (1, 0)))           # skew
    Srel = padded.reshape(1, H, S + 1, S)[:, :, 1:, :]
    QK_t = jnp.einsum("bhqd,bhds->bhqs", q, k_t)
    attn = (QK_t + Srel) / math.sqrt(dh)
    mask = jnp.tril(jnp.ones((S, S)))[None, None]
    attn = jnp.where(mask == 0, -jnp.inf, attn)
    attn = jax.nn.softmax(attn, axis=-1)
    out = jnp.einsum("bhqs,bhsd->bhqd", attn, v)
    return out.transpose(0, 2, 1, 3).reshape(1, S, D)


if __name__ == "__main__":
    # 4 heads of d_head=64 -> head groups of 2 (lane width 128), seq_len 256
    # with query_tile 128 -> grid (2, 2): exercises both the head-group axis
    # and the query-tile skew/mask offset path.  max_len > seq_len exercises
    # the Er row offset.
    d_model, num_heads, max_len, seq_len = 256, 4, 512, 256
    d_head = d_model // num_heads

    key = jax.random.PRNGKey(0)
    ks = jax.random.split(key, 8)
    bound = 1.0 / math.sqrt(d_model)
    params = {
        "Wq": jax.random.uniform(ks[0], (d_model, d_model), jnp.float32, -bound, bound),
        "bq": jax.random.uniform(ks[1], (d_model,), jnp.float32, -bound, bound),
        "Wk": jax.random.uniform(ks[2], (d_model, d_model), jnp.float32, -bound, bound),
        "bk": jax.random.uniform(ks[3], (d_model,), jnp.float32, -bound, bound),
        "Wv": jax.random.uniform(ks[4], (d_model, d_model), jnp.float32, -bound, bound),
        "bv": jax.random.uniform(ks[5], (d_model,), jnp.float32, -bound, bound),
        "Er": jax.random.normal(ks[6], (max_len, d_head), jnp.float32),
    }
    x = jax.random.normal(ks[7], (1, seq_len, d_model), jnp.float32)

    out = rpe_forward(x, params, num_heads, max_len, query_tile=128)
    out = jax.block_until_ready(out)

    ref = rpe_reference(x, params, num_heads, max_len)
    assert out.shape == (1, seq_len, d_model)
    # Tolerance accounts for bf16 matmul inputs + approx EUP reciprocal
    # (expected quantization error; accumulation and softmax are f32).
    assert jnp.allclose(out, ref, atol=5e-2, rtol=5e-2), "mismatch vs reference"

    print("KERNEL_OK")
</pallas_src>

<mosaic_0001>
module attributes {stable_mosaic.version = 11 : i64} {
  func.func @_rpe_attn_kernel(%arg0: i32, %arg1: i32, %arg2: memref<256x256xbf16, #tpu.memory_space<vmem>>, %arg3: memref<128x256xbf16, #tpu.memory_space<vmem>>, %arg4: memref<256x128xbf16, #tpu.memory_space<vmem>>, %arg5: memref<1x128xf32, #tpu.memory_space<vmem>>, %arg6: memref<256x128xbf16, #tpu.memory_space<vmem>>, %arg7: memref<1x128xf32, #tpu.memory_space<vmem>>, %arg8: memref<256x128xbf16, #tpu.memory_space<vmem>>, %arg9: memref<1x128xf32, #tpu.memory_space<vmem>>, %arg10: memref<1x64x256xbf16, #tpu.memory_space<vmem>>, %arg11: memref<128x128xf32, #tpu.memory_space<vmem>>, %arg12: memref<128x256xbf16, #tpu.memory_space<vmem>>, %arg13: memref<256x128xbf16, #tpu.memory_space<vmem>>) attributes {dimension_semantics = [#tpu.dimension_semantics<parallel>, #tpu.dimension_semantics<arbitrary>], iteration_bounds = array<i64: 2, 2>, scalar_prefetch = 0 : i64, scratch_operands = 2 : i64, tpu.core_type = #tpu.core_type<tc>, window_params = [{pipeline_mode = #tpu.pipeline_mode<synchronous>, transform_indices = @transform_0, window_bounds = array<i64: 256, 256>}, {transform_indices = @transform_1, window_bounds = array<i64: 128, 256>}, {transform_indices = @transform_2, window_bounds = array<i64: 256, 128>}, {transform_indices = @transform_3, window_bounds = array<i64: 1, 128>}, {transform_indices = @transform_4, window_bounds = array<i64: 256, 128>}, {transform_indices = @transform_5, window_bounds = array<i64: 1, 128>}, {transform_indices = @transform_6, window_bounds = array<i64: 256, 128>}, {transform_indices = @transform_7, window_bounds = array<i64: 1, 128>}, {transform_indices = @transform_8, window_bounds = array<i64: 1, 64, 256>}, {transform_indices = @transform_9, window_bounds = array<i64: 128, 128>}]} {
    %c0_i32 = arith.constant 0 : i32
    %0 = arith.cmpi eq, %arg1, %c0_i32 : i32
    %1 = arith.extui %0 : i1 to i32
    %c0_i32_0 = arith.constant 0 : i32
    %2 = arith.cmpi ne, %1, %c0_i32_0 : i32
    scf.if %2 {
      %c0_34 = arith.constant 0 : index
      %c0_35 = arith.constant 0 : index
      %65 = vector.load %arg2[%c0_34, %c0_35] : memref<256x256xbf16, #tpu.memory_space<vmem>>, vector<256x256xbf16>
      %c0_36 = arith.constant 0 : index
      %c0_37 = arith.constant 0 : index
      %66 = vector.load %arg6[%c0_36, %c0_37] : memref<256x128xbf16, #tpu.memory_space<vmem>>, vector<256x128xbf16>
      %cst_38 = arith.constant dense<0.000000e+00> : vector<256x128xf32>
      %67 = tpu.matmul %65, %66, %cst_38 {dimension_numbers = #tpu.dot_dimension_numbers<[1], [0], [0], [1], [0, 0, 1, 1], [], []>} : vector<256x256xbf16>, vector<256x128xbf16>, vector<256x128xf32> -> vector<256x128xf32>
      %c0_39 = arith.constant 0 : index
      %c0_40 = arith.constant 0 : index
      %68 = vector.load %arg7[%c0_39, %c0_40] : memref<1x128xf32, #tpu.memory_space<vmem>>, vector<1x128xf32>
      %69 = vector.broadcast %68 : vector<1x128xf32> to vector<256x128xf32>
      %70 = arith.addf %67, %69 : vector<256x128xf32>
      %c0_41 = arith.constant 0 : index
      %c0_42 = arith.constant 0 : index
      %71 = vector.load %arg8[%c0_41, %c0_42] : memref<256x128xbf16, #tpu.memory_space<vmem>>, vector<256x128xbf16>
      %cst_43 = arith.constant dense<0.000000e+00> : vector<256x128xf32>
      %72 = tpu.matmul %65, %71, %cst_43 {dimension_numbers = #tpu.dot_dimension_numbers<[1], [0], [0], [1], [0, 0, 1, 1], [], []>} : vector<256x256xbf16>, vector<256x128xbf16>, vector<256x128xf32> -> vector<256x128xf32>
      %c0_44 = arith.constant 0 : index
      %c0_45 = arith.constant 0 : index
      %73 = vector.load %arg9[%c0_44, %c0_45] : memref<1x128xf32, #tpu.memory_space<vmem>>, vector<1x128xf32>
      %74 = vector.broadcast %73 : vector<1x128xf32> to vector<256x128xf32>
      %75 = arith.addf %72, %74 : vector<256x128xf32>
      %76 = tpu.transpose %70, [1, 0] : vector<256x128xf32> -> vector<128x256xf32>
      %77 = arith.truncf %76 : vector<128x256xf32> to vector<128x256xbf16>
      %c0_46 = arith.constant 0 : index
      %c0_47 = arith.constant 0 : index
      %78 = vector.load %arg12[%c0_46, %c0_47] : memref<128x256xbf16, #tpu.memory_space<vmem>>, vector<128x256xbf16>
      tpu.vector_store %arg12[%c0_46, %c0_47], %77 {strides = array<i32>} : memref<128x256xbf16, #tpu.memory_space<vmem>>, vector<128x256xbf16>,
      %79 = arith.truncf %75 : vector<256x128xf32> to vector<256x128xbf16>
      %c0_48 = arith.constant 0 : index
      %c0_49 = arith.constant 0 : index
      %80 = vector.load %arg13[%c0_48, %c0_49] : memref<256x128xbf16, #tpu.memory_space<vmem>>, vector<256x128xbf16>
      tpu.vector_store %arg13[%c0_48, %c0_49], %79 {strides = array<i32>} : memref<256x128xbf16, #tpu.memory_space<vmem>>, vector<256x128xbf16>,
    } else {
    }
    %c0 = arith.constant 0 : index
    %c0_1 = arith.constant 0 : index
    %3 = vector.load %arg3[%c0, %c0_1] : memref<128x256xbf16, #tpu.memory_space<vmem>>, vector<128x256xbf16>
    %c0_2 = arith.constant 0 : index
    %c0_3 = arith.constant 0 : index
    %4 = vector.load %arg4[%c0_2, %c0_3] : memref<256x128xbf16, #tpu.memory_space<vmem>>, vector<256x128xbf16>
    %cst = arith.constant dense<0.000000e+00> : vector<128x128xf32>
    %5 = tpu.matmul %3, %4, %cst {dimension_numbers = #tpu.dot_dimension_numbers<[1], [0], [0], [1], [0, 0, 1, 1], [], []>} : vector<128x256xbf16>, vector<256x128xbf16>, vector<128x128xf32> -> vector<128x128xf32>
    %c0_4 = arith.constant 0 : index
    %c0_5 = arith.constant 0 : index
    %6 = vector.load %arg5[%c0_4, %c0_5] : memref<1x128xf32, #tpu.memory_space<vmem>>, vector<1x128xf32>
    %7 = vector.broadcast %6 : vector<1x128xf32> to vector<128x128xf32>
    %8 = arith.addf %5, %7 : vector<128x128xf32>
    %cst_6 = arith.constant 1.250000e-01 : f32
    %9 = vector.broadcast %cst_6 : f32 to vector<128x128xf32>
    %10 = arith.mulf %8, %9 : vector<128x128xf32>
    %11 = arith.truncf %10 : vector<128x128xf32> to vector<128x128xbf16>
    %c0_7 = arith.constant 0 : index
    %c0_8 = arith.constant 0 : index
    %c0_9 = arith.constant 0 : index
    %12 = vector.load %arg10[%c0_7, %c0_8, %c0_9] : memref<1x64x256xbf16, #tpu.memory_space<vmem>>, vector<1x64x256xbf16>
    %13 = vector.shape_cast %12 : vector<1x64x256xbf16> to vector<64x256xbf16>
    %14 = tpu.iota {dimensions = array<i32: 0>} : vector<128x256xi32>
    %c128_i32 = arith.constant 128 : i32
    %15 = arith.muli %arg1, %c128_i32 : i32
    %16 = vector.broadcast %15 : i32 to vector<128x256xi32>
    %17 = arith.addi %14, %16 : vector<128x256xi32>
    %18 = tpu.iota {dimensions = array<i32: 1>} : vector<128x256xi32>
    %19 = arith.cmpi sle, %18, %17 : vector<128x256xi32>
    %cst_10 = arith.constant 0.000000e+00 : f32
    %cst_11 = arith.constant -1.000000e+30 : f32
    %20 = vector.broadcast %cst_10 : f32 to vector<128x256xf32>
    %21 = vector.broadcast %cst_11 : f32 to vector<128x256xf32>
    %22 = arith.select %19, %20, %21 : vector<128x256xi1>, vector<128x256xf32>
    %23 = vector.extract_strided_slice %11 {offsets = [0, 0], sizes = [128, 64], strides = [1, 1]} : vector<128x128xbf16> to vector<128x64xbf16>
    %c0_12 = arith.constant 0 : index
    %c0_13 = arith.constant 0 : index
    %24 = vector.load %arg12[%c0_12, %c0_13] : memref<128x256xbf16, #tpu.memory_space<vmem>>, vector<64x256xbf16>
    %cst_14 = arith.constant dense<0.000000e+00> : vector<128x256xf32>
    %25 = tpu.matmul %23, %24, %cst_14 {dimension_numbers = #tpu.dot_dimension_numbers<[1], [0], [0], [1], [0, 0, 1, 1], [], []>} : vector<128x64xbf16>, vector<64x256xbf16>, vector<128x256xf32> -> vector<128x256xf32>
    %cst_15 = arith.constant dense<0.000000e+00> : vector<128x256xf32>
    %26 = tpu.matmul %23, %13, %cst_15 {dimension_numbers = #tpu.dot_dimension_numbers<[1], [0], [0], [1], [0, 0, 1, 1], [], []>} : vector<128x64xbf16>, vector<64x256xbf16>, vector<128x256xf32> -> vector<128x256xf32>
    %c1_i32 = arith.constant 1 : i32
    %27 = tpu.dynamic_rotate %26 by %c1_i32 dim 1 {stride = 1 : si32, stride_dimension = 0 : si32} : vector<128x256xf32>, i32 -> vector<128x256xf32>
    %28 = arith.addf %25, %27 : vector<128x256xf32>
    %29 = arith.addf %28, %22 : vector<128x256xf32>
    %cst_16 = arith.constant dense<0xFF800000> : vector<128xf32>
    %30 = vector.multi_reduction <maximumf>, %29, %cst_16 [1] : vector<128x256xf32> to vector<128xf32>
    %31 = vector.shape_cast %30 : vector<128xf32> to vector<128x1xf32>
    %32 = vector.broadcast %31 : vector<128x1xf32> to vector<128x256xf32>
    %33 = arith.subf %29, %32 : vector<128x256xf32>
    %34 = math.exp %33 : vector<128x256xf32>
    %cst_17 = arith.constant dense<0.000000e+00> : vector<128xf32>
    %35 = vector.multi_reduction <add>, %34, %cst_17 [1] : vector<128x256xf32> to vector<128xf32>
    %36 = vector.shape_cast %35 : vector<128xf32> to vector<128x1xf32>
    %37 = arith.truncf %34 : vector<128x256xf32> to vector<128x256xbf16>
    %c0_18 = arith.constant 0 : index
    %c0_19 = arith.constant 0 : index
    %38 = vector.load %arg13[%c0_18, %c0_19] : memref<256x128xbf16, #tpu.memory_space<vmem>>, vector<256x64xbf16>
    %cst_20 = arith.constant dense<0.000000e+00> : vector<128x64xf32>
    %39 = tpu.matmul %37, %38, %cst_20 {dimension_numbers = #tpu.dot_dimension_numbers<[1], [0], [0], [1], [0, 0, 1, 1], [], []>} : vector<128x256xbf16>, vector<256x64xbf16>, vector<128x64xf32> -> vector<128x64xf32>
    %40 = tpu.reciprocal %36 {approx = true} : vector<128x1xf32> -> vector<128x1xf32>
    %41 = vector.broadcast %40 : vector<128x1xf32> to vector<128x64xf32>
    %42 = arith.mulf %39, %41 : vector<128x64xf32>
    %c0_21 = arith.constant 0 : index
    %c0_22 = arith.constant 0 : index
    %43 = vector.load %arg11[%c0_21, %c0_22] : memref<128x128xf32, #tpu.memory_space<vmem>>, vector<128x64xf32>
    tpu.vector_store %arg11[%c0_21, %c0_22], %42 {strides = array<i32>} : memref<128x128xf32, #tpu.memory_space<vmem>>, vector<128x64xf32>,
    %44 = vector.extract_strided_slice %11 {offsets = [0, 64], sizes = [128, 64], strides = [1, 1]} : vector<128x128xbf16> to vector<128x64xbf16>
    %c64 = arith.constant 64 : index
    %c0_23 = arith.constant 0 : index
    %45 = vector.load %arg12[%c64, %c0_23] : memref<128x256xbf16, #tpu.memory_space<vmem>>, vector<64x256xbf16>
    %cst_24 = arith.constant dense<0.000000e+00> : vector<128x256xf32>
    %46 = tpu.matmul %44, %45, %cst_24 {dimension_numbers = #tpu.dot_dimension_numbers<[1], [0], [0], [1], [0, 0, 1, 1], [], []>} : vector<128x64xbf16>, vector<64x256xbf16>, vector<128x256xf32> -> vector<128x256xf32>
    %cst_25 = arith.constant dense<0.000000e+00> : vector<128x256xf32>
    %47 = tpu.matmul %44, %13, %cst_25 {dimension_numbers = #tpu.dot_dimension_numbers<[1], [0], [0], [1], [0, 0, 1, 1], [], []>} : vector<128x64xbf16>, vector<64x256xbf16>, vector<128x256xf32> -> vector<128x256xf32>
    %c1_i32_26 = arith.constant 1 : i32
    %48 = tpu.dynamic_rotate %47 by %c1_i32_26 dim 1 {stride = 1 : si32, stride_dimension = 0 : si32} : vector<128x256xf32>, i32 -> vector<128x256xf32>
    %49 = arith.addf %46, %48 : vector<128x256xf32>
    %50 = arith.addf %49, %22 : vector<128x256xf32>
    %cst_27 = arith.constant dense<0xFF800000> : vector<128xf32>
    %51 = vector.multi_reduction <maximumf>, %50, %cst_27 [1] : vector<128x256xf32> to vector<128xf32>
    %52 = vector.shape_cast %51 : vector<128xf32> to vector<128x1xf32>
    %53 = vector.broadcast %52 : vector<128x1xf32> to vector<128x256xf32>
    %54 = arith.subf %50, %53 : vector<128x256xf32>
    %55 = math.exp %54 : vector<128x256xf32>
    %cst_28 = arith.constant dense<0.000000e+00> : vector<128xf32>
    %56 = vector.multi_reduction <add>, %55, %cst_28 [1] : vector<128x256xf32> to vector<128xf32>
    %57 = vector.shape_cast %56 : vector<128xf32> to vector<128x1xf32>
    %58 = arith.truncf %55 : vector<128x256xf32> to vector<128x256xbf16>
    %c0_29 = arith.constant 0 : index
    %c64_30 = arith.constant 64 : index
    %59 = vector.load %arg13[%c0_29, %c64_30] : memref<256x128xbf16, #tpu.memory_space<vmem>>, vector<256x64xbf16>
    %cst_31 = arith.constant dense<0.000000e+00> : vector<128x64xf32>
    %60 = tpu.matmul %58, %59, %cst_31 {dimension_numbers = #tpu.dot_dimension_numbers<[1], [0], [0], [1], [0, 0, 1, 1], [], []>} : vector<128x256xbf16>, vector<256x64xbf16>, vector<128x64xf32> -> vector<128x64xf32>
    %61 = tpu.reciprocal %57 {approx = true} : vector<128x1xf32> -> vector<128x1xf32>
    %62 = vector.broadcast %61 : vector<128x1xf32> to vector<128x64xf32>
    %63 = arith.mulf %60, %62 : vector<128x64xf32>
    %c0_32 = arith.constant 0 : index
    %c64_33 = arith.constant 64 : index
    %64 = vector.load %arg11[%c0_32, %c64_33] : memref<128x128xf32, #tpu.memory_space<vmem>>, vector<128x64xf32>
    tpu.vector_store %arg11[%c0_32, %c64_33], %63 {strides = array<i32>} : memref<128x128xf32, #tpu.memory_space<vmem>>, vector<128x64xf32>,
    return
  }
  func.func @transform_0(%arg0: i32, %arg1: i32) -> (i32, i32) {
    %c0_i32 = arith.constant 0 : i32
    %c0_i32_0 = arith.constant 0 : i32
    %c0_i32_1 = arith.constant 0 : i32
    return %c0_i32, %c0_i32_0 : i32, i32
  }
  func.func @transform_1(%arg0: i32, %arg1: i32) -> (i32, i32) {
    %c0_i32 = arith.constant 0 : i32
    %c0_i32_0 = arith.constant 0 : i32
    return %arg1, %c0_i32 : i32, i32
  }
  func.func @transform_2(%arg0: i32, %arg1: i32) -> (i32, i32) {
    %c0_i32 = arith.constant 0 : i32
    %c0_i32_0 = arith.constant 0 : i32
    return %c0_i32, %arg0 : i32, i32
  }
  func.func @transform_3(%arg0: i32, %arg1: i32) -> (i32, i32) {
    %c0_i32 = arith.constant 0 : i32
    %c0_i32_0 = arith.constant 0 : i32
    return %c0_i32, %arg0 : i32, i32
  }
  func.func @transform_4(%arg0: i32, %arg1: i32) -> (i32, i32) {
    %c0_i32 = arith.constant 0 : i32
    %c0_i32_0 = arith.constant 0 : i32
    return %c0_i32, %arg0 : i32, i32
  }
  func.func @transform_5(%arg0: i32, %arg1: i32) -> (i32, i32) {
    %c0_i32 = arith.constant 0 : i32
    %c0_i32_0 = arith.constant 0 : i32
    return %c0_i32, %arg0 : i32, i32
  }
  func.func @transform_6(%arg0: i32, %arg1: i32) -> (i32, i32) {
    %c0_i32 = arith.constant 0 : i32
    %c0_i32_0 = arith.constant 0 : i32
    return %c0_i32, %arg0 : i32, i32
  }
  func.func @transform_7(%arg0: i32, %arg1: i32) -> (i32, i32) {
    %c0_i32 = arith.constant 0 : i32
    %c0_i32_0 = arith.constant 0 : i32
    return %c0_i32, %arg0 : i32, i32
  }
  func.func @transform_8(%arg0: i32, %arg1: i32) -> (i32, i32, i32) {
    %c0_i32 = arith.constant 0 : i32
    %c0_i32_0 = arith.constant 0 : i32
    %c0_i32_1 = arith.constant 0 : i32
    return %arg1, %c0_i32, %c0_i32_0 : i32, i32, i32
  }
  func.func @transform_9(%arg0: i32, %arg1: i32) -> (i32, i32) {
    %c0_i32 = arith.constant 0 : i32
    return %arg1, %arg0 : i32, i32
  }
}

</mosaic_0001>

<llo_original>
// kernel: tpu_custom_call.1
$region0: #{tpu_custom_call.1}
  #allocation0 [shape = 'u32[]', space=smem, size = 0x4, offset = 0x4, fixed_abs, tag = 'smem constant byte address 0x4 - core index']
  #allocation1 [shape = 'u32[144,128]{1,0:T(1,128)}', space=vmem, size = 0x12000, scoped, tag = 'internal scratch']
  #allocation2 [shape = 'bf16[128,256]{1,0:T(16,128)(2,1)}', space=vmem, size = 0x10000, scoped, tag = 'scratch operand']
  #allocation3 [shape = 'bf16[256,128]{1,0:T(16,128)(2,1)}', space=vmem, size = 0x10000, scoped, tag = 'scratch operand']
  %s0 = inlined_call_operand.hbm [shape: bf16[256,256], index: 0, kind: input, shape index: {}]
  %s1 = inlined_call_operand.hbm [shape: bf16[256,256], index: 1, kind: input, shape index: {}]
  %s2 = inlined_call_operand.hbm [shape: bf16[256,256], index: 2, kind: input, shape index: {}]
  %s3 = inlined_call_operand.vmem [shape: f32[1,256], index: 3, kind: input, shape index: {}]
  %s4 = inlined_call_operand.hbm [shape: bf16[256,256], index: 4, kind: input, shape index: {}]
  %s5 = inlined_call_operand.vmem [shape: f32[1,256], index: 5, kind: input, shape index: {}]
  %s6 = inlined_call_operand.hbm [shape: bf16[256,256], index: 6, kind: input, shape index: {}]
  %s7 = inlined_call_operand.vmem [shape: f32[1,256], index: 7, kind: input, shape index: {}]
  %s8 = inlined_call_operand.hbm [shape: bf16[2,64,256], index: 8, kind: input, shape index: {}]
  %s9 = inlined_call_operand.hbm [shape: f32[256,256], index: 9, kind: output, shape index: {}]
  %s10 = sld [smem:[#allocation0]]
  $region97: #{tpu_custom_call.1} parent=0
    _
  %s12 = ssub.s32 1, %s10
  %s13 = scalar_select 0, %s12, %s10
  $region1: #{tpu_custom_call.1} parent=0
    #allocation4 [shape = 'u8[131072]{0}', space=vmem, size = 0x20000, scoped, tag = 'input window, operand 0, single buffered']
    #allocation5 [shape = 's32[2]{0}', space=sflag, size = 0x8, scoped, tag = 'scoped memory for tpu_custom_call.1']
    #allocation6 [shape = 's32[2]{0}', space=sflag, size = 0x8, scoped, tag = 'scoped memory for tpu_custom_call.1']
    #allocation7 [shape = 'u8[131072]{0}', space=vmem, size = 0x20000, scoped, tag = 'input window, operand 1']
    #allocation8 [shape = 's32[2]{0}', space=sflag, size = 0x8, scoped, tag = 'scoped memory for tpu_custom_call.1']
    #allocation9 [shape = 'u8[131072]{0}', space=vmem, size = 0x20000, scoped, tag = 'input window, operand 2']
    #allocation10 [shape = 'u8[131072]{0}', space=vmem, size = 0x20000, scoped, tag = 'input window, operand 4']
    #allocation11 [shape = 's32[2]{0}', space=sflag, size = 0x8, scoped, tag = 'scoped memory for tpu_custom_call.1']
    #allocation12 [shape = 'u8[131072]{0}', space=vmem, size = 0x20000, scoped, tag = 'input window, operand 6']
    #allocation13 [shape = 'u8[65536]{0}', space=vmem, size = 0x10000, scoped, tag = 'input window, operand 8']
    #allocation14 [shape = 's32[2]{0}', space=sflag, size = 0x8, scoped, tag = 'scoped memory for tpu_custom_call.1']
    #allocation15 [shape = 'u8[131072]{0}', space=vmem, size = 0x20000, scoped, tag = 'output window, operand 0']
    %14 = vsyncpa [#allocation5], 0
    %15 = vsyncpa [#allocation8], 0
    %s16 = scalar_lea.sflag [#allocation8], 1
    %17 = vsyncpa %s16, 0
    %18 = vsyncpa [#allocation11], 0
    %s19 = scalar_lea.sflag [#allocation11], 1
    %20 = vsyncpa %s19, 0
    %21 = vsyncpa [#allocation14], 0
    %s22 = scalar_lea.sflag [#allocation14], 1
    %23 = vsyncpa %s22, 0
    %24 = vsyncpa [#allocation6], 0
    %s25 = scalar_lea.sflag [#allocation6], 1
    %26 = vsyncpa %s25, 0
    loop: start=0, step=1, limit=6
    $region2: #{tpu_custom_call.1} parent=1 // loop_pre_header
      _
    $region3: #{tpu_custom_call.1} parent=1 // loop_header
      %s28 = sphi 0, %s32
      %p29 = scmp.ge.s32.totalorder %s28, 6
      %s35 = sphi 0, %s47
      %s36 = sphi 0, %s43
      %s37 = sphi 0, %s35
      %s38 = sphi 0, %s36
      %s39 = sphi 0, %s37
      %s40 = sphi 0, %s38
      %s48 = sphi 0, %s48
      %s50 = sphi 0, %s48
      %s51 = sphi 0, %s50
      %s65 = sphi 0, %s51
      %s71 = sphi 0, %s73
      %s74 = sphi 0, %s71
      %s75 = sphi 0, %s74
      %s91 = sphi 0, %s75
      %s97 = sphi 0, %s99
      %s100 = sphi 0, %s97
      %s101 = sphi 0, %s100
      %s117 = sphi 0, %s101
      %s123 = sphi 0, %s125
      %s126 = sphi 0, %s123
      %s127 = sphi 0, %s126
      %s143 = sphi 0, %s127
      %s149 = sphi 0, %s151
      %s152 = sphi 0, %s149
      %s153 = sphi 0, %s152
      %s169 = sphi 0, %s153
      %s175 = sphi 0, %s177
      %s178 = sphi 0, %s175
      %s179 = sphi 0, %s178
      %s195 = sphi 0, %s179
      %s201 = sphi 0, %s203
      %s204 = sphi 0, %s201
      %s205 = sphi 0, %s204
      %s221 = sphi 0, %s205
      %s227 = sphi 0, %s229
      %s230 = sphi 0, %s227
      %s231 = sphi 0, %s230
      %s247 = sphi 0, %s231
      %s253 = sphi 0, %s255
      %s256 = sphi 0, %s253
      %s257 = sphi 0, %s256
      %s273 = sphi 0, %s257
      %s281 = sphi 0, %s283
      %s284 = sphi 0, %s281
      %s285 = sphi 0, %s284
      %s301 = sphi 0, %s285
    $region4: #{tpu_custom_call.1} parent=1 // loop_header_branch
      %31 = sbr.rel (%p29) target = $region8
    $region5: #{tpu_custom_call.1} parent=1 // loop_body
      %s33 = ssub.s32 %s28, 1
      %s34 = ssub.s32 %s28, 2
      %s41 = sadd.s32 1, %s36
      %p42 = scmp.ge.s32.totalorder %s41, 2
      %s43 = scalar_select %p42, 0, %s41
      %s44 = sadd.s32 1, %s35
      %s45 = scalar_select %p42, %s44, %s35
      %p46 = scmp.ge.s32.totalorder %s45, 2
      %s47 = scalar_select %p46, 0, %s45
      %s49 = sadd.s32 %s48, 1
      %p52 = scmp.eq.s32.totalorder %s28, 3
      %p53 = scmp.ne.s32.totalorder %s48, %s50
      %p54 = scmp.eq.s32.totalorder %s28, 0
      %p55 = por %p53, %p54
      %p56 = scmp.ne.s32.totalorder %s48, %s50
      %p57 = scmp.eq.s32.totalorder %s33, 3
      %p58 = por %p56, %p57
      %p59 = scmp.ne.s32.totalorder %s50, %s51
      %p60 = scmp.eq.s32.totalorder %s33, 0
      %p61 = por %p59, %p60
      %p62 = scmp.ne.s32.totalorder %s50, %s51
      %p63 = scmp.eq.s32.totalorder %s34, 3
      %p64 = por %p62, %p63
      %p66 = scmp.ne.s32.totalorder %s51, %s65
      %p67 = scmp.eq.s32.totalorder %s34, 0
      %p68 = por %p66, %p67
      %s69 = ssub.s32 %s36, %s43
      %p70 = scmp.eq.s32.totalorder %s69, 0
      %s72 = sadd.s32 %s71, 1
      %s73 = scalar_select %p70, %s71, %s72
      %p76 = pneg %p70
      %p77 = scmp.eq.s32.totalorder %s28, 3
      %p78 = por %p76, %p77
      %p79 = scmp.ne.s32.totalorder %s71, %s74
      %p80 = scmp.eq.s32.totalorder %s28, 0
      %p81 = por %p79, %p80
      %p82 = scmp.ne.s32.totalorder %s71, %s74
      %p83 = scmp.eq.s32.totalorder %s33, 3
      %p84 = por %p82, %p83
      %p85 = scmp.ne.s32.totalorder %s74, %s75
      %p86 = scmp.eq.s32.totalorder %s33, 0
      %p87 = por %p85, %p86
      %p88 = scmp.ne.s32.totalorder %s74, %s75
      %p89 = scmp.eq.s32.totalorder %s34, 3
      %p90 = por %p88, %p89
      %p92 = scmp.ne.s32.totalorder %s75, %s91
      %p93 = scmp.eq.s32.totalorder %s34, 0
      %p94 = por %p92, %p93
      %s95 = ssub.s32 %s35, %s47
      %p96 = scmp.eq.s32.totalorder %s95, 0
      %s98 = sadd.s32 %s97, 1
      %s99 = scalar_select %p96, %s97, %s98
      %p102 = pneg %p96
      %p103 = scmp.eq.s32.totalorder %s28, 3
      %p104 = por %p102, %p103
      %p105 = scmp.ne.s32.totalorder %s97, %s100
      %p106 = scmp.eq.s32.totalorder %s28, 0
      %p107 = por %p105, %p106
      %p108 = scmp.ne.s32.totalorder %s97, %s100
      %p109 = scmp.eq.s32.totalorder %s33, 3
      %p110 = por %p108, %p109
      %p111 = scmp.ne.s32.totalorder %s100, %s101
      %p112 = scmp.eq.s32.totalorder %s33, 0
      %p113 = por %p111, %p112
      %p114 = scmp.ne.s32.totalorder %s100, %s101
      %p115 = scmp.eq.s32.totalorder %s34, 3
      %p116 = por %p114, %p115
      %p118 = scmp.ne.s32.totalorder %s101, %s117
      %p119 = scmp.eq.s32.totalorder %s34, 0
      %p120 = por %p118, %p119
      %s121 = ssub.s32 %s35, %s47
      %p122 = scmp.eq.s32.totalorder %s121, 0
      %s124 = sadd.s32 %s123, 1
      %s125 = scalar_select %p122, %s123, %s124
      %p128 = pneg %p122
      %p129 = scmp.eq.s32.totalorder %s28, 3
      %p130 = por %p128, %p129
      %p131 = scmp.ne.s32.totalorder %s123, %s126
      %p132 = scmp.eq.s32.totalorder %s28, 0
      %p133 = por %p131, %p132
      %p134 = scmp.ne.s32.totalorder %s123, %s126
      %p135 = scmp.eq.s32.totalorder %s33, 3
      %p136 = por %p134, %p135
      %p137 = scmp.ne.s32.totalorder %s126, %s127
      %p138 = scmp.eq.s32.totalorder %s33, 0
      %p139 = por %p137, %p138
      %p140 = scmp.ne.s32.totalorder %s126, %s127
      %p141 = scmp.eq.s32.totalorder %s34, 3
      %p142 = por %p140, %p141
      %p144 = scmp.ne.s32.totalorder %s127, %s143
      %p145 = scmp.eq.s32.totalorder %s34, 0
      %p146 = por %p144, %p145
      %s147 = ssub.s32 %s35, %s47
      %p148 = scmp.eq.s32.totalorder %s147, 0
      %s150 = sadd.s32 %s149, 1
      %s151 = scalar_select %p148, %s149, %s150
      %p154 = pneg %p148
      %p155 = scmp.eq.s32.totalorder %s28, 3
      %p156 = por %p154, %p155
      %p157 = scmp.ne.s32.totalorder %s149, %s152
      %p158 = scmp.eq.s32.totalorder %s28, 0
      %p159 = por %p157, %p158
      %p160 = scmp.ne.s32.totalorder %s149, %s152
      %p161 = scmp.eq.s32.totalorder %s33, 3
      %p162 = por %p160, %p161
      %p163 = scmp.ne.s32.totalorder %s152, %s153
      %p164 = scmp.eq.s32.totalorder %s33, 0
      %p165 = por %p163, %p164
      %p166 = scmp.ne.s32.totalorder %s152, %s153
      %p167 = scmp.eq.s32.totalorder %s34, 3
      %p168 = por %p166, %p167
      %p170 = scmp.ne.s32.totalorder %s153, %s169
      %p171 = scmp.eq.s32.totalorder %s34, 0
      %p172 = por %p170, %p171
      %s173 = ssub.s32 %s35, %s47
      %p174 = scmp.eq.s32.totalorder %s173, 0
      %s176 = sadd.s32 %s175, 1
      %s177 = scalar_select %p174, %s175, %s176
      %p180 = pneg %p174
      %p181 = scmp.eq.s32.totalorder %s28, 3
      %p182 = por %p180, %p181
      %p183 = scmp.ne.s32.totalorder %s175, %s178
      %p184 = scmp.eq.s32.totalorder %s28, 0
      %p185 = por %p183, %p184
      %p186 = scmp.ne.s32.totalorder %s175, %s178
      %p187 = scmp.eq.s32.totalorder %s33, 3
      %p188 = por %p186, %p187
      %p189 = scmp.ne.s32.totalorder %s178, %s179
      %p190 = scmp.eq.s32.totalorder %s33, 0
      %p191 = por %p189, %p190
      %p192 = scmp.ne.s32.totalorder %s178, %s179
      %p193 = scmp.eq.s32.totalorder %s34, 3
      %p194 = por %p192, %p193
      %p196 = scmp.ne.s32.totalorder %s179, %s195
      %p197 = scmp.eq.s32.totalorder %s34, 0
      %p198 = por %p196, %p197
      %s199 = ssub.s32 %s35, %s47
      %p200 = scmp.eq.s32.totalorder %s199, 0
      %s202 = sadd.s32 %s201, 1
      %s203 = scalar_select %p200, %s201, %s202
      %p206 = pneg %p200
      %p207 = scmp.eq.s32.totalorder %s28, 3
      %p208 = por %p206, %p207
      %p209 = scmp.ne.s32.totalorder %s201, %s204
      %p210 = scmp.eq.s32.totalorder %s28, 0
      %p211 = por %p209, %p210
      %p212 = scmp.ne.s32.totalorder %s201, %s204
      %p213 = scmp.eq.s32.totalorder %s33, 3
      %p214 = por %p212, %p213
      %p215 = scmp.ne.s32.totalorder %s204, %s205
      %p216 = scmp.eq.s32.totalorder %s33, 0
      %p217 = por %p215, %p216
      %p218 = scmp.ne.s32.totalorder %s204, %s205
      %p219 = scmp.eq.s32.totalorder %s34, 3
      %p220 = por %p218, %p219
      %p222 = scmp.ne.s32.totalorder %s205, %s221
      %p223 = scmp.eq.s32.totalorder %s34, 0
      %p224 = por %p222, %p223
      %s225 = ssub.s32 %s35, %s47
      %p226 = scmp.eq.s32.totalorder %s225, 0
      %s228 = sadd.s32 %s227, 1
      %s229 = scalar_select %p226, %s227, %s228
      %p232 = pneg %p226
      %p233 = scmp.eq.s32.totalorder %s28, 3
      %p234 = por %p232, %p233
      %p235 = scmp.ne.s32.totalorder %s227, %s230
      %p236 = scmp.eq.s32.totalorder %s28, 0
      %p237 = por %p235, %p236
      %p238 = scmp.ne.s32.totalorder %s227, %s230
      %p239 = scmp.eq.s32.totalorder %s33, 3
      %p240 = por %p238, %p239
      %p241 = scmp.ne.s32.totalorder %s230, %s231
      %p242 = scmp.eq.s32.totalorder %s33, 0
      %p243 = por %p241, %p242
      %p244 = scmp.ne.s32.totalorder %s230, %s231
      %p245 = scmp.eq.s32.totalorder %s34, 3
      %p246 = por %p244, %p245
      %p248 = scmp.ne.s32.totalorder %s231, %s247
      %p249 = scmp.eq.s32.totalorder %s34, 0
      %p250 = por %p248, %p249
      %s251 = ssub.s32 %s36, %s43
      %p252 = scmp.eq.s32.totalorder %s251, 0
      %s254 = sadd.s32 %s253, 1
      %s255 = scalar_select %p252, %s253, %s254
      %p258 = pneg %p252
      %p259 = scmp.eq.s32.totalorder %s28, 3
      %p260 = por %p258, %p259
      %p261 = scmp.ne.s32.totalorder %s253, %s256
      %p262 = scmp.eq.s32.totalorder %s28, 0
      %p263 = por %p261, %p262
      %p264 = scmp.ne.s32.totalorder %s253, %s256
      %p265 = scmp.eq.s32.totalorder %s33, 3
      %p266 = por %p264, %p265
      %p267 = scmp.ne.s32.totalorder %s256, %s257
      %p268 = scmp.eq.s32.totalorder %s33, 0
      %p269 = por %p267, %p268
      %p270 = scmp.ne.s32.totalorder %s256, %s257
      %p271 = scmp.eq.s32.totalorder %s34, 3
      %p272 = por %p270, %p271
      %p274 = scmp.ne.s32.totalorder %s257, %s273
      %p275 = scmp.eq.s32.totalorder %s34, 0
      %p276 = por %p274, %p275
      %s277 = ssub.s32 %s36, %s43
      %s278 = ssub.s32 %s35, %s47
      %s279 = sor.u32 %s277, %s278
      %p280 = scmp.eq.s32.totalorder %s279, 0
      %s282 = sadd.s32 %s281, 1
      %s283 = scalar_select %p280, %s281, %s282
      %p286 = pneg %p280
      %p287 = scmp.eq.s32.totalorder %s28, 3
      %p288 = por %p286, %p287
      %p289 = scmp.ne.s32.totalorder %s281, %s284
      %p290 = scmp.eq.s32.totalorder %s28, 0
      %p291 = por %p289, %p290
      %p292 = scmp.ne.s32.totalorder %s281, %s284
      %p293 = scmp.eq.s32.totalorder %s33, 3
      %p294 = por %p292, %p293
      %p295 = scmp.ne.s32.totalorder %s284, %s285
      %p296 = scmp.eq.s32.totalorder %s33, 0
      %p297 = por %p295, %p296
      %p298 = scmp.ne.s32.totalorder %s284, %s285
      %p299 = scmp.eq.s32.totalorder %s34, 3
      %p300 = por %p298, %p299
      %p302 = scmp.ne.s32.totalorder %s285, %s301
      %p303 = scmp.eq.s32.totalorder %s34, 0
      %p304 = por %p302, %p303
      %p305 = scmp.le.s32.totalorder 1, %s28
      %p306 = scmp.lt.s32.totalorder %s28, 5
      %p307 = pnand %p305, %p306
      %p308 = pneg %p307
      // Predicated region
      $region9: #{tpu_custom_call.1} parent=5 // pred_check
        _
      $region10: #{tpu_custom_call.1} parent=5 // pred_check_branch
        %310 = sbr.rel (%p307) target = $region12
      $region11: #{tpu_custom_call.1} parent=5 // pred_region
        %s311 = ssub.s32 %s28, 1
        // Predicated region
        $region13: #{tpu_custom_call.1} parent=11 // pred_check
          %p312 = pneg %p61
        $region14: #{tpu_custom_call.1} parent=11 // pred_check_branch
          %314 = sbr.rel (%p312) target = $region16
        $region15: #{tpu_custom_call.1} parent=11 // pred_region
          %s316 = ssub.s32 4096, 4096
          %317 = vsyncadd [#allocation5], %s316
          %s318 = sshll.u32 [#allocation4], 4
          %s319 = int_to_ptr.vmem [resolvable:$true] %s318
          %324 = dma.hbm_to_vmem [thread:$0]  %s0, 4096, %s319, [#allocation5], 128, 128, 8
        $region16: #{tpu_custom_call.1} parent=11 // pred_fallthru
          _
      $region12: #{tpu_custom_call.1} parent=5 // pred_fallthru
        _
      %p325 = scmp.lt.s32.totalorder %s28, 4
      // Predicated region
      $region17: #{tpu_custom_call.1} parent=5 // pred_check
        %p326 = pneg %p325
      $region18: #{tpu_custom_call.1} parent=5 // pred_check_branch
        %328 = sbr.rel (%p326) target = $region20
      $region19: #{tpu_custom_call.1} parent=5 // pred_region
        // Predicated region
        $region21: #{tpu_custom_call.1} parent=19 // pred_check
          %p329 = pneg %p81
        $region22: #{tpu_custom_call.1} parent=19 // pred_check_branch
          %331 = sbr.rel (%p329) target = $region24
        $region23: #{tpu_custom_call.1} parent=19 // pred_region
          %s332 = sand.u32 %s28, 1
          %s333 = scalar_lea.sflag [#allocation8], %s332
          %s334 = sand.u32 %s71, 1
          %s335 = smul.addr %s334, 128
          %s336 = scalar_lea.vmem [#allocation7], %s335
          %s337 = smul.u32 16, %s36
          %s339 = ssub.s32 2048, 2048
          %340 = vsyncadd %s333, %s339
          %s341 = smul.addr %s337, 2
          %s342 = smul.addr %s341, 64
          %s343 = scalar_lea.hbm %s1, %s342
          %s344 = sshll.u32 %s336, 4
          %s345 = int_to_ptr.vmem [resolvable:$true] %s344
          %350 = dma.hbm_to_vmem [thread:$0]  %s343, 2048, %s345, %s333, 128, 128, 8
        $region24: #{tpu_custom_call.1} parent=19 // pred_fallthru
          _
        // Predicated region
        $region25: #{tpu_custom_call.1} parent=19 // pred_check
          %p351 = pneg %p107
        $region26: #{tpu_custom_call.1} parent=19 // pred_check_branch
          %353 = sbr.rel (%p351) target = $region28
        $region27: #{tpu_custom_call.1} parent=19 // pred_region
          %s354 = sand.u32 %s28, 1
          %s355 = scalar_lea.sflag [#allocation8], %s354
          %s356 = sand.u32 %s97, 1
          %s357 = smul.addr %s356, 128
          %s358 = scalar_lea.vmem [#allocation9], %s357
          %s360 = ssub.s32 2048, 2048
          %361 = vsyncadd %s355, %s360
          %s362 = smul.addr %s35, 64
          %s363 = scalar_lea.hbm %s2, %s362
          %s364 = sshll.u32 %s358, 4
          %s365 = int_to_ptr.vmem [resolvable:$true] %s364
          %370 = dma.hbm_to_vmem [thread:$0]  %s363, 2048, %s365, %s355, 128, 64, 4
        $region28: #{tpu_custom_call.1} parent=19 // pred_fallthru
          _
        // Predicated region
        $region29: #{tpu_custom_call.1} parent=19 // pred_check
          %p371 = pneg %p133
        $region30: #{tpu_custom_call.1} parent=19 // pred_check_branch
          %373 = sbr.rel (%p371) target = $region32
        $region31: #{tpu_custom_call.1} parent=19 // pred_region
          %p374 = scmp.lt.s32.totalorder %s35, 1
          %s375 = scalar_select %p374, %s35, 1
          %s376 = scalar_lea.vmem %s3, %s375
        $region32: #{tpu_custom_call.1} parent=19 // pred_fallthru
          _
        // Predicated region
        $region33: #{tpu_custom_call.1} parent=19 // pred_check
          %p377 = pneg %p159
        $region34: #{tpu_custom_call.1} parent=19 // pred_check_branch
          %379 = sbr.rel (%p377) target = $region36
        $region35: #{tpu_custom_call.1} parent=19 // pred_region
          %s380 = sand.u32 %s28, 1
          %s381 = scalar_lea.sflag [#allocation11], %s380
          %s382 = sand.u32 %s149, 1
          %s383 = smul.addr %s382, 128
          %s384 = scalar_lea.vmem [#allocation10], %s383
          %s386 = ssub.s32 2048, 2048
          %387 = vsyncadd %s381, %s386
          %s388 = smul.addr %s35, 64
          %s389 = scalar_lea.hbm %s4, %s388
          %s390 = sshll.u32 %s384, 4
          %s391 = int_to_ptr.vmem [resolvable:$true] %s390
          %396 = dma.hbm_to_vmem [thread:$0]  %s389, 2048, %s391, %s381, 128, 64, 4
        $region36: #{tpu_custom_call.1} parent=19 // pred_fallthru
          _
        // Predicated region
        $region37: #{tpu_custom_call.1} parent=19 // pred_check
          %p397 = pneg %p185
        $region38: #{tpu_custom_call.1} parent=19 // pred_check_branch
          %399 = sbr.rel (%p397) target = $region40
        $region39: #{tpu_custom_call.1} parent=19 // pred_region
          %p400 = scmp.lt.s32.totalorder %s35, 1
          %s401 = scalar_select %p400, %s35, 1
          %s402 = scalar_lea.vmem %s5, %s401
        $region40: #{tpu_custom_call.1} parent=19 // pred_fallthru
          _
        // Predicated region
        $region41: #{tpu_custom_call.1} parent=19 // pred_check
          %p403 = pneg %p211
        $region42: #{tpu_custom_call.1} parent=19 // pred_check_branch
          %405 = sbr.rel (%p403) target = $region44
        $region43: #{tpu_custom_call.1} parent=19 // pred_region
          %s406 = sand.u32 %s28, 1
          %s407 = scalar_lea.sflag [#allocation11], %s406
          %s408 = sand.u32 %s201, 1
          %s409 = smul.addr %s408, 128
          %s410 = scalar_lea.vmem [#allocation12], %s409
          %s412 = ssub.s32 2048, 2048
          %413 = vsyncadd %s407, %s412
          %s414 = smul.addr %s35, 64
          %s415 = scalar_lea.hbm %s6, %s414
          %s416 = sshll.u32 %s410, 4
          %s417 = int_to_ptr.vmem [resolvable:$true] %s416
          %422 = dma.hbm_to_vmem [thread:$0]  %s415, 2048, %s417, %s407, 128, 64, 4
        $region44: #{tpu_custom_call.1} parent=19 // pred_fallthru
          _
        // Predicated region
        $region45: #{tpu_custom_call.1} parent=19 // pred_check
          %p423 = pneg %p237
        $region46: #{tpu_custom_call.1} parent=19 // pred_check_branch
          %425 = sbr.rel (%p423) target = $region48
        $region47: #{tpu_custom_call.1} parent=19 // pred_region
          %p426 = scmp.lt.s32.totalorder %s35, 1
          %s427 = scalar_select %p426, %s35, 1
          %s428 = scalar_lea.vmem %s7, %s427
        $region48: #{tpu_custom_call.1} parent=19 // pred_fallthru
          _
        // Predicated region
        $region49: #{tpu_custom_call.1} parent=19 // pred_check
          %p429 = pneg %p263
        $region50: #{tpu_custom_call.1} parent=19 // pred_check_branch
          %431 = sbr.rel (%p429) target = $region52
        $region51: #{tpu_custom_call.1} parent=19 // pred_region
          %s432 = sand.u32 %s253, 1
          %s433 = scalar_lea.sflag [#allocation14], %s432
          %s434 = sand.u32 %s253, 1
          %s435 = smul.addr %s434, 64
          %s436 = scalar_lea.vmem [#allocation13], %s435
          %s438 = ssub.s32 1024, 1024
          %439 = vsyncadd %s433, %s438
          %s440 = smul.addr %s36, 16
          %s441 = smul.addr %s440, 64
          %s442 = scalar_lea.hbm %s8, %s441
          %s443 = sshll.u32 %s436, 4
          %s444 = int_to_ptr.vmem [resolvable:$true] %s443
          %449 = dma.hbm_to_vmem [thread:$0]  %s442, 1024, %s444, %s433, 128, 128, 8
        $region52: #{tpu_custom_call.1} parent=19 // pred_fallthru
          _
      $region20: #{tpu_custom_call.1} parent=5 // pred_fallthru
        _
      %p450 = scmp.le.s32.totalorder 1, %s28
      %p451 = scmp.lt.s32.totalorder %s28, 5
      %p452 = pnand %p450, %p451
      %p453 = pneg %p452
      // Predicated region
      $region53: #{tpu_custom_call.1} parent=5 // pred_check
        _
      $region54: #{tpu_custom_call.1} parent=5 // pred_check_branch
        %455 = sbr.rel (%p452) target = $region56
      $region55: #{tpu_custom_call.1} parent=5 // pred_region
        %s456 = ssub.s32 %s28, 1
        // Predicated region
        $region57: #{tpu_custom_call.1} parent=55 // pred_check
          %p457 = pneg %p61
        $region58: #{tpu_custom_call.1} parent=55 // pred_check_branch
          %459 = sbr.rel (%p457) target = $region60
        $region59: #{tpu_custom_call.1} parent=55 // pred_region
          %460 = dma.done [#allocation5], 4096
        $region60: #{tpu_custom_call.1} parent=55 // pred_fallthru
          _
        %s461 = sand.u32 %s33, 1
        %s462 = scalar_lea.sflag [#allocation8], %s461
        %s463 = sand.u32 %s74, 1
        %s464 = smul.addr %s463, 128
        %s465 = scalar_lea.vmem [#allocation7], %s464
        // Predicated region
        $region61: #{tpu_custom_call.1} parent=55 // pred_check
          %p466 = pneg %p87
        $region62: #{tpu_custom_call.1} parent=55 // pred_check_branch
          %468 = sbr.rel (%p466) target = $region64
        $region63: #{tpu_custom_call.1} parent=55 // pred_region
          %469 = dma.done %s462, 2048
        $region64: #{tpu_custom_call.1} parent=55 // pred_fallthru
          _
        %s470 = sand.u32 %s33, 1
        %s471 = scalar_lea.sflag [#allocation8], %s470
        %s472 = sand.u32 %s100, 1
        %s473 = smul.addr %s472, 128
        %s474 = scalar_lea.vmem [#allocation9], %s473
        // Predicated region
        $region65: #{tpu_custom_call.1} parent=55 // pred_check
          %p475 = pneg %p113
        $region66: #{tpu_custom_call.1} parent=55 // pred_check_branch
          %477 = sbr.rel (%p475) target = $region68
        $region67: #{tpu_custom_call.1} parent=55 // pred_region
          %478 = dma.done %s471, 2048
        $region68: #{tpu_custom_call.1} parent=55 // pred_fallthru
          _
        %s479 = sand.u32 %s33, 1
        %s480 = scalar_lea.sflag [#allocation11], %s479
        %s481 = sand.u32 %s152, 1
        %s482 = smul.addr %s481, 128
        %s483 = scalar_lea.vmem [#allocation10], %s482
        // Predicated region
        $region69: #{tpu_custom_call.1} parent=55 // pred_check
          %p484 = pneg %p165
        $region70: #{tpu_custom_call.1} parent=55 // pred_check_branch
          %486 = sbr.rel (%p484) target = $region72
        $region71: #{tpu_custom_call.1} parent=55 // pred_region
          %487 = dma.done %s480, 2048
        $region72: #{tpu_custom_call.1} parent=55 // pred_fallthru
          _
        %s488 = sand.u32 %s33, 1
        %s489 = scalar_lea.sflag [#allocation11], %s488
        %s490 = sand.u32 %s204, 1
        %s491 = smul.addr %s490, 128
        %s492 = scalar_lea.vmem [#allocation12], %s491
        // Predicated region
        $region73: #{tpu_custom_call.1} parent=55 // pred_check
          %p493 = pneg %p217
        $region74: #{tpu_custom_call.1} parent=55 // pred_check_branch
          %495 = sbr.rel (%p493) target = $region76
        $region75: #{tpu_custom_call.1} parent=55 // pred_region
          %496 = dma.done %s489, 2048
        $region76: #{tpu_custom_call.1} parent=55 // pred_fallthru
          _
        %s497 = sand.u32 %s256, 1
        %s498 = scalar_lea.sflag [#allocation14], %s497
        %s499 = sand.u32 %s256, 1
        %s500 = smul.addr %s499, 64
        %s501 = scalar_lea.vmem [#allocation13], %s500
        // Predicated region
        $region77: #{tpu_custom_call.1} parent=55 // pred_check
          %p502 = pneg %p269
        $region78: #{tpu_custom_call.1} parent=55 // pred_check_branch
          %504 = sbr.rel (%p502) target = $region80
        $region79: #{tpu_custom_call.1} parent=55 // pred_region
          %505 = dma.done %s498, 1024
        $region80: #{tpu_custom_call.1} parent=55 // pred_fallthru
          _
        %p506 = pneg %p61
        %p507 = pneg %p58
        %s508 = sand.u32 %s33, 1
        %s509 = scalar_lea.sflag [#allocation8], %s508
        %s510 = sand.u32 %s74, 1
        %s511 = smul.addr %s510, 128
        %s512 = scalar_lea.vmem [#allocation7], %s511
        %p513 = pneg %p87
        %p514 = pneg %p84
        %s515 = sand.u32 %s33, 1
        %s516 = scalar_lea.sflag [#allocation8], %s515
        %s517 = sand.u32 %s100, 1
        %s518 = smul.addr %s517, 128
        %s519 = scalar_lea.vmem [#allocation9], %s518
        %p520 = pneg %p113
        %p521 = pneg %p110
        %p522 = scmp.lt.s32.totalorder %s37, 1
        %s523 = scalar_select %p522, %s37, 1
        %s524 = scalar_lea.vmem %s3, %s523
        %p525 = pneg %p139
        %p526 = pneg %p136
        %s527 = sand.u32 %s33, 1
        %s528 = scalar_lea.sflag [#allocation11], %s527
        %s529 = sand.u32 %s152, 1
        %s530 = smul.addr %s529, 128
        %s531 = scalar_lea.vmem [#allocation10], %s530
        %p532 = pneg %p165
        %p533 = pneg %p162
        %p534 = scmp.lt.s32.totalorder %s37, 1
        %s535 = scalar_select %p534, %s37, 1
        %s536 = scalar_lea.vmem %s5, %s535
        %p537 = pneg %p191
        %p538 = pneg %p188
        %s539 = sand.u32 %s33, 1
        %s540 = scalar_lea.sflag [#allocation11], %s539
        %s541 = sand.u32 %s204, 1
        %s542 = smul.addr %s541, 128
        %s543 = scalar_lea.vmem [#allocation12], %s542
        %p544 = pneg %p217
        %p545 = pneg %p214
        %p546 = scmp.lt.s32.totalorder %s37, 1
        %s547 = scalar_select %p546, %s37, 1
        %s548 = scalar_lea.vmem %s7, %s547
        %p549 = pneg %p243
        %p550 = pneg %p240
        %s551 = sand.u32 %s256, 1
        %s552 = scalar_lea.sflag [#allocation14], %s551
        %s553 = sand.u32 %s256, 1
        %s554 = smul.addr %s553, 64
        %s555 = scalar_lea.vmem [#allocation13], %s554
        %p556 = pneg %p269
        %p557 = pneg %p266
        %p558 = pneg %p297
        %p559 = pneg %p294
        %s560 = sand.u32 %s284, 1
        %s561 = scalar_lea.sflag [#allocation6], %s560
        %s562 = sand.u32 %s284, 1
        %s563 = smul.addr %s562, 128
        %s564 = scalar_lea.vmem [#allocation15], %s563
        %s565 = smul.u32 16, %s38
        %p566 = scmp.lt.s32.totalorder %s37, 1
        %s567 = scalar_select %p566, %s37, 1
        %s568 = scalar_lea.vmem %s3, %s567
        %p569 = scmp.lt.s32.totalorder %s37, 1
        %s570 = scalar_select %p569, %s37, 1
        %s571 = scalar_lea.vmem %s5, %s570
        %p572 = scmp.lt.s32.totalorder %s37, 1
        %s573 = scalar_select %p572, %s37, 1
        %s574 = scalar_lea.vmem %s7, %s573
        %s575 = smul.u32 16, %s38
        %p577 = scmp.eq.s32.totalorder %s38, 0
        // Predicated region
        $region81: #{tpu_custom_call.1} parent=55 // pred_check
          %p578 = pneg %p577
        $region82: #{tpu_custom_call.1} parent=55 // pred_check_branch
          %580 = sbr.rel (%p578) target = $region84
        $region83: #{tpu_custom_call.1} parent=55 // pred_region
          %v581 = vld [vmem:[#allocation4] sm:$0xff]
          %v582 = vld [vmem:[#allocation4 + $0x8] sm:$0xff]
          %v583 = vld [vmem:[#allocation4 + $0x10] sm:$0xff]
          %v584 = vld [vmem:[#allocation4 + $0x18] sm:$0xff]
          %v585 = vld [vmem:[#allocation4 + $0x20] sm:$0xff]
          %v586 = vld [vmem:[#allocation4 + $0x28] sm:$0xff]
          %v587 = vld [vmem:[#allocation4 + $0x30] sm:$0xff]
          %v588 = vld [vmem:[#allocation4 + $0x38] sm:$0xff]
          %v589 = vld [vmem:[#allocation4 + $0x40] sm:$0xff]
          %v590 = vld [vmem:[#allocation4 + $0x48] sm:$0xff]
          %v591 = vld [vmem:[#allocation4 + $0x50] sm:$0xff]
          %v592 = vld [vmem:[#allocation4 + $0x58] sm:$0xff]
          %v593 = vld [vmem:[#allocation4 + $0x60] sm:$0xff]
          %v594 = vld [vmem:[#allocation4 + $0x68] sm:$0xff]
          %v595 = vld [vmem:[#allocation4 + $0x70] sm:$0xff]
          %v596 = vld [vmem:[#allocation4 + $0x78] sm:$0xff]
          %v597 = vld [vmem:[#allocation4 + $0x80] sm:$0xff]
          %v598 = vld [vmem:[#allocation4 + $0x88] sm:$0xff]
          %v599 = vld [vmem:[#allocation4 + $0x90] sm:$0xff]
          %v600 = vld [vmem:[#allocation4 + $0x98] sm:$0xff]
          %v601 = vld [vmem:[#allocation4 + $0xa0] sm:$0xff]
          %v602 = vld [vmem:[#allocation4 + $0xa8] sm:$0xff]
          %v603 = vld [vmem:[#allocation4 + $0xb0] sm:$0xff]
          %v604 = vld [vmem:[#allocation4 + $0xb8] sm:$0xff]
          %v605 = vld [vmem:[#allocation4 + $0xc0] sm:$0xff]
          %v606 = vld [vmem:[#allocation4 + $0xc8] sm:$0xff]
          %v607 = vld [vmem:[#allocation4 + $0xd0] sm:$0xff]
          %v608 = vld [vmem:[#allocation4 + $0xd8] sm:$0xff]
          %v609 = vld [vmem:[#allocation4 + $0xe0] sm:$0xff]
          %v610 = vld [vmem:[#allocation4 + $0xe8] sm:$0xff]
          %v611 = vld [vmem:[#allocation4 + $0xf0] sm:$0xff]
          %v612 = vld [vmem:[#allocation4 + $0xf8] sm:$0xff]
          %v613 = vld [vmem:[%s483] sm:$0xf]
          %v614 = vld [vmem:[%s483 + $0x4] sm:$0xf]
          %v615 = vld [vmem:[%s483 + $0x8] sm:$0xf]
          %v616 = vld [vmem:[%s483 + $0xc] sm:$0xf]
          %v617 = vld [vmem:[%s483 + $0x10] sm:$0xf]
          %v618 = vld [vmem:[%s483 + $0x14] sm:$0xf]
          %v619 = vld [vmem:[%s483 + $0x18] sm:$0xf]
          %v620 = vld [vmem:[%s483 + $0x1c] sm:$0xf]
          %v621 = vld [vmem:[%s483 + $0x20] sm:$0xf]
          %v622 = vld [vmem:[%s483 + $0x24] sm:$0xf]
          %v623 = vld [vmem:[%s483 + $0x28] sm:$0xf]
          %v624 = vld [vmem:[%s483 + $0x2c] sm:$0xf]
          %v625 = vld [vmem:[%s483 + $0x30] sm:$0xf]
          %v626 = vld [vmem:[%s483 + $0x34] sm:$0xf]
          %v627 = vld [vmem:[%s483 + $0x38] sm:$0xf]
          %v628 = vld [vmem:[%s483 + $0x3c] sm:$0xf]
          %v629 = vld [vmem:[%s483 + $0x40] sm:$0xf]
          %v630 = vld [vmem:[%s483 + $0x44] sm:$0xf]
          %v631 = vld [vmem:[%s483 + $0x48] sm:$0xf]
          %v632 = vld [vmem:[%s483 + $0x4c] sm:$0xf]
          %v633 = vld [vmem:[%s483 + $0x50] sm:$0xf]
          %v634 = vld [vmem:[%s483 + $0x54] sm:$0xf]
          %v635 = vld [vmem:[%s483 + $0x58] sm:$0xf]
          %v636 = vld [vmem:[%s483 + $0x5c] sm:$0xf]
          %v637 = vld [vmem:[%s483 + $0x60] sm:$0xf]
          %v638 = vld [vmem:[%s483 + $0x64] sm:$0xf]
          %v639 = vld [vmem:[%s483 + $0x68] sm:$0xf]
          %v640 = vld [vmem:[%s483 + $0x6c] sm:$0xf]
          %v641 = vld [vmem:[%s483 + $0x70] sm:$0xf]
          %v642 = vld [vmem:[%s483 + $0x74] sm:$0xf]
          %v643 = vld [vmem:[%s483 + $0x78] sm:$0xf]
          %v644 = vld [vmem:[%s483 + $0x7c] sm:$0xf]
          %v645 = vld [vmem:[%s571] sm:$0x1]
          %v647 = vlaneseq
          %v648 = vshrl.u32 %v647, 7
          %v649 = vsub.s32 0, %v648
          %v650 = vrot.slane %v645, %v649
          %v684 = vunpack.c.l.b16 %v581
          %v685 = vunpack.c.h.b16 %v581
          %v686 = vunpack.c.l.b16 %v582
          %v687 = vunpack.c.h.b16 %v582
          %v688 = vunpack.c.l.b16 %v583
          %v689 = vunpack.c.h.b16 %v583
          %v690 = vunpack.c.l.b16 %v584
          %v691 = vunpack.c.h.b16 %v584
          %v692 = vunpack.c.l.b16 %v585
          %v693 = vunpack.c.h.b16 %v585
          %v694 = vunpack.c.l.b16 %v586
          %v695 = vunpack.c.h.b16 %v586
          %v696 = vunpack.c.l.b16 %v587
          %v697 = vunpack.c.h.b16 %v587
          %v698 = vunpack.c.l.b16 %v588
          %v699 = vunpack.c.h.b16 %v588
          %v700 = vunpack.c.l.b16 %v589
          %v701 = vunpack.c.h.b16 %v589
          %v702 = vunpack.c.l.b16 %v590
          %v703 = vunpack.c.h.b16 %v590
          %v704 = vunpack.c.l.b16 %v591
          %v705 = vunpack.c.h.b16 %v591
          %v706 = vunpack.c.l.b16 %v592
          %v707 = vunpack.c.h.b16 %v592
          %v708 = vunpack.c.l.b16 %v593
          %v709 = vunpack.c.h.b16 %v593
          %v710 = vunpack.c.l.b16 %v594
          %v711 = vunpack.c.h.b16 %v594
          %v712 = vunpack.c.l.b16 %v595
          %v713 = vunpack.c.h.b16 %v595
          %v714 = vunpack.c.l.b16 %v596
          %v715 = vunpack.c.h.b16 %v596
          %v716 = vunpack.c.l.b16 %v597
          %v717 = vunpack.c.h.b16 %v597
          %v718 = vunpack.c.l.b16 %v598
          %v719 = vunpack.c.h.b16 %v598
          %v720 = vunpack.c.l.b16 %v599
          %v721 = vunpack.c.h.b16 %v599
          %v722 = vunpack.c.l.b16 %v600
          %v723 = vunpack.c.h.b16 %v600
          %v724 = vunpack.c.l.b16 %v601
          %v725 = vunpack.c.h.b16 %v601
          %v726 = vunpack.c.l.b16 %v602
          %v727 = vunpack.c.h.b16 %v602
          %v728 = vunpack.c.l.b16 %v603
          %v729 = vunpack.c.h.b16 %v603
          %v730 = vunpack.c.l.b16 %v604
          %v731 = vunpack.c.h.b16 %v604
          %v732 = vunpack.c.l.b16 %v605
          %v733 = vunpack.c.h.b16 %v605
          %v734 = vunpack.c.l.b16 %v606
          %v735 = vunpack.c.h.b16 %v606
          %v736 = vunpack.c.l.b16 %v607
          %v737 = vunpack.c.h.b16 %v607
          %v738 = vunpack.c.l.b16 %v608
          %v739 = vunpack.c.h.b16 %v608
          %v740 = vunpack.c.l.b16 %v609
          %v741 = vunpack.c.h.b16 %v609
          %v742 = vunpack.c.l.b16 %v610
          %v743 = vunpack.c.h.b16 %v610
          %v744 = vunpack.c.l.b16 %v611
          %v745 = vunpack.c.h.b16 %v611
          %v746 = vunpack.c.l.b16 %v612
          %v747 = vunpack.c.h.b16 %v612
          %v748 = vpack.c.b16 %v686, %v684
          %v749 = vpack.c.b16 %v687, %v685
          %v750 = vpack.c.b16 %v690, %v688
          %v751 = vpack.c.b16 %v691, %v689
          %v752 = vpack.c.b16 %v694, %v692
          %v753 = vpack.c.b16 %v695, %v693
          %v754 = vpack.c.b16 %v698, %v696
          %v755 = vpack.c.b16 %v699, %v697
          %v756 = vpack.c.b16 %v702, %v700
          %v757 = vpack.c.b16 %v703, %v701
          %v758 = vpack.c.b16 %v706, %v704
          %v759 = vpack.c.b16 %v707, %v705
          %v760 = vpack.c.b16 %v710, %v708
          %v761 = vpack.c.b16 %v711, %v709
          %v762 = vpack.c.b16 %v714, %v712
          %v763 = vpack.c.b16 %v715, %v713
          %v764 = vpack.c.b16 %v718, %v716
          %v765 = vpack.c.b16 %v719, %v717
          %v766 = vpack.c.b16 %v722, %v720
          %v767 = vpack.c.b16 %v723, %v721
          %v768 = vpack.c.b16 %v726, %v724
          %v769 = vpack.c.b16 %v727, %v725
          %v770 = vpack.c.b16 %v730, %v728
          %v771 = vpack.c.b16 %v731, %v729
          %v772 = vpack.c.b16 %v734, %v732
          %v773 = vpack.c.b16 %v735, %v733
          %v774 = vpack.c.b16 %v738, %v736
          %v775 = vpack.c.b16 %v739, %v737
          %v776 = vpack.c.b16 %v742, %v740
          %v777 = vpack.c.b16 %v743, %v741
          %v778 = vpack.c.b16 %v746, %v744
          %v779 = vpack.c.b16 %v747, %v745
          %v844 = vunpack.c.l.b16 %v613
          %v845 = vunpack.c.l.b16 %v614
          %v846 = vunpack.c.l.b16 %v615
          %v847 = vunpack.c.l.b16 %v616
          %v848 = vunpack.c.l.b16 %v617
          %v849 = vunpack.c.l.b16 %v618
          %v850 = vunpack.c.l.b16 %v619
          %v851 = vunpack.c.l.b16 %v620
          %v852 = vunpack.c.l.b16 %v621
          %v853 = vunpack.c.l.b16 %v622
          %v854 = vunpack.c.l.b16 %v623
          %v855 = vunpack.c.l.b16 %v624
          %v856 = vunpack.c.l.b16 %v625
          %v857 = vunpack.c.l.b16 %v626
          %v858 = vunpack.c.l.b16 %v627
          %v859 = vunpack.c.l.b16 %v628
          %v860 = vunpack.c.l.b16 %v629
          %v861 = vunpack.c.l.b16 %v630
          %v862 = vunpack.c.l.b16 %v631
          %v863 = vunpack.c.l.b16 %v632
          %v864 = vunpack.c.l.b16 %v633
          %v865 = vunpack.c.l.b16 %v634
          %v866 = vunpack.c.l.b16 %v635
          %v867 = vunpack.c.l.b16 %v636
          %v868 = vunpack.c.l.b16 %v637
          %v869 = vunpack.c.l.b16 %v638
          %v870 = vunpack.c.l.b16 %v639
          %v871 = vunpack.c.l.b16 %v640
          %v872 = vunpack.c.l.b16 %v641
          %v873 = vunpack.c.l.b16 %v642
          %v874 = vunpack.c.l.b16 %v643
          %v875 = vunpack.c.l.b16 %v644
          %v876 = vpack.c.b16 %v845, %v844
          %v877 = vpack.c.b16 %v847, %v846
          %v878 = vpack.c.b16 %v849, %v848
          %v879 = vpack.c.b16 %v851, %v850
          %v880 = vpack.c.b16 %v853, %v852
          %v881 = vpack.c.b16 %v855, %v854
          %v882 = vpack.c.b16 %v857, %v856
          %v883 = vpack.c.b16 %v859, %v858
          %v884 = vpack.c.b16 %v861, %v860
          %v885 = vpack.c.b16 %v863, %v862
          %v886 = vpack.c.b16 %v865, %v864
          %v887 = vpack.c.b16 %v867, %v866
          %v888 = vpack.c.b16 %v869, %v868
          %v889 = vpack.c.b16 %v871, %v870
          %v890 = vpack.c.b16 %v873, %v872
          %v891 = vpack.c.b16 %v875, %v874
          %908 = vmatprep.subr.bf16.mxu0 0
          %909 = vmatpush1.bf16.msra.mxu0 %v876
          %910 = vmatprep.subr.bf16.mxu0 0
          %911 = vmatpush1.bf16.msra.mxu0 %v877
          %912 = vmatprep.subr.bf16.mxu0 0
          %913 = vmatpush1.bf16.msra.mxu0 %v878
          %914 = vmatprep.subr.bf16.mxu0 0
          %915 = vmatpush1.bf16.msra.mxu0 %v879
          %916 = vmatprep.subr.bf16.mxu0 0
          %917 = vmatpush1.bf16.msra.mxu0 %v880
          %918 = vmatprep.subr.bf16.mxu0 0
          %919 = vmatpush1.bf16.msra.mxu0 %v881
          %920 = vmatprep.subr.bf16.mxu0 0
          %921 = vmatpush1.bf16.msra.mxu0 %v882
          %922 = vmatprep.subr.bf16.mxu0 0
          %923 = vmatpush1.bf16.msra.mxu0 %v883
          %924 = vmatprep.subr.bf16.mxu0 0
          %925 = vmatpush1.bf16.msra.mxu0 %v884
          %926 = vmatprep.subr.bf16.mxu0 0
          %927 = vmatpush1.bf16.msra.mxu0 %v885
          %928 = vmatprep.subr.bf16.mxu0 0
          %929 = vmatpush1.bf16.msra.mxu0 %v886
          %930 = vmatprep.subr.bf16.mxu0 0
          %931 = vmatpush1.bf16.msra.mxu0 %v887
          %932 = vmatprep.subr.bf16.mxu0 0
          %933 = vmatpush1.bf16.msra.mxu0 %v888
          %934 = vmatprep.subr.bf16.mxu0 0
          %935 = vmatpush1.bf16.msra.mxu0 %v889
          %936 = vmatprep.subr.bf16.mxu0 0
          %937 = vmatpush1.bf16.msra.mxu0 %v890
          %938 = vmatprep.subr.bf16.mxu0 0
          %939 = vmatpush1.bf16.msra.mxu0 %v891
          %940 = vmatprep.mubr.bf16.mxu0 %v749
          %941 = vmatmul.mubr.bf16.gmra.mrb[0].mxu0 %v748
          %v942 = vpop.f32.mrb[0].mxu0
          %v943 = vadd.f32 %v650, %v942
          %v944 = vpop.f32.mrb[0].mxu0
          %v945 = vpop.f32.mrb[0].mxu0
          %v946 = vadd.f32 %v650, %v945
          %v947 = vpop.f32.mrb[0].mxu0
          %948 = vmatprep.mubr.bf16.mxu0 %v751
          %949 = vmatmul.mubr.bf16.gmra.mrb[0].mxu0 %v750
          %v950 = vpop.f32.mrb[0].mxu0
          %v951 = vadd.f32 %v650, %v950
          %v952 = vpop.f32.mrb[0].mxu0
          %v953 = vpop.f32.mrb[0].mxu0
          %v954 = vadd.f32 %v650, %v953
          %v955 = vpop.f32.mrb[0].mxu0
          %956 = vmatprep.mubr.bf16.mxu0 %v753
          %957 = vmatmul.mubr.bf16.gmra.mrb[0].mxu0 %v752
          %v958 = vpop.f32.mrb[0].mxu0
          %v959 = vadd.f32 %v650, %v958
          %v960 = vpop.f32.mrb[0].mxu0
          %v961 = vpop.f32.mrb[0].mxu0
          %v962 = vadd.f32 %v650, %v961
          %v963 = vpop.f32.mrb[0].mxu0
          %964 = vmatprep.mubr.bf16.mxu0 %v755
          %965 = vmatmul.mubr.bf16.gmra.mrb[0].mxu0 %v754
          %v966 = vpop.f32.mrb[0].mxu0
          %v967 = vadd.f32 %v650, %v966
          %v968 = vpop.f32.mrb[0].mxu0
          %v969 = vpop.f32.mrb[0].mxu0
          %v970 = vadd.f32 %v650, %v969
          %v971 = vpop.f32.mrb[0].mxu0
          %972 = vmatprep.mubr.bf16.mxu0 %v757
          %973 = vmatmul.mubr.bf16.gmra.mrb[0].mxu0 %v756
          %v974 = vpop.f32.mrb[0].mxu0
          %v975 = vadd.f32 %v650, %v974
          %v976 = vpop.f32.mrb[0].mxu0
          %v977 = vpop.f32.mrb[0].mxu0
          %v978 = vadd.f32 %v650, %v977
          %v979 = vpop.f32.mrb[0].mxu0
          %980 = vmatprep.mubr.bf16.mxu0 %v759
          %981 = vmatmul.mubr.bf16.gmra.mrb[0].mxu0 %v758
          %v982 = vpop.f32.mrb[0].mxu0
          %v983 = vadd.f32 %v650, %v982
          %v984 = vpop.f32.mrb[0].mxu0
          %v985 = vpop.f32.mrb[0].mxu0
          %v986 = vadd.f32 %v650, %v985
          %v987 = vpop.f32.mrb[0].mxu0
          %988 = vmatprep.mubr.bf16.mxu0 %v761
          %989 = vmatmul.mubr.bf16.gmra.mrb[0].mxu0 %v760
          %v990 = vpop.f32.mrb[0].mxu0
          %v991 = vadd.f32 %v650, %v990
          %v992 = vpop.f32.mrb[0].mxu0
          %v993 = vpop.f32.mrb[0].mxu0
          %v994 = vadd.f32 %v650, %v993
          %v995 = vpop.f32.mrb[0].mxu0
          %996 = vmatprep.mubr.bf16.mxu0 %v763
          %997 = vmatmul.mubr.bf16.gmra.mrb[0].mxu0 %v762
          %v998 = vpop.f32.mrb[0].mxu0
          %v999 = vadd.f32 %v650, %v998
          %v1000 = vpop.f32.mrb[0].mxu0
          %v1001 = vpop.f32.mrb[0].mxu0
          %v1002 = vadd.f32 %v650, %v1001
          %v1003 = vpop.f32.mrb[0].mxu0
          %1004 = vmatprep.mubr.bf16.mxu0 %v765
          %1005 = vmatmul.mubr.bf16.gmra.mrb[0].mxu0 %v764
          %v1006 = vpop.f32.mrb[0].mxu0
          %v1007 = vadd.f32 %v650, %v1006
          %v1008 = vpop.f32.mrb[0].mxu0
          %v1009 = vpop.f32.mrb[0].mxu0
          %v1010 = vadd.f32 %v650, %v1009
          %v1011 = vpop.f32.mrb[0].mxu0
          %1012 = vmatprep.mubr.bf16.mxu0 %v767
          %1013 = vmatmul.mubr.bf16.gmra.mrb[0].mxu0 %v766
          %v1014 = vpop.f32.mrb[0].mxu0
          %v1015 = vadd.f32 %v650, %v1014
          %v1016 = vpop.f32.mrb[0].mxu0
          %v1017 = vpop.f32.mrb[0].mxu0
          %v1018 = vadd.f32 %v650, %v1017
          %v1019 = vpop.f32.mrb[0].mxu0
          %1020 = vmatprep.mubr.bf16.mxu0 %v769
          %1021 = vmatmul.mubr.bf16.gmra.mrb[0].mxu0 %v768
          %v1022 = vpop.f32.mrb[0].mxu0
          %v1023 = vadd.f32 %v650, %v1022
          %v1024 = vpop.f32.mrb[0].mxu0
          %v1025 = vpop.f32.mrb[0].mxu0
          %v1026 = vadd.f32 %v650, %v1025
          %v1027 = vpop.f32.mrb[0].mxu0
          %1028 = vmatprep.mubr.bf16.mxu0 %v771
          %1029 = vmatmul.mubr.bf16.gmra.mrb[0].mxu0 %v770
          %v1030 = vpop.f32.mrb[0].mxu0
          %v1031 = vadd.f32 %v650, %v1030
          %v1032 = vpop.f32.mrb[0].mxu0
          %v1033 = vpop.f32.mrb[0].mxu0
          %v1034 = vadd.f32 %v650, %v1033
          %v1035 = vpop.f32.mrb[0].mxu0
          %1036 = vmatprep.mubr.bf16.mxu0 %v773
          %1037 = vmatmul.mubr.bf16.gmra.mrb[0].mxu0 %v772
          %v1038 = vpop.f32.mrb[0].mxu0
          %v1039 = vadd.f32 %v650, %v1038
          %v1040 = vpop.f32.mrb[0].mxu0
          %v1041 = vpop.f32.mrb[0].mxu0
          %v1042 = vadd.f32 %v650, %v1041
          %v1043 = vpop.f32.mrb[0].mxu0
          %1044 = vmatprep.mubr.bf16.mxu0 %v775
          %1045 = vmatmul.mubr.bf16.gmra.mrb[0].mxu0 %v774
          %v1046 = vpop.f32.mrb[0].mxu0
          %v1047 = vadd.f32 %v650, %v1046
          %v1048 = vpop.f32.mrb[0].mxu0
          %v1049 = vpop.f32.mrb[0].mxu0
          %v1050 = vadd.f32 %v650, %v1049
          %v1051 = vpop.f32.mrb[0].mxu0
          %1052 = vmatprep.mubr.bf16.mxu0 %v777
          %1053 = vmatmul.mubr.bf16.gmra.mrb[0].mxu0 %v776
          %v1054 = vpop.f32.mrb[0].mxu0
          %v1055 = vadd.f32 %v650, %v1054
          %v1056 = vpop.f32.mrb[0].mxu0
          %v1057 = vpop.f32.mrb[0].mxu0
          %v1058 = vadd.f32 %v650, %v1057
          %v1059 = vpop.f32.mrb[0].mxu0
          %1060 = vmatprep.mubr.bf16.mxu0 %v779
          %1061 = vmatmul.mubr.bf16.gmra.mrb[0].mxu0 %v778
          %v1062 = vpop.f32.mrb[0].mxu0
          %v1063 = vadd.f32 %v650, %v1062
          %v1064 = vpop.f32.mrb[0].mxu0
          %v1065 = vpop.f32.mrb[0].mxu0
          %v1066 = vadd.f32 %v650, %v1065
          %v1067 = vpop.f32.mrb[0].mxu0
          %1068 = vdwg.mxu0
          %v1069 = vld [vmem:[%s492] sm:$0xf]
          %v1070 = vld [vmem:[%s492 + $0x4] sm:$0xf]
          %v1071 = vld [vmem:[%s492 + $0x8] sm:$0xf]
          %v1072 = vld [vmem:[%s492 + $0xc] sm:$0xf]
          %v1073 = vld [vmem:[%s492 + $0x10] sm:$0xf]
          %v1074 = vld [vmem:[%s492 + $0x14] sm:$0xf]
          %v1075 = vld [vmem:[%s492 + $0x18] sm:$0xf]
          %v1076 = vld [vmem:[%s492 + $0x1c] sm:$0xf]
          %v1077 = vld [vmem:[%s492 + $0x20] sm:$0xf]
          %v1078 = vld [vmem:[%s492 + $0x24] sm:$0xf]
          %v1079 = vld [vmem:[%s492 + $0x28] sm:$0xf]
          %v1080 = vld [vmem:[%s492 + $0x2c] sm:$0xf]
          %v1081 = vld [vmem:[%s492 + $0x30] sm:$0xf]
          %v1082 = vld [vmem:[%s492 + $0x34] sm:$0xf]
          %v1083 = vld [vmem:[%s492 + $0x38] sm:$0xf]
          %v1084 = vld [vmem:[%s492 + $0x3c] sm:$0xf]
          %v1085 = vld [vmem:[%s492 + $0x40] sm:$0xf]
          %v1086 = vld [vmem:[%s492 + $0x44] sm:$0xf]
          %v1087 = vld [vmem:[%s492 + $0x48] sm:$0xf]
          %v1088 = vld [vmem:[%s492 + $0x4c] sm:$0xf]
          %v1089 = vld [vmem:[%s492 + $0x50] sm:$0xf]
          %v1090 = vld [vmem:[%s492 + $0x54] sm:$0xf]
          %v1091 = vld [vmem:[%s492 + $0x58] sm:$0xf]
          %v1092 = vld [vmem:[%s492 + $0x5c] sm:$0xf]
          %v1093 = vld [vmem:[%s492 + $0x60] sm:$0xf]
          %v1094 = vld [vmem:[%s492 + $0x64] sm:$0xf]
          %v1095 = vld [vmem:[%s492 + $0x68] sm:$0xf]
          %v1096 = vld [vmem:[%s492 + $0x6c] sm:$0xf]
          %v1097 = vld [vmem:[%s492 + $0x70] sm:$0xf]
          %v1098 = vld [vmem:[%s492 + $0x74] sm:$0xf]
          %v1099 = vld [vmem:[%s492 + $0x78] sm:$0xf]
          %v1100 = vld [vmem:[%s492 + $0x7c] sm:$0xf]
          %v1101 = vld [vmem:[%s574] sm:$0x1]
          %v1103 = vlaneseq
          %v1104 = vshrl.u32 %v1103, 7
          %v1105 = vsub.s32 0, %v1104
          %v1106 = vrot.slane %v1101, %v1105
          %v1140 = vunpack.c.l.b16 %v1069
          %v1141 = vunpack.c.l.b16 %v1070
          %v1142 = vunpack.c.l.b16 %v1071
          %v1143 = vunpack.c.l.b16 %v1072
          %v1144 = vunpack.c.l.b16 %v1073
          %v1145 = vunpack.c.l.b16 %v1074
          %v1146 = vunpack.c.l.b16 %v1075
          %v1147 = vunpack.c.l.b16 %v1076
          %v1148 = vunpack.c.l.b16 %v1077
          %v1149 = vunpack.c.l.b16 %v1078
          %v1150 = vunpack.c.l.b16 %v1079
          %v1151 = vunpack.c.l.b16 %v1080
          %v1152 = vunpack.c.l.b16 %v1081
          %v1153 = vunpack.c.l.b16 %v1082
          %v1154 = vunpack.c.l.b16 %v1083
          %v1155 = vunpack.c.l.b16 %v1084
          %v1156 = vunpack.c.l.b16 %v1085
          %v1157 = vunpack.c.l.b16 %v1086
          %v1158 = vunpack.c.l.b16 %v1087
          %v1159 = vunpack.c.l.b16 %v1088
          %v1160 = vunpack.c.l.b16 %v1089
          %v1161 = vunpack.c.l.b16 %v1090
          %v1162 = vunpack.c.l.b16 %v1091
          %v1163 = vunpack.c.l.b16 %v1092
          %v1164 = vunpack.c.l.b16 %v1093
          %v1165 = vunpack.c.l.b16 %v1094
          %v1166 = vunpack.c.l.b16 %v1095
          %v1167 = vunpack.c.l.b16 %v1096
          %v1168 = vunpack.c.l.b16 %v1097
          %v1169 = vunpack.c.l.b16 %v1098
          %v1170 = vunpack.c.l.b16 %v1099
          %v1171 = vunpack.c.l.b16 %v1100
          %v1172 = vpack.c.b16 %v1141, %v1140
          %v1173 = vpack.c.b16 %v1143, %v1142
          %v1174 = vpack.c.b16 %v1145, %v1144
          %v1175 = vpack.c.b16 %v1147, %v1146
          %v1176 = vpack.c.b16 %v1149, %v1148
          %v1177 = vpack.c.b16 %v1151, %v1150
          %v1178 = vpack.c.b16 %v1153, %v1152
          %v1179 = vpack.c.b16 %v1155, %v1154
          %v1180 = vpack.c.b16 %v1157, %v1156
          %v1181 = vpack.c.b16 %v1159, %v1158
          %v1182 = vpack.c.b16 %v1161, %v1160
          %v1183 = vpack.c.b16 %v1163, %v1162
          %v1184 = vpack.c.b16 %v1165, %v1164
          %v1185 = vpack.c.b16 %v1167, %v1166
          %v1186 = vpack.c.b16 %v1169, %v1168
          %v1187 = vpack.c.b16 %v1171, %v1170
          %1204 = vmatprep.subr.bf16.mxu0 0
          %1205 = vmatpush1.bf16.msra.mxu0 %v1172
          %1206 = vmatprep.subr.bf16.mxu0 0
          %1207 = vmatpush1.bf16.msra.mxu0 %v1173
          %1208 = vmatprep.subr.bf16.mxu0 0
          %1209 = vmatpush1.bf16.msra.mxu0 %v1174
          %1210 = vmatprep.subr.bf16.mxu0 0
          %1211 = vmatpush1.bf16.msra.mxu0 %v1175
          %1212 = vmatprep.subr.bf16.mxu0 0
          %1213 = vmatpush1.bf16.msra.mxu0 %v1176
          %1214 = vmatprep.subr.bf16.mxu0 0
          %1215 = vmatpush1.bf16.msra.mxu0 %v1177
          %1216 = vmatprep.subr.bf16.mxu0 0
          %1217 = vmatpush1.bf16.msra.mxu0 %v1178
          %1218 = vmatprep.subr.bf16.mxu0 0
          %1219 = vmatpush1.bf16.msra.mxu0 %v1179
          %1220 = vmatprep.subr.bf16.mxu0 0
          %1221 = vmatpush1.bf16.msra.mxu0 %v1180
          %1222 = vmatprep.subr.bf16.mxu0 0
          %1223 = vmatpush1.bf16.msra.mxu0 %v1181
          %1224 = vmatprep.subr.bf16.mxu0 0
          %1225 = vmatpush1.bf16.msra.mxu0 %v1182
          %1226 = vmatprep.subr.bf16.mxu0 0
          %1227 = vmatpush1.bf16.msra.mxu0 %v1183
          %1228 = vmatprep.subr.bf16.mxu0 0
          %1229 = vmatpush1.bf16.msra.mxu0 %v1184
          %1230 = vmatprep.subr.bf16.mxu0 0
          %1231 = vmatpush1.bf16.msra.mxu0 %v1185
          %1232 = vmatprep.subr.bf16.mxu0 0
          %1233 = vmatpush1.bf16.msra.mxu0 %v1186
          %1234 = vmatprep.subr.bf16.mxu0 0
          %1235 = vmatpush1.bf16.msra.mxu0 %v1187
          %1236 = vmatprep.mubr.bf16.mxu0 %v749
          %1237 = vmatmul.mubr.bf16.gmra.mrb[0].mxu0 %v748
          %v1238 = vpop.f32.mrb[0].mxu0
          %v1239 = vadd.f32 %v1106, %v1238
          %v1240 = vpop.f32.mrb[0].mxu0
          %v1241 = vpop.f32.mrb[0].mxu0
          %v1242 = vadd.f32 %v1106, %v1241
          %v1243 = vpop.f32.mrb[0].mxu0
          %1244 = vmatprep.mubr.bf16.mxu0 %v751
          %1245 = vmatmul.mubr.bf16.gmra.mrb[0].mxu0 %v750
          %v1246 = vpop.f32.mrb[0].mxu0
          %v1247 = vadd.f32 %v1106, %v1246
          %v1248 = vpop.f32.mrb[0].mxu0
          %v1249 = vpop.f32.mrb[0].mxu0
          %v1250 = vadd.f32 %v1106, %v1249
          %v1251 = vpop.f32.mrb[0].mxu0
          %1252 = vmatprep.mubr.bf16.mxu0 %v753
          %1253 = vmatmul.mubr.bf16.gmra.mrb[0].mxu0 %v752
          %v1254 = vpop.f32.mrb[0].mxu0
          %v1255 = vadd.f32 %v1106, %v1254
          %v1256 = vpop.f32.mrb[0].mxu0
          %v1257 = vpop.f32.mrb[0].mxu0
          %v1258 = vadd.f32 %v1106, %v1257
          %v1259 = vpop.f32.mrb[0].mxu0
          %1260 = vmatprep.mubr.bf16.mxu0 %v755
          %1261 = vmatmul.mubr.bf16.gmra.mrb[0].mxu0 %v754
          %v1262 = vpop.f32.mrb[0].mxu0
          %v1263 = vadd.f32 %v1106, %v1262
          %v1264 = vpop.f32.mrb[0].mxu0
          %v1265 = vpop.f32.mrb[0].mxu0
          %v1266 = vadd.f32 %v1106, %v1265
          %v1267 = vpop.f32.mrb[0].mxu0
          %1268 = vmatprep.mubr.bf16.mxu0 %v757
          %1269 = vmatmul.mubr.bf16.gmra.mrb[0].mxu0 %v756
          %v1270 = vpop.f32.mrb[0].mxu0
          %v1271 = vadd.f32 %v1106, %v1270
          %v1272 = vpop.f32.mrb[0].mxu0
          %v1273 = vpop.f32.mrb[0].mxu0
          %v1274 = vadd.f32 %v1106, %v1273
          %v1275 = vpop.f32.mrb[0].mxu0
          %1276 = vmatprep.mubr.bf16.mxu0 %v759
          %1277 = vmatmul.mubr.bf16.gmra.mrb[0].mxu0 %v758
          %v1278 = vpop.f32.mrb[0].mxu0
          %v1279 = vadd.f32 %v1106, %v1278
          %v1280 = vpop.f32.mrb[0].mxu0
          %v1281 = vpop.f32.mrb[0].mxu0
          %v1282 = vadd.f32 %v1106, %v1281
          %v1283 = vpop.f32.mrb[0].mxu0
          %1284 = vmatprep.mubr.bf16.mxu0 %v761
          %1285 = vmatmul.mubr.bf16.gmra.mrb[0].mxu0 %v760
          %v1286 = vpop.f32.mrb[0].mxu0
          %v1287 = vadd.f32 %v1106, %v1286
          %v1288 = vpop.f32.mrb[0].mxu0
          %v1289 = vpop.f32.mrb[0].mxu0
          %v1290 = vadd.f32 %v1106, %v1289
          %v1291 = vpop.f32.mrb[0].mxu0
          %1292 = vmatprep.mubr.bf16.mxu0 %v763
          %1293 = vmatmul.mubr.bf16.gmra.mrb[0].mxu0 %v762
          %v1294 = vpop.f32.mrb[0].mxu0
          %v1295 = vadd.f32 %v1106, %v1294
          %v1296 = vpop.f32.mrb[0].mxu0
          %v1297 = vpop.f32.mrb[0].mxu0
          %v1298 = vadd.f32 %v1106, %v1297
          %v1299 = vpop.f32.mrb[0].mxu0
          %1300 = vmatprep.mubr.bf16.mxu0 %v765
          %1301 = vmatmul.mubr.bf16.gmra.mrb[0].mxu0 %v764
          %v1302 = vpop.f32.mrb[0].mxu0
          %v1303 = vadd.f32 %v1106, %v1302
          %v1304 = vpop.f32.mrb[0].mxu0
          %v1305 = vpop.f32.mrb[0].mxu0
          %v1306 = vadd.f32 %v1106, %v1305
          %v1307 = vpop.f32.mrb[0].mxu0
          %1308 = vmatprep.mubr.bf16.mxu0 %v767
          %1309 = vmatmul.mubr.bf16.gmra.mrb[0].mxu0 %v766
          %v1310 = vpop.f32.mrb[0].mxu0
          %v1311 = vadd.f32 %v1106, %v1310
          %v1312 = vpop.f32.mrb[0].mxu0
          %v1313 = vpop.f32.mrb[0].mxu0
          %v1314 = vadd.f32 %v1106, %v1313
          %v1315 = vpop.f32.mrb[0].mxu0
          %1316 = vmatprep.mubr.bf16.mxu0 %v769
          %1317 = vmatmul.mubr.bf16.gmra.mrb[0].mxu0 %v768
          %v1318 = vpop.f32.mrb[0].mxu0
          %v1319 = vadd.f32 %v1106, %v1318
          %v1320 = vpop.f32.mrb[0].mxu0
          %v1321 = vpop.f32.mrb[0].mxu0
          %v1322 = vadd.f32 %v1106, %v1321
          %v1323 = vpop.f32.mrb[0].mxu0
          %1324 = vmatprep.mubr.bf16.mxu0 %v771
          %1325 = vmatmul.mubr.bf16.gmra.mrb[0].mxu0 %v770
          %v1326 = vpop.f32.mrb[0].mxu0
          %v1327 = vadd.f32 %v1106, %v1326
          %v1328 = vpop.f32.mrb[0].mxu0
          %v1329 = vpop.f32.mrb[0].mxu0
          %v1330 = vadd.f32 %v1106, %v1329
          %v1331 = vpop.f32.mrb[0].mxu0
          %1332 = vmatprep.mubr.bf16.mxu0 %v773
          %1333 = vmatmul.mubr.bf16.gmra.mrb[0].mxu0 %v772
          %v1334 = vpop.f32.mrb[0].mxu0
          %v1335 = vadd.f32 %v1106, %v1334
          %v1336 = vpop.f32.mrb[0].mxu0
          %v1337 = vpop.f32.mrb[0].mxu0
          %v1338 = vadd.f32 %v1106, %v1337
          %v1339 = vpop.f32.mrb[0].mxu0
          %1340 = vmatprep.mubr.bf16.mxu0 %v775
          %1341 = vmatmul.mubr.bf16.gmra.mrb[0].mxu0 %v774
          %v1342 = vpop.f32.mrb[0].mxu0
          %v1343 = vadd.f32 %v1106, %v1342
          %v1344 = vpop.f32.mrb[0].mxu0
          %v1345 = vpop.f32.mrb[0].mxu0
          %v1346 = vadd.f32 %v1106, %v1345
          %v1347 = vpop.f32.mrb[0].mxu0
          %1348 = vmatprep.mubr.bf16.mxu0 %v777
          %1349 = vmatmul.mubr.bf16.gmra.mrb[0].mxu0 %v776
          %v1350 = vpop.f32.mrb[0].mxu0
          %v1351 = vadd.f32 %v1106, %v1350
          %v1352 = vpop.f32.mrb[0].mxu0
          %v1353 = vpop.f32.mrb[0].mxu0
          %v1354 = vadd.f32 %v1106, %v1353
          %v1355 = vpop.f32.mrb[0].mxu0
          %1356 = vmatprep.mubr.bf16.mxu0 %v779
          %1357 = vmatmul.mubr.bf16.gmra.mrb[0].mxu0 %v778
          %v1358 = vpop.f32.mrb[0].mxu0
          %v1359 = vadd.f32 %v1106, %v1358
          %v1360 = vpop.f32.mrb[0].mxu0
          %v1361 = vpop.f32.mrb[0].mxu0
          %v1362 = vadd.f32 %v1106, %v1361
          %v1363 = vpop.f32.mrb[0].mxu0
          %1364 = vdwg.mxu0
          %1365 = vxpose.xlu0.b32.start [1/16] %v943, 128
          %1366 = vxpose.xlu0.b32.cont [2/16] %v946, 128
          %1367 = vxpose.xlu0.b32.cont [3/16] %v951, 128
          %1368 = vxpose.xlu0.b32.cont [4/16] %v954, 128
          %1369 = vxpose.xlu0.b32.cont [5/16] %v959, 128
          %1370 = vxpose.xlu0.b32.cont [6/16] %v962, 128
          %1371 = vxpose.xlu0.b32.cont [7/16] %v967, 128
          %1372 = vxpose.xlu0.b32.cont [8/16] %v970, 128
          %1373 = vxpose.xlu0.b32.cont [9/16] %v975, 128
          %1374 = vxpose.xlu0.b32.cont [10/16] %v978, 128
          %1375 = vxpose.xlu0.b32.cont [11/16] %v983, 128
          %1376 = vxpose.xlu0.b32.cont [12/16] %v986, 128
          %1377 = vxpose.xlu0.b32.cont [13/16] %v991, 128
          %1378 = vxpose.xlu0.b32.cont [14/16] %v994, 128
          %1379 = vxpose.xlu0.b32.cont [15/16] %v999, 128
          %1380 = vxpose.xlu0.b32.end [16/16] %v1002, 128
          %v1381 = vpop.trf.xlu0
          %v1382 = vpop.trf.xlu0
          %v1383 = vpop.trf.xlu0
          %v1384 = vpop.trf.xlu0
          %v1385 = vpop.trf.xlu0
          %v1386 = vpop.trf.xlu0
          %v1387 = vpop.trf.xlu0
          %v1388 = vpop.trf.xlu0
          %v1389 = vpop.trf.xlu0
          %v1390 = vpop.trf.xlu0
          %v1391 = vpop.trf.xlu0
          %v1392 = vpop.trf.xlu0
          %v1393 = vpop.trf.xlu0
          %v1394 = vpop.trf.xlu0
          %v1395 = vpop.trf.xlu0
          %v1396 = vpop.trf.xlu0
          %1397 = vxpose.xlu0.b32.start [1/16] %v1007, 128
          %1398 = vxpose.xlu0.b32.cont [2/16] %v1010, 128
          %1399 = vxpose.xlu0.b32.cont [3/16] %v1015, 128
          %1400 = vxpose.xlu0.b32.cont [4/16] %v1018, 128
          %1401 = vxpose.xlu0.b32.cont [5/16] %v1023, 128
          %1402 = vxpose.xlu0.b32.cont [6/16] %v1026, 128
          %1403 = vxpose.xlu0.b32.cont [7/16] %v1031, 128
          %1404 = vxpose.xlu0.b32.cont [8/16] %v1034, 128
          %1405 = vxpose.xlu0.b32.cont [9/16] %v1039, 128
          %1406 = vxpose.xlu0.b32.cont [10/16] %v1042, 128
          %1407 = vxpose.xlu0.b32.cont [11/16] %v1047, 128
          %1408 = vxpose.xlu0.b32.cont [12/16] %v1050, 128
          %1409 = vxpose.xlu0.b32.cont [13/16] %v1055, 128
          %1410 = vxpose.xlu0.b32.cont [14/16] %v1058, 128
          %1411 = vxpose.xlu0.b32.cont [15/16] %v1063, 128
          %1412 = vxpose.xlu0.b32.end [16/16] %v1066, 128
          %v1413 = vpop.trf.xlu0
          %v1414 = vpop.trf.xlu0
          %v1415 = vpop.trf.xlu0
          %v1416 = vpop.trf.xlu0
          %v1417 = vpop.trf.xlu0
          %v1418 = vpop.trf.xlu0
          %v1419 = vpop.trf.xlu0
          %v1420 = vpop.trf.xlu0
          %v1421 = vpop.trf.xlu0
          %v1422 = vpop.trf.xlu0
          %v1423 = vpop.trf.xlu0
          %v1424 = vpop.trf.xlu0
          %v1425 = vpop.trf.xlu0
          %v1426 = vpop.trf.xlu0
          %v1427 = vpop.trf.xlu0
          %v1428 = vpop.trf.xlu0
          %v1429 = vpack.c.bf16 %v1382, %v1381
          %v1430 = vpack.c.bf16 %v1414, %v1413
          %v1431 = vpack.c.bf16 %v1384, %v1383
          %v1432 = vpack.c.bf16 %v1416, %v1415
          %v1433 = vpack.c.bf16 %v1386, %v1385
          %v1434 = vpack.c.bf16 %v1418, %v1417
          %v1435 = vpack.c.bf16 %v1388, %v1387
          %v1436 = vpack.c.bf16 %v1420, %v1419
          %v1437 = vpack.c.bf16 %v1390, %v1389
          %v1438 = vpack.c.bf16 %v1422, %v1421
          %v1439 = vpack.c.bf16 %v1392, %v1391
          %v1440 = vpack.c.bf16 %v1424, %v1423
          %v1441 = vpack.c.bf16 %v1394, %v1393
          %v1442 = vpack.c.bf16 %v1426, %v1425
          %v1443 = vpack.c.bf16 %v1396, %v1395
          %v1444 = vpack.c.bf16 %v1428, %v1427
          %1445 = vst [vmem:[#allocation2] sm:$0xff] %v1429
          %1446 = vst [vmem:[#allocation2 + $0x8] sm:$0xff] %v1430
          %1447 = vst [vmem:[#allocation2 + $0x10] sm:$0xff] %v1431
          %1448 = vst [vmem:[#allocation2 + $0x18] sm:$0xff] %v1432
          %1449 = vst [vmem:[#allocation2 + $0x20] sm:$0xff] %v1433
          %1450 = vst [vmem:[#allocation2 + $0x28] sm:$0xff] %v1434
          %1451 = vst [vmem:[#allocation2 + $0x30] sm:$0xff] %v1435
          %1452 = vst [vmem:[#allocation2 + $0x38] sm:$0xff] %v1436
          %1453 = vst [vmem:[#allocation2 + $0x40] sm:$0xff] %v1437
          %1454 = vst [vmem:[#allocation2 + $0x48] sm:$0xff] %v1438
          %1455 = vst [vmem:[#allocation2 + $0x50] sm:$0xff] %v1439
          %1456 = vst [vmem:[#allocation2 + $0x58] sm:$0xff] %v1440
          %1457 = vst [vmem:[#allocation2 + $0x60] sm:$0xff] %v1441
          %1458 = vst [vmem:[#allocation2 + $0x68] sm:$0xff] %v1442
          %1459 = vst [vmem:[#allocation2 + $0x70] sm:$0xff] %v1443
          %1460 = vst [vmem:[#allocation2 + $0x78] sm:$0xff] %v1444
          %v1461 = vpack.c.bf16 %v1242, %v1239
          %v1462 = vpack.c.bf16 %v1250, %v1247
          %v1463 = vpack.c.bf16 %v1258, %v1255
          %v1464 = vpack.c.bf16 %v1266, %v1263
          %v1465 = vpack.c.bf16 %v1274, %v1271
          %v1466 = vpack.c.bf16 %v1282, %v1279
          %v1467 = vpack.c.bf16 %v1290, %v1287
          %v1468 = vpack.c.bf16 %v1298, %v1295
          %v1469 = vpack.c.bf16 %v1306, %v1303
          %v1470 = vpack.c.bf16 %v1314, %v1311
          %v1471 = vpack.c.bf16 %v1322, %v1319
          %v1472 = vpack.c.bf16 %v1330, %v1327
          %v1473 = vpack.c.bf16 %v1338, %v1335
          %v1474 = vpack.c.bf16 %v1346, %v1343
          %v1475 = vpack.c.bf16 %v1354, %v1351
          %v1476 = vpack.c.bf16 %v1362, %v1359
          %1477 = vst [vmem:[#allocation3] sm:$0xff] %v1461
          %1478 = vst [vmem:[#allocation3 + $0x8] sm:$0xff] %v1462
          %1479 = vst [vmem:[#allocation3 + $0x10] sm:$0xff] %v1463
          %1480 = vst [vmem:[#allocation3 + $0x18] sm:$0xff] %v1464
          %1481 = vst [vmem:[#allocation3 + $0x20] sm:$0xff] %v1465
          %1482 = vst [vmem:[#allocation3 + $0x28] sm:$0xff] %v1466
          %1483 = vst [vmem:[#allocation3 + $0x30] sm:$0xff] %v1467
          %1484 = vst [vmem:[#allocation3 + $0x38] sm:$0xff] %v1468
          %1485 = vst [vmem:[#allocation3 + $0x40] sm:$0xff] %v1469
          %1486 = vst [vmem:[#allocation3 + $0x48] sm:$0xff] %v1470
          %1487 = vst [vmem:[#allocation3 + $0x50] sm:$0xff] %v1471
          %1488 = vst [vmem:[#allocation3 + $0x58] sm:$0xff] %v1472
          %1489 = vst [vmem:[#allocation3 + $0x60] sm:$0xff] %v1473
          %1490 = vst [vmem:[#allocation3 + $0x68] sm:$0xff] %v1474
          %1491 = vst [vmem:[#allocation3 + $0x70] sm:$0xff] %v1475
          %1492 = vst [vmem:[#allocation3 + $0x78] sm:$0xff] %v1476
        $region84: #{tpu_custom_call.1} parent=55 // pred_fallthru
          _
        %v1493 = vld [vmem:[%s465] sm:$0xff]
        %v1494 = vld [vmem:[%s465 + $0x8] sm:$0xff]
        %v1495 = vld [vmem:[%s465 + $0x10] sm:$0xff]
        %v1496 = vld [vmem:[%s465 + $0x18] sm:$0xff]
        %v1497 = vld [vmem:[%s465 + $0x20] sm:$0xff]
        %v1498 = vld [vmem:[%s465 + $0x28] sm:$0xff]
        %v1499 = vld [vmem:[%s465 + $0x30] sm:$0xff]
        %v1500 = vld [vmem:[%s465 + $0x38] sm:$0xff]
        %v1501 = vld [vmem:[%s465 + $0x40] sm:$0xff]
        %v1502 = vld [vmem:[%s465 + $0x48] sm:$0xff]
        %v1503 = vld [vmem:[%s465 + $0x50] sm:$0xff]
        %v1504 = vld [vmem:[%s465 + $0x58] sm:$0xff]
        %v1505 = vld [vmem:[%s465 + $0x60] sm:$0xff]
        %v1506 = vld [vmem:[%s465 + $0x68] sm:$0xff]
        %v1507 = vld [vmem:[%s465 + $0x70] sm:$0xff]
        %v1508 = vld [vmem:[%s465 + $0x78] sm:$0xff]
        %v1509 = vld [vmem:[%s474] sm:$0xf]
        %v1510 = vld [vmem:[%s474 + $0x4] sm:$0xf]
        %v1511 = vld [vmem:[%s474 + $0x8] sm:$0xf]
        %v1512 = vld [vmem:[%s474 + $0xc] sm:$0xf]
        %v1513 = vld [vmem:[%s474 + $0x10] sm:$0xf]
        %v1514 = vld [vmem:[%s474 + $0x14] sm:$0xf]
        %v1515 = vld [vmem:[%s474 + $0x18] sm:$0xf]
        %v1516 = vld [vmem:[%s474 + $0x1c] sm:$0xf]
        %v1517 = vld [vmem:[%s474 + $0x20] sm:$0xf]
        %v1518 = vld [vmem:[%s474 + $0x24] sm:$0xf]
        %v1519 = vld [vmem:[%s474 + $0x28] sm:$0xf]
        %v1520 = vld [vmem:[%s474 + $0x2c] sm:$0xf]
        %v1521 = vld [vmem:[%s474 + $0x30] sm:$0xf]
        %v1522 = vld [vmem:[%s474 + $0x34] sm:$0xf]
        %v1523 = vld [vmem:[%s474 + $0x38] sm:$0xf]
        %v1524 = vld [vmem:[%s474 + $0x3c] sm:$0xf]
        %v1525 = vld [vmem:[%s474 + $0x40] sm:$0xf]
        %v1526 = vld [vmem:[%s474 + $0x44] sm:$0xf]
        %v1527 = vld [vmem:[%s474 + $0x48] sm:$0xf]
        %v1528 = vld [vmem:[%s474 + $0x4c] sm:$0xf]
        %v1529 = vld [vmem:[%s474 + $0x50] sm:$0xf]
        %v1530 = vld [vmem:[%s474 + $0x54] sm:$0xf]
        %v1531 = vld [vmem:[%s474 + $0x58] sm:$0xf]
        %v1532 = vld [vmem:[%s474 + $0x5c] sm:$0xf]
        %v1533 = vld [vmem:[%s474 + $0x60] sm:$0xf]
        %v1534 = vld [vmem:[%s474 + $0x64] sm:$0xf]
        %v1535 = vld [vmem:[%s474 + $0x68] sm:$0xf]
        %v1536 = vld [vmem:[%s474 + $0x6c] sm:$0xf]
        %v1537 = vld [vmem:[%s474 + $0x70] sm:$0xf]
        %v1538 = vld [vmem:[%s474 + $0x74] sm:$0xf]
        %v1539 = vld [vmem:[%s474 + $0x78] sm:$0xf]
        %v1540 = vld [vmem:[%s474 + $0x7c] sm:$0xf]
        %v1541 = vld [vmem:[%s568] sm:$0x1]
        %v1543 = vlaneseq
        %v1544 = vshrl.u32 %v1543, 7
        %v1545 = vsub.s32 0, %v1544
        %v1546 = vrot.slane %v1541, %v1545
        %v1564 = vunpack.c.l.b16 %v1493
        %v1565 = vunpack.c.h.b16 %v1493
        %v1566 = vunpack.c.l.b16 %v1494
        %v1567 = vunpack.c.h.b16 %v1494
        %v1568 = vunpack.c.l.b16 %v1495
        %v1569 = vunpack.c.h.b16 %v1495
        %v1570 = vunpack.c.l.b16 %v1496
        %v1571 = vunpack.c.h.b16 %v1496
        %v1572 = vunpack.c.l.b16 %v1497
        %v1573 = vunpack.c.h.b16 %v1497
        %v1574 = vunpack.c.l.b16 %v1498
        %v1575 = vunpack.c.h.b16 %v1498
        %v1576 = vunpack.c.l.b16 %v1499
        %v1577 = vunpack.c.h.b16 %v1499
        %v1578 = vunpack.c.l.b16 %v1500
        %v1579 = vunpack.c.h.b16 %v1500
        %v1580 = vunpack.c.l.b16 %v1501
        %v1581 = vunpack.c.h.b16 %v1501
        %v1582 = vunpack.c.l.b16 %v1502
        %v1583 = vunpack.c.h.b16 %v1502
        %v1584 = vunpack.c.l.b16 %v1503
        %v1585 = vunpack.c.h.b16 %v1503
        %v1586 = vunpack.c.l.b16 %v1504
        %v1587 = vunpack.c.h.b16 %v1504
        %v1588 = vunpack.c.l.b16 %v1505
        %v1589 = vunpack.c.h.b16 %v1505
        %v1590 = vunpack.c.l.b16 %v1506
        %v1591 = vunpack.c.h.b16 %v1506
        %v1592 = vunpack.c.l.b16 %v1507
        %v1593 = vunpack.c.h.b16 %v1507
        %v1594 = vunpack.c.l.b16 %v1508
        %v1595 = vunpack.c.h.b16 %v1508
        %v1596 = vpack.c.b16 %v1566, %v1564
        %v1597 = vpack.c.b16 %v1567, %v1565
        %v1598 = vpack.c.b16 %v1570, %v1568
        %v1599 = vpack.c.b16 %v1571, %v1569
        %v1600 = vpack.c.b16 %v1574, %v1572
        %v1601 = vpack.c.b16 %v1575, %v1573
        %v1602 = vpack.c.b16 %v1578, %v1576
        %v1603 = vpack.c.b16 %v1579, %v1577
        %v1604 = vpack.c.b16 %v1582, %v1580
        %v1605 = vpack.c.b16 %v1583, %v1581
        %v1606 = vpack.c.b16 %v1586, %v1584
        %v1607 = vpack.c.b16 %v1587, %v1585
        %v1608 = vpack.c.b16 %v1590, %v1588
        %v1609 = vpack.c.b16 %v1591, %v1589
        %v1610 = vpack.c.b16 %v1594, %v1592
        %v1611 = vpack.c.b16 %v1595, %v1593
        %v1660 = vunpack.c.l.b16 %v1509
        %v1661 = vunpack.c.l.b16 %v1510
        %v1662 = vunpack.c.l.b16 %v1511
        %v1663 = vunpack.c.l.b16 %v1512
        %v1664 = vunpack.c.l.b16 %v1513
        %v1665 = vunpack.c.l.b16 %v1514
        %v1666 = vunpack.c.l.b16 %v1515
        %v1667 = vunpack.c.l.b16 %v1516
        %v1668 = vunpack.c.l.b16 %v1517
        %v1669 = vunpack.c.l.b16 %v1518
        %v1670 = vunpack.c.l.b16 %v1519
        %v1671 = vunpack.c.l.b16 %v1520
        %v1672 = vunpack.c.l.b16 %v1521
        %v1673 = vunpack.c.l.b16 %v1522
        %v1674 = vunpack.c.l.b16 %v1523
        %v1675 = vunpack.c.l.b16 %v1524
        %v1676 = vunpack.c.l.b16 %v1525
        %v1677 = vunpack.c.l.b16 %v1526
        %v1678 = vunpack.c.l.b16 %v1527
        %v1679 = vunpack.c.l.b16 %v1528
        %v1680 = vunpack.c.l.b16 %v1529
        %v1681 = vunpack.c.l.b16 %v1530
        %v1682 = vunpack.c.l.b16 %v1531
        %v1683 = vunpack.c.l.b16 %v1532
        %v1684 = vunpack.c.l.b16 %v1533
        %v1685 = vunpack.c.l.b16 %v1534
        %v1686 = vunpack.c.l.b16 %v1535
        %v1687 = vunpack.c.l.b16 %v1536
        %v1688 = vunpack.c.l.b16 %v1537
        %v1689 = vunpack.c.l.b16 %v1538
        %v1690 = vunpack.c.l.b16 %v1539
        %v1691 = vunpack.c.l.b16 %v1540
        %v1692 = vpack.c.b16 %v1661, %v1660
        %v1693 = vpack.c.b16 %v1663, %v1662
        %v1694 = vpack.c.b16 %v1665, %v1664
        %v1695 = vpack.c.b16 %v1667, %v1666
        %v1696 = vpack.c.b16 %v1669, %v1668
        %v1697 = vpack.c.b16 %v1671, %v1670
        %v1698 = vpack.c.b16 %v1673, %v1672
        %v1699 = vpack.c.b16 %v1675, %v1674
        %v1700 = vpack.c.b16 %v1677, %v1676
        %v1701 = vpack.c.b16 %v1679, %v1678
        %v1702 = vpack.c.b16 %v1681, %v1680
        %v1703 = vpack.c.b16 %v1683, %v1682
        %v1704 = vpack.c.b16 %v1685, %v1684
        %v1705 = vpack.c.b16 %v1687, %v1686
        %v1706 = vpack.c.b16 %v1689, %v1688
        %v1707 = vpack.c.b16 %v1691, %v1690
        %1724 = vmatprep.subr.bf16.mxu0 0
        %1725 = vmatpush1.bf16.msra.mxu0 %v1692
        %1726 = vmatprep.subr.bf16.mxu0 0
        %1727 = vmatpush1.bf16.msra.mxu0 %v1693
        %1728 = vmatprep.subr.bf16.mxu0 0
        %1729 = vmatpush1.bf16.msra.mxu0 %v1694
        %1730 = vmatprep.subr.bf16.mxu0 0
        %1731 = vmatpush1.bf16.msra.mxu0 %v1695
        %1732 = vmatprep.subr.bf16.mxu0 0
        %1733 = vmatpush1.bf16.msra.mxu0 %v1696
        %1734 = vmatprep.subr.bf16.mxu0 0
        %1735 = vmatpush1.bf16.msra.mxu0 %v1697
        %1736 = vmatprep.subr.bf16.mxu0 0
        %1737 = vmatpush1.bf16.msra.mxu0 %v1698
        %1738 = vmatprep.subr.bf16.mxu0 0
        %1739 = vmatpush1.bf16.msra.mxu0 %v1699
        %1740 = vmatprep.subr.bf16.mxu0 0
        %1741 = vmatpush1.bf16.msra.mxu0 %v1700
        %1742 = vmatprep.subr.bf16.mxu0 0
        %1743 = vmatpush1.bf16.msra.mxu0 %v1701
        %1744 = vmatprep.subr.bf16.mxu0 0
        %1745 = vmatpush1.bf16.msra.mxu0 %v1702
        %1746 = vmatprep.subr.bf16.mxu0 0
        %1747 = vmatpush1.bf16.msra.mxu0 %v1703
        %1748 = vmatprep.subr.bf16.mxu0 0
        %1749 = vmatpush1.bf16.msra.mxu0 %v1704
        %1750 = vmatprep.subr.bf16.mxu0 0
        %1751 = vmatpush1.bf16.msra.mxu0 %v1705
        %1752 = vmatprep.subr.bf16.mxu0 0
        %1753 = vmatpush1.bf16.msra.mxu0 %v1706
        %1754 = vmatprep.subr.bf16.mxu0 0
        %1755 = vmatpush1.bf16.msra.mxu0 %v1707
        %1756 = vmatprep.mubr.bf16.mxu0 %v1597
        %1757 = vmatmul.mubr.bf16.gmra.mrb[0].mxu0 %v1596
        %v1758 = vpop.f32.mrb[0].mxu0
        %v1759 = vadd.f32 %v1546, %v1758
        %v1760 = vpop.f32.mrb[0].mxu0
        %v1761 = vpop.f32.mrb[0].mxu0
        %v1762 = vadd.f32 %v1546, %v1761
        %v1763 = vpop.f32.mrb[0].mxu0
        %1764 = vmatprep.mubr.bf16.mxu0 %v1599
        %1765 = vmatmul.mubr.bf16.gmra.mrb[0].mxu0 %v1598
        %v1766 = vpop.f32.mrb[0].mxu0
        %v1767 = vadd.f32 %v1546, %v1766
        %v1768 = vpop.f32.mrb[0].mxu0
        %v1769 = vpop.f32.mrb[0].mxu0
        %v1770 = vadd.f32 %v1546, %v1769
        %v1771 = vpop.f32.mrb[0].mxu0
        %1772 = vmatprep.mubr.bf16.mxu0 %v1601
        %1773 = vmatmul.mubr.bf16.gmra.mrb[0].mxu0 %v1600
        %v1774 = vpop.f32.mrb[0].mxu0
        %v1775 = vadd.f32 %v1546, %v1774
        %v1776 = vpop.f32.mrb[0].mxu0
        %v1777 = vpop.f32.mrb[0].mxu0
        %v1778 = vadd.f32 %v1546, %v1777
        %v1779 = vpop.f32.mrb[0].mxu0
        %1780 = vmatprep.mubr.bf16.mxu0 %v1603
        %1781 = vmatmul.mubr.bf16.gmra.mrb[0].mxu0 %v1602
        %v1782 = vpop.f32.mrb[0].mxu0
        %v1783 = vadd.f32 %v1546, %v1782
        %v1784 = vpop.f32.mrb[0].mxu0
        %v1785 = vpop.f32.mrb[0].mxu0
        %v1786 = vadd.f32 %v1546, %v1785
        %v1787 = vpop.f32.mrb[0].mxu0
        %1788 = vmatprep.mubr.bf16.mxu0 %v1605
        %1789 = vmatmul.mubr.bf16.gmra.mrb[0].mxu0 %v1604
        %v1790 = vpop.f32.mrb[0].mxu0
        %v1791 = vadd.f32 %v1546, %v1790
        %v1792 = vpop.f32.mrb[0].mxu0
        %v1793 = vpop.f32.mrb[0].mxu0
        %v1794 = vadd.f32 %v1546, %v1793
        %v1795 = vpop.f32.mrb[0].mxu0
        %1796 = vmatprep.mubr.bf16.mxu0 %v1607
        %1797 = vmatmul.mubr.bf16.gmra.mrb[0].mxu0 %v1606
        %v1798 = vpop.f32.mrb[0].mxu0
        %v1799 = vadd.f32 %v1546, %v1798
        %v1800 = vpop.f32.mrb[0].mxu0
        %v1801 = vpop.f32.mrb[0].mxu0
        %v1802 = vadd.f32 %v1546, %v1801
        %v1803 = vpop.f32.mrb[0].mxu0
        %1804 = vmatprep.mubr.bf16.mxu0 %v1609
        %1805 = vmatmul.mubr.bf16.gmra.mrb[0].mxu0 %v1608
        %v1806 = vpop.f32.mrb[0].mxu0
        %v1807 = vadd.f32 %v1546, %v1806
        %v1808 = vpop.f32.mrb[0].mxu0
        %v1809 = vpop.f32.mrb[0].mxu0
        %v1810 = vadd.f32 %v1546, %v1809
        %v1811 = vpop.f32.mrb[0].mxu0
        %1812 = vmatprep.mubr.bf16.mxu0 %v1611
        %1813 = vmatmul.mubr.bf16.gmra.mrb[0].mxu0 %v1610
        %v1814 = vpop.f32.mrb[0].mxu0
        %v1815 = vadd.f32 %v1546, %v1814
        %v1816 = vpop.f32.mrb[0].mxu0
        %v1817 = vpop.f32.mrb[0].mxu0
        %v1818 = vadd.f32 %v1546, %v1817
        %v1819 = vpop.f32.mrb[0].mxu0
        %1820 = vdwg.mxu0
        %v1821 = vmul.f32 %v1759, 0.125
        %v1822 = vmul.f32 %v1762, 0.125
        %v1823 = vmul.f32 %v1767, 0.125
        %v1824 = vmul.f32 %v1770, 0.125
        %v1825 = vmul.f32 %v1775, 0.125
        %v1826 = vmul.f32 %v1778, 0.125
        %v1827 = vmul.f32 %v1783, 0.125
        %v1828 = vmul.f32 %v1786, 0.125
        %v1829 = vmul.f32 %v1791, 0.125
        %v1830 = vmul.f32 %v1794, 0.125
        %v1831 = vmul.f32 %v1799, 0.125
        %v1832 = vmul.f32 %v1802, 0.125
        %v1833 = vmul.f32 %v1807, 0.125
        %v1834 = vmul.f32 %v1810, 0.125
        %v1835 = vmul.f32 %v1815, 0.125
        %v1836 = vmul.f32 %v1818, 0.125
        %v1837 = vpack.c.bf16 %v1822, %v1821
        %v1838 = vpack.c.bf16 %v1824, %v1823
        %v1839 = vpack.c.bf16 %v1826, %v1825
        %v1840 = vpack.c.bf16 %v1828, %v1827
        %v1841 = vpack.c.bf16 %v1830, %v1829
        %v1842 = vpack.c.bf16 %v1832, %v1831
        %v1843 = vpack.c.bf16 %v1834, %v1833
        %v1844 = vpack.c.bf16 %v1836, %v1835
        %v1845 = vld [vmem:[%s501] sm:$0xff]
        %v1846 = vld [vmem:[%s501 + $0x8] sm:$0xff]
        %v1847 = vld [vmem:[%s501 + $0x10] sm:$0xff]
        %v1848 = vld [vmem:[%s501 + $0x18] sm:$0xff]
        %v1849 = vld [vmem:[%s501 + $0x20] sm:$0xff]
        %v1850 = vld [vmem:[%s501 + $0x28] sm:$0xff]
        %v1851 = vld [vmem:[%s501 + $0x30] sm:$0xff]
        %v1852 = vld [vmem:[%s501 + $0x38] sm:$0xff]
        %v1853 = vlaneseq
        %v1854 = vshrl.u32 %v1853, 7
        %v1855 = vadd.s32 %v1854, 8
        %v1856 = vadd.s32 %v1854, 16
        %v1857 = vadd.s32 %v1854, 24
        %v1858 = vadd.s32 %v1854, 32
        %v1859 = vadd.s32 %v1854, 40
        %v1860 = vadd.s32 %v1854, 48
        %v1861 = vadd.s32 %v1854, 56
        %v1862 = vadd.s32 %v1854, 64
        %v1863 = vadd.s32 %v1854, 72
        %v1864 = vadd.s32 %v1854, 80
        %v1865 = vadd.s32 %v1854, 88
        %v1866 = vadd.s32 %v1854, 96
        %v1867 = vadd.s32 %v1854, 104
        %v1868 = vadd.s32 %v1854, 112
        %v1869 = vadd.s32 %v1854, 120
        %s1870 = smul.u32 %s38, 128
        %v1871 = vstv %s1870
        %v1872 = vadd.s32 %v1854, %v1871
        %v1873 = vadd.s32 %v1855, %v1871
        %v1874 = vadd.s32 %v1856, %v1871
        %v1875 = vadd.s32 %v1857, %v1871
        %v1876 = vadd.s32 %v1858, %v1871
        %v1877 = vadd.s32 %v1859, %v1871
        %v1878 = vadd.s32 %v1860, %v1871
        %v1879 = vadd.s32 %v1861, %v1871
        %v1880 = vadd.s32 %v1862, %v1871
        %v1881 = vadd.s32 %v1863, %v1871
        %v1882 = vadd.s32 %v1864, %v1871
        %v1883 = vadd.s32 %v1865, %v1871
        %v1884 = vadd.s32 %v1866, %v1871
        %v1885 = vadd.s32 %v1867, %v1871
        %v1886 = vadd.s32 %v1868, %v1871
        %v1887 = vadd.s32 %v1869, %v1871
        %v1888 = vlaneseq
        %v1889 = vand.u32 %v1888, 127
        %v1890 = vadd.s32 %v1889, 128
        %vm1891 = vcmp.le.s32.totalorder %v1889, %v1872
        %vm1892 = vcmp.le.s32.totalorder %v1890, %v1872
        %vm1893 = vcmp.le.s32.totalorder %v1889, %v1873
        %vm1894 = vcmp.le.s32.totalorder %v1890, %v1873
        %vm1895 = vcmp.le.s32.totalorder %v1889, %v1874
        %vm1896 = vcmp.le.s32.totalorder %v1890, %v1874
        %vm1897 = vcmp.le.s32.totalorder %v1889, %v1875
        %vm1898 = vcmp.le.s32.totalorder %v1890, %v1875
        %vm1899 = vcmp.le.s32.totalorder %v1889, %v1876
        %vm1900 = vcmp.le.s32.totalorder %v1890, %v1876
        %vm1901 = vcmp.le.s32.totalorder %v1889, %v1877
        %vm1902 = vcmp.le.s32.totalorder %v1890, %v1877
        %vm1903 = vcmp.le.s32.totalorder %v1889, %v1878
        %vm1904 = vcmp.le.s32.totalorder %v1890, %v1878
        %vm1905 = vcmp.le.s32.totalorder %v1889, %v1879
        %vm1906 = vcmp.le.s32.totalorder %v1890, %v1879
        %vm1907 = vcmp.le.s32.totalorder %v1889, %v1880
        %vm1908 = vcmp.le.s32.totalorder %v1890, %v1880
        %vm1909 = vcmp.le.s32.totalorder %v1889, %v1881
        %vm1910 = vcmp.le.s32.totalorder %v1890, %v1881
        %vm1911 = vcmp.le.s32.totalorder %v1889, %v1882
        %vm1912 = vcmp.le.s32.totalorder %v1890, %v1882
        %vm1913 = vcmp.le.s32.totalorder %v1889, %v1883
        %vm1914 = vcmp.le.s32.totalorder %v1890, %v1883
        %vm1915 = vcmp.le.s32.totalorder %v1889, %v1884
        %vm1916 = vcmp.le.s32.totalorder %v1890, %v1884
        %vm1917 = vcmp.le.s32.totalorder %v1889, %v1885
        %vm1918 = vcmp.le.s32.totalorder %v1890, %v1885
        %vm1919 = vcmp.le.s32.totalorder %v1889, %v1886
        %vm1920 = vcmp.le.s32.totalorder %v1890, %v1886
        %vm1921 = vcmp.le.s32.totalorder %v1889, %v1887
        %vm1922 = vcmp.le.s32.totalorder %v1890, %v1887
        %v1923 = vsel %vm1891, 0.0, -1e+30
        %v1924 = vsel %vm1892, 0.0, -1e+30
        %v1925 = vsel %vm1893, 0.0, -1e+30
        %v1926 = vsel %vm1894, 0.0, -1e+30
        %v1927 = vsel %vm1895, 0.0, -1e+30
        %v1928 = vsel %vm1896, 0.0, -1e+30
        %v1929 = vsel %vm1897, 0.0, -1e+30
        %v1930 = vsel %vm1898, 0.0, -1e+30
        %v1931 = vsel %vm1899, 0.0, -1e+30
        %v1932 = vsel %vm1900, 0.0, -1e+30
        %v1933 = vsel %vm1901, 0.0, -1e+30
        %v1934 = vsel %vm1902, 0.0, -1e+30
        %v1935 = vsel %vm1903, 0.0, -1e+30
        %v1936 = vsel %vm1904, 0.0, -1e+30
        %v1937 = vsel %vm1905, 0.0, -1e+30
        %v1938 = vsel %vm1906, 0.0, -1e+30
        %v1939 = vsel %vm1907, 0.0, -1e+30
        %v1940 = vsel %vm1908, 0.0, -1e+30
        %v1941 = vsel %vm1909, 0.0, -1e+30
        %v1942 = vsel %vm1910, 0.0, -1e+30
        %v1943 = vsel %vm1911, 0.0, -1e+30
        %v1944 = vsel %vm1912, 0.0, -1e+30
        %v1945 = vsel %vm1913, 0.0, -1e+30
        %v1946 = vsel %vm1914, 0.0, -1e+30
        %v1947 = vsel %vm1915, 0.0, -1e+30
        %v1948 = vsel %vm1916, 0.0, -1e+30
        %v1949 = vsel %vm1917, 0.0, -1e+30
        %v1950 = vsel %vm1918, 0.0, -1e+30
        %v1951 = vsel %vm1919, 0.0, -1e+30
        %v1952 = vsel %vm1920, 0.0, -1e+30
        %v1953 = vsel %vm1921, 0.0, -1e+30
        %v1954 = vsel %vm1922, 0.0, -1e+30
        %v1955 = vld [vmem:[#allocation2] sm:$0xff]
        %v1956 = vld [vmem:[#allocation2 + $0x8] sm:$0xff]
        %v1957 = vld [vmem:[#allocation2 + $0x10] sm:$0xff]
        %v1958 = vld [vmem:[#allocation2 + $0x18] sm:$0xff]
        %v1959 = vld [vmem:[#allocation2 + $0x20] sm:$0xff]
        %v1960 = vld [vmem:[#allocation2 + $0x28] sm:$0xff]
        %v1961 = vld [vmem:[#allocation2 + $0x30] sm:$0xff]
        %v1962 = vld [vmem:[#allocation2 + $0x38] sm:$0xff]
        %v1971 = vunpack.c.l.b16 %v1845
        %v1972 = vunpack.c.h.b16 %v1845
        %v1973 = vunpack.c.l.b16 %v1846
        %v1974 = vunpack.c.h.b16 %v1846
        %v1975 = vunpack.c.l.b16 %v1847
        %v1976 = vunpack.c.h.b16 %v1847
        %v1977 = vunpack.c.l.b16 %v1848
        %v1978 = vunpack.c.h.b16 %v1848
        %v1979 = vunpack.c.l.b16 %v1849
        %v1980 = vunpack.c.h.b16 %v1849
        %v1981 = vunpack.c.l.b16 %v1850
        %v1982 = vunpack.c.h.b16 %v1850
        %v1983 = vunpack.c.l.b16 %v1851
        %v1984 = vunpack.c.h.b16 %v1851
        %v1985 = vunpack.c.l.b16 %v1852
        %v1986 = vunpack.c.h.b16 %v1852
        %v1987 = vpack.c.b16 %v1973, %v1971
        %v1988 = vpack.c.b16 %v1974, %v1972
        %v1989 = vpack.c.b16 %v1977, %v1975
        %v1990 = vpack.c.b16 %v1978, %v1976
        %v1991 = vpack.c.b16 %v1981, %v1979
        %v1992 = vpack.c.b16 %v1982, %v1980
        %v1993 = vpack.c.b16 %v1985, %v1983
        %v1994 = vpack.c.b16 %v1986, %v1984
        %vm2003 = vcmask 523264
        %v2005 = vsel %vm2003, %v1837, 0
        %v2008 = vsel %vm2003, %v1838, 0
        %v2011 = vsel %vm2003, %v1839, 0
        %v2014 = vsel %vm2003, %v1840, 0
        %v2017 = vsel %vm2003, %v1841, 0
        %v2020 = vsel %vm2003, %v1842, 0
        %v2023 = vsel %vm2003, %v1843, 0
        %v2026 = vsel %vm2003, %v1844, 0
        %2028 = vmatprep.subr.bf16.mxu0 %v1988
        %2029 = vmatpush1.bf16.msra.mxu0 %v1987
        %2030 = vmatprep.subr.bf16.mxu0 %v1990
        %2031 = vmatpush1.bf16.msra.mxu0 %v1989
        %2032 = vmatprep.subr.bf16.mxu0 %v1992
        %2033 = vmatpush1.bf16.msra.mxu0 %v1991
        %2034 = vmatprep.subr.bf16.mxu0 %v1994
        %2035 = vmatpush1.bf16.msra.mxu0 %v1993
        %2036 = vmatprep.subr.bf16.mxu0 0
        %2037 = vmatpush1.bf16.msra.mxu0 0
        %2038 = vmatprep.subr.bf16.mxu0 0
        %2039 = vmatpush1.bf16.msra.mxu0 0
        %2040 = vmatprep.subr.bf16.mxu0 0
        %2041 = vmatpush1.bf16.msra.mxu0 0
        %2042 = vmatprep.subr.bf16.mxu0 0
        %2043 = vmatpush1.bf16.msra.mxu0 0
        %2044 = vmatprep.subr.bf16.mxu0 0
        %2045 = vmatpush1.bf16.msra.mxu0 0
        %2046 = vmatprep.subr.bf16.mxu0 0
        %2047 = vmatpush1.bf16.msra.mxu0 0
        %2048 = vmatprep.subr.bf16.mxu0 0
        %2049 = vmatpush1.bf16.msra.mxu0 0
        %2050 = vmatprep.subr.bf16.mxu0 0
        %2051 = vmatpush1.bf16.msra.mxu0 0
        %2052 = vmatprep.subr.bf16.mxu0 0
        %2053 = vmatpush1.bf16.msra.mxu0 0
        %2054 = vmatprep.subr.bf16.mxu0 0
        %2055 = vmatpush1.bf16.msra.mxu0 0
        %2056 = vmatprep.subr.bf16.mxu0 0
        %2057 = vmatpush1.bf16.msra.mxu0 0
        %2058 = vmatprep.subr.bf16.mxu0 0
        %2059 = vmatpush1.bf16.msra.mxu0 0
        %2060 = vmatprep.mubr.bf16.mxu0 0
        %2061 = vmatmul.mubr.bf16.gmra.mrb[0].mxu0 %v2005
        %v2062 = vpop.f32.mrb[0].mxu0
        %v2063 = vadd.f32 0.0, %v2062
        %v2064 = vpop.f32.mrb[0].mxu0
        %v2065 = vadd.f32 0.0, %v2064
        %v2066 = vpop.f32.mrb[0].mxu0
        %v2067 = vadd.f32 0.0, %v2066
        %v2068 = vpop.f32.mrb[0].mxu0
        %v2069 = vadd.f32 0.0, %v2068
        %2070 = vmatprep.mubr.bf16.mxu0 0
        %2071 = vmatmul.mubr.bf16.gmra.mrb[0].mxu0 %v2008
        %v2072 = vpop.f32.mrb[0].mxu0
        %v2073 = vadd.f32 0.0, %v2072
        %v2074 = vpop.f32.mrb[0].mxu0
        %v2075 = vadd.f32 0.0, %v2074
        %v2076 = vpop.f32.mrb[0].mxu0
        %v2077 = vadd.f32 0.0, %v2076
        %v2078 = vpop.f32.mrb[0].mxu0
        %v2079 = vadd.f32 0.0, %v2078
        %2080 = vmatprep.mubr.bf16.mxu0 0
        %2081 = vmatmul.mubr.bf16.gmra.mrb[0].mxu0 %v2011
        %v2082 = vpop.f32.mrb[0].mxu0
        %v2083 = vadd.f32 0.0, %v2082
        %v2084 = vpop.f32.mrb[0].mxu0
        %v2085 = vadd.f32 0.0, %v2084
        %v2086 = vpop.f32.mrb[0].mxu0
        %v2087 = vadd.f32 0.0, %v2086
        %v2088 = vpop.f32.mrb[0].mxu0
        %v2089 = vadd.f32 0.0, %v2088
        %2090 = vmatprep.mubr.bf16.mxu0 0
        %2091 = vmatmul.mubr.bf16.gmra.mrb[0].mxu0 %v2014
        %v2092 = vpop.f32.mrb[0].mxu0
        %v2093 = vadd.f32 0.0, %v2092
        %v2094 = vpop.f32.mrb[0].mxu0
        %v2095 = vadd.f32 0.0, %v2094
        %v2096 = vpop.f32.mrb[0].mxu0
        %v2097 = vadd.f32 0.0, %v2096
        %v2098 = vpop.f32.mrb[0].mxu0
        %v2099 = vadd.f32 0.0, %v2098
        %2100 = vmatprep.mubr.bf16.mxu0 0
        %2101 = vmatmul.mubr.bf16.gmra.mrb[0].mxu0 %v2017
        %v2102 = vpop.f32.mrb[0].mxu0
        %v2103 = vadd.f32 0.0, %v2102
        %v2104 = vpop.f32.mrb[0].mxu0
        %v2105 = vadd.f32 0.0, %v2104
        %v2106 = vpop.f32.mrb[0].mxu0
        %v2107 = vadd.f32 0.0, %v2106
        %v2108 = vpop.f32.mrb[0].mxu0
        %v2109 = vadd.f32 0.0, %v2108
        %2110 = vmatprep.mubr.bf16.mxu0 0
        %2111 = vmatmul.mubr.bf16.gmra.mrb[0].mxu0 %v2020
        %v2112 = vpop.f32.mrb[0].mxu0
        %v2113 = vadd.f32 0.0, %v2112
        %v2114 = vpop.f32.mrb[0].mxu0
        %v2115 = vadd.f32 0.0, %v2114
        %v2116 = vpop.f32.mrb[0].mxu0
        %v2117 = vadd.f32 0.0, %v2116
        %v2118 = vpop.f32.mrb[0].mxu0
        %v2119 = vadd.f32 0.0, %v2118
        %2120 = vmatprep.mubr.bf16.mxu0 0
        %2121 = vmatmul.mubr.bf16.gmra.mrb[0].mxu0 %v2023
        %v2122 = vpop.f32.mrb[0].mxu0
        %v2123 = vadd.f32 0.0, %v2122
        %v2124 = vpop.f32.mrb[0].mxu0
        %v2125 = vadd.f32 0.0, %v2124
        %v2126 = vpop.f32.mrb[0].mxu0
        %v2127 = vadd.f32 0.0, %v2126
        %v2128 = vpop.f32.mrb[0].mxu0
        %v2129 = vadd.f32 0.0, %v2128
        %2130 = vmatprep.mubr.bf16.mxu0 0
        %2131 = vmatmul.mubr.bf16.gmra.mrb[0].mxu0 %v2026
        %v2132 = vpop.f32.mrb[0].mxu0
        %v2133 = vadd.f32 0.0, %v2132
        %v2134 = vpop.f32.mrb[0].mxu0
        %v2135 = vadd.f32 0.0, %v2134
        %v2136 = vpop.f32.mrb[0].mxu0
        %v2137 = vadd.f32 0.0, %v2136
        %v2138 = vpop.f32.mrb[0].mxu0
        %v2139 = vadd.f32 0.0, %v2138
        %2140 = vdwg.mxu0
        %s2142 = sor.u32 256, 1
        %2143 = vrot.lane.b32.xlu0 %v2063, %s2142
        %v2144 = vpop.permute.xlu0 %2143
        %s2146 = sor.u32 256, 1
        %2147 = vrot.lane.b32.xlu0 %v2065, %s2146
        %v2148 = vpop.permute.xlu0 %2147
        %v2149 = vadd.s32 %v1854, 1
        %vm2150 = vcmp.lt.s32.totalorder %v1889, %v2149
        %v2151 = vsel %vm2150, %v2144, %v2148
        %v2152 = vsel %vm2150, %v2148, %v2144
        %s2154 = sor.u32 256, 9
        %2155 = vrot.lane.b32.xlu0 %v2067, %s2154
        %v2156 = vpop.permute.xlu0 %2155
        %s2158 = sor.u32 256, 9
        %2159 = vrot.lane.b32.xlu0 %v2069, %s2158
        %v2160 = vpop.permute.xlu0 %2159
        %v2161 = vadd.s32 %v1854, 9
        %vm2162 = vcmp.lt.s32.totalorder %v1889, %v2161
        %v2163 = vsel %vm2162, %v2156, %v2160
        %v2164 = vsel %vm2162, %v2160, %v2156
        %s2166 = sor.u32 256, 17
        %2167 = vrot.lane.b32.xlu0 %v2073, %s2166
        %v2168 = vpop.permute.xlu0 %2167
        %s2170 = sor.u32 256, 17
        %2171 = vrot.lane.b32.xlu0 %v2075, %s2170
        %v2172 = vpop.permute.xlu0 %2171
        %v2173 = vadd.s32 %v1854, 17
        %vm2174 = vcmp.lt.s32.totalorder %v1889, %v2173
        %v2175 = vsel %vm2174, %v2168, %v2172
        %v2176 = vsel %vm2174, %v2172, %v2168
        %s2178 = sor.u32 256, 25
        %2179 = vrot.lane.b32.xlu0 %v2077, %s2178
        %v2180 = vpop.permute.xlu0 %2179
        %s2182 = sor.u32 256, 25
        %2183 = vrot.lane.b32.xlu0 %v2079, %s2182
        %v2184 = vpop.permute.xlu0 %2183
        %v2185 = vadd.s32 %v1854, 25
        %vm2186 = vcmp.lt.s32.totalorder %v1889, %v2185
        %v2187 = vsel %vm2186, %v2180, %v2184
        %v2188 = vsel %vm2186, %v2184, %v2180
        %s2190 = sor.u32 256, 33
        %2191 = vrot.lane.b32.xlu0 %v2083, %s2190
        %v2192 = vpop.permute.xlu0 %2191
        %s2194 = sor.u32 256, 33
        %2195 = vrot.lane.b32.xlu0 %v2085, %s2194
        %v2196 = vpop.permute.xlu0 %2195
        %v2197 = vadd.s32 %v1854, 33
        %vm2198 = vcmp.lt.s32.totalorder %v1889, %v2197
        %v2199 = vsel %vm2198, %v2192, %v2196
        %v2200 = vsel %vm2198, %v2196, %v2192
        %s2202 = sor.u32 256, 41
        %2203 = vrot.lane.b32.xlu0 %v2087, %s2202
        %v2204 = vpop.permute.xlu0 %2203
        %s2206 = sor.u32 256, 41
        %2207 = vrot.lane.b32.xlu0 %v2089, %s2206
        %v2208 = vpop.permute.xlu0 %2207
        %v2209 = vadd.s32 %v1854, 41
        %vm2210 = vcmp.lt.s32.totalorder %v1889, %v2209
        %v2211 = vsel %vm2210, %v2204, %v2208
        %v2212 = vsel %vm2210, %v2208, %v2204
        %s2214 = sor.u32 256, 49
        %2215 = vrot.lane.b32.xlu0 %v2093, %s2214
        %v2216 = vpop.permute.xlu0 %2215
        %s2218 = sor.u32 256, 49
        %2219 = vrot.lane.b32.xlu0 %v2095, %s2218
        %v2220 = vpop.permute.xlu0 %2219
        %v2221 = vadd.s32 %v1854, 49
        %vm2222 = vcmp.lt.s32.totalorder %v1889, %v2221
        %v2223 = vsel %vm2222, %v2216, %v2220
        %v2224 = vsel %vm2222, %v2220, %v2216
        %s2226 = sor.u32 256, 57
        %2227 = vrot.lane.b32.xlu0 %v2097, %s2226
        %v2228 = vpop.permute.xlu0 %2227
        %s2230 = sor.u32 256, 57
        %2231 = vrot.lane.b32.xlu0 %v2099, %s2230
        %v2232 = vpop.permute.xlu0 %2231
        %v2233 = vadd.s32 %v1854, 57
        %vm2234 = vcmp.lt.s32.totalorder %v1889, %v2233
        %v2235 = vsel %vm2234, %v2228, %v2232
        %v2236 = vsel %vm2234, %v2232, %v2228
        %s2238 = sor.u32 256, 65
        %2239 = vrot.lane.b32.xlu0 %v2103, %s2238
        %v2240 = vpop.permute.xlu0 %2239
        %s2242 = sor.u32 256, 65
        %2243 = vrot.lane.b32.xlu0 %v2105, %s2242
        %v2244 = vpop.permute.xlu0 %2243
        %v2245 = vadd.s32 %v1854, 65
        %vm2246 = vcmp.lt.s32.totalorder %v1889, %v2245
        %v2247 = vsel %vm2246, %v2240, %v2244
        %v2248 = vsel %vm2246, %v2244, %v2240
        %s2250 = sor.u32 256, 73
        %2251 = vrot.lane.b32.xlu0 %v2107, %s2250
        %v2252 = vpop.permute.xlu0 %2251
        %s2254 = sor.u32 256, 73
        %2255 = vrot.lane.b32.xlu0 %v2109, %s2254
        %v2256 = vpop.permute.xlu0 %2255
        %v2257 = vadd.s32 %v1854, 73
        %vm2258 = vcmp.lt.s32.totalorder %v1889, %v2257
        %v2259 = vsel %vm2258, %v2252, %v2256
        %v2260 = vsel %vm2258, %v2256, %v2252
        %s2262 = sor.u32 256, 81
        %2263 = vrot.lane.b32.xlu0 %v2113, %s2262
        %v2264 = vpop.permute.xlu0 %2263
        %s2266 = sor.u32 256, 81
        %2267 = vrot.lane.b32.xlu0 %v2115, %s2266
        %v2268 = vpop.permute.xlu0 %2267
        %v2269 = vadd.s32 %v1854, 81
        %vm2270 = vcmp.lt.s32.totalorder %v1889, %v2269
        %v2271 = vsel %vm2270, %v2264, %v2268
        %v2272 = vsel %vm2270, %v2268, %v2264
        %s2274 = sor.u32 256, 89
        %2275 = vrot.lane.b32.xlu0 %v2117, %s2274
        %v2276 = vpop.permute.xlu0 %2275
        %s2278 = sor.u32 256, 89
        %2279 = vrot.lane.b32.xlu0 %v2119, %s2278
        %v2280 = vpop.permute.xlu0 %2279
        %v2281 = vadd.s32 %v1854, 89
        %vm2282 = vcmp.lt.s32.totalorder %v1889, %v2281
        %v2283 = vsel %vm2282, %v2276, %v2280
        %v2284 = vsel %vm2282, %v2280, %v2276
        %s2286 = sor.u32 256, 97
        %2287 = vrot.lane.b32.xlu0 %v2123, %s2286
        %v2288 = vpop.permute.xlu0 %2287
        %s2290 = sor.u32 256, 97
        %2291 = vrot.lane.b32.xlu0 %v2125, %s2290
        %v2292 = vpop.permute.xlu0 %2291
        %v2293 = vadd.s32 %v1854, 97
        %vm2294 = vcmp.lt.s32.totalorder %v1889, %v2293
        %v2295 = vsel %vm2294, %v2288, %v2292
        %v2296 = vsel %vm2294, %v2292, %v2288
        %s2298 = sor.u32 256, 105
        %2299 = vrot.lane.b32.xlu0 %v2127, %s2298
        %v2300 = vpop.permute.xlu0 %2299
        %s2302 = sor.u32 256, 105
        %2303 = vrot.lane.b32.xlu0 %v2129, %s2302
        %v2304 = vpop.permute.xlu0 %2303
        %v2305 = vadd.s32 %v1854, 105
        %vm2306 = vcmp.lt.s32.totalorder %v1889, %v2305
        %v2307 = vsel %vm2306, %v2300, %v2304
        %v2308 = vsel %vm2306, %v2304, %v2300
        %s2310 = sor.u32 256, 113
        %2311 = vrot.lane.b32.xlu0 %v2133, %s2310
        %v2312 = vpop.permute.xlu0 %2311
        %s2314 = sor.u32 256, 113
        %2315 = vrot.lane.b32.xlu0 %v2135, %s2314
        %v2316 = vpop.permute.xlu0 %2315
        %v2317 = vadd.s32 %v1854, 113
        %vm2318 = vcmp.lt.s32.totalorder %v1889, %v2317
        %v2319 = vsel %vm2318, %v2312, %v2316
        %v2320 = vsel %vm2318, %v2316, %v2312
        %s2322 = sor.u32 256, 121
        %2323 = vrot.lane.b32.xlu0 %v2137, %s2322
        %v2324 = vpop.permute.xlu0 %2323
        %s2326 = sor.u32 256, 121
        %2327 = vrot.lane.b32.xlu0 %v2139, %s2326
        %v2328 = vpop.permute.xlu0 %2327
        %v2329 = vadd.s32 %v1854, 121
        %vm2330 = vcmp.lt.s32.totalorder %v1889, %v2329
        %v2331 = vsel %vm2330, %v2324, %v2328
        %v2332 = vsel %vm2330, %v2328, %v2324
        %2333 = vmatprep.subr.bf16.mxu0 %v1956
        %2334 = vmatpush1.bf16.msra.mxu0 %v1955
        %2335 = vmatprep.subr.bf16.mxu0 %v1958
        %2336 = vmatpush1.bf16.msra.mxu0 %v1957
        %2337 = vmatprep.subr.bf16.mxu0 %v1960
        %2338 = vmatpush1.bf16.msra.mxu0 %v1959
        %2339 = vmatprep.subr.bf16.mxu0 %v1962
        %2340 = vmatpush1.bf16.msra.mxu0 %v1961
        %2341 = vmatprep.subr.bf16.mxu0 0
        %2342 = vmatpush1.bf16.msra.mxu0 0
        %2343 = vmatprep.subr.bf16.mxu0 0
        %2344 = vmatpush1.bf16.msra.mxu0 0
        %2345 = vmatprep.subr.bf16.mxu0 0
        %2346 = vmatpush1.bf16.msra.mxu0 0
        %2347 = vmatprep.subr.bf16.mxu0 0
        %2348 = vmatpush1.bf16.msra.mxu0 0
        %2349 = vmatprep.subr.bf16.mxu0 0
        %2350 = vmatpush1.bf16.msra.mxu0 0
        %2351 = vmatprep.subr.bf16.mxu0 0
        %2352 = vmatpush1.bf16.msra.mxu0 0
        %2353 = vmatprep.subr.bf16.mxu0 0
        %2354 = vmatpush1.bf16.msra.mxu0 0
        %2355 = vmatprep.subr.bf16.mxu0 0
        %2356 = vmatpush1.bf16.msra.mxu0 0
        %2357 = vmatprep.subr.bf16.mxu0 0
        %2358 = vmatpush1.bf16.msra.mxu0 0
        %2359 = vmatprep.subr.bf16.mxu0 0
        %2360 = vmatpush1.bf16.msra.mxu0 0
        %2361 = vmatprep.subr.bf16.mxu0 0
        %2362 = vmatpush1.bf16.msra.mxu0 0
        %2363 = vmatprep.subr.bf16.mxu0 0
        %2364 = vmatpush1.bf16.msra.mxu0 0
        %2365 = vmatprep.mubr.bf16.mxu0 0
        %2366 = vmatmul.mubr.bf16.gmra.mrb[0].mxu0 %v2005
        %v2367 = vpop.f32.mrb[0].mxu0
        %v2368 = vadd.f32 %v2152, %v2367
        %v2369 = vpop.f32.mrb[0].mxu0
        %v2370 = vadd.f32 %v2151, %v2369
        %v2371 = vpop.f32.mrb[0].mxu0
        %v2372 = vadd.f32 %v2164, %v2371
        %v2373 = vpop.f32.mrb[0].mxu0
        %v2374 = vadd.f32 %v2163, %v2373
        %2375 = vmatprep.mubr.bf16.mxu0 0
        %2376 = vmatmul.mubr.bf16.gmra.mrb[0].mxu0 %v2008
        %v2377 = vpop.f32.mrb[0].mxu0
        %v2378 = vadd.f32 %v2176, %v2377
        %v2379 = vpop.f32.mrb[0].mxu0
        %v2380 = vadd.f32 %v2175, %v2379
        %v2381 = vpop.f32.mrb[0].mxu0
        %v2382 = vadd.f32 %v2188, %v2381
        %v2383 = vpop.f32.mrb[0].mxu0
        %v2384 = vadd.f32 %v2187, %v2383
        %2385 = vmatprep.mubr.bf16.mxu0 0
        %2386 = vmatmul.mubr.bf16.gmra.mrb[0].mxu0 %v2011
        %v2387 = vpop.f32.mrb[0].mxu0
        %v2388 = vadd.f32 %v2200, %v2387
        %v2389 = vpop.f32.mrb[0].mxu0
        %v2390 = vadd.f32 %v2199, %v2389
        %v2391 = vpop.f32.mrb[0].mxu0
        %v2392 = vadd.f32 %v2212, %v2391
        %v2393 = vpop.f32.mrb[0].mxu0
        %v2394 = vadd.f32 %v2211, %v2393
        %2395 = vmatprep.mubr.bf16.mxu0 0
        %2396 = vmatmul.mubr.bf16.gmra.mrb[0].mxu0 %v2014
        %v2397 = vpop.f32.mrb[0].mxu0
        %v2398 = vadd.f32 %v2224, %v2397
        %v2399 = vpop.f32.mrb[0].mxu0
        %v2400 = vadd.f32 %v2223, %v2399
        %v2401 = vpop.f32.mrb[0].mxu0
        %v2402 = vadd.f32 %v2236, %v2401
        %v2403 = vpop.f32.mrb[0].mxu0
        %v2404 = vadd.f32 %v2235, %v2403
        %2405 = vmatprep.mubr.bf16.mxu0 0
        %2406 = vmatmul.mubr.bf16.gmra.mrb[0].mxu0 %v2017
        %v2407 = vpop.f32.mrb[0].mxu0
        %v2408 = vadd.f32 %v2248, %v2407
        %v2409 = vpop.f32.mrb[0].mxu0
        %v2410 = vadd.f32 %v2247, %v2409
        %v2411 = vpop.f32.mrb[0].mxu0
        %v2412 = vadd.f32 %v2260, %v2411
        %v2413 = vpop.f32.mrb[0].mxu0
        %v2414 = vadd.f32 %v2259, %v2413
        %2415 = vmatprep.mubr.bf16.mxu0 0
        %2416 = vmatmul.mubr.bf16.gmra.mrb[0].mxu0 %v2020
        %v2417 = vpop.f32.mrb[0].mxu0
        %v2418 = vadd.f32 %v2272, %v2417
        %v2419 = vpop.f32.mrb[0].mxu0
        %v2420 = vadd.f32 %v2271, %v2419
        %v2421 = vpop.f32.mrb[0].mxu0
        %v2422 = vadd.f32 %v2284, %v2421
        %v2423 = vpop.f32.mrb[0].mxu0
        %v2424 = vadd.f32 %v2283, %v2423
        %2425 = vmatprep.mubr.bf16.mxu0 0
        %2426 = vmatmul.mubr.bf16.gmra.mrb[0].mxu0 %v2023
        %v2427 = vpop.f32.mrb[0].mxu0
        %v2428 = vadd.f32 %v2296, %v2427
        %v2429 = vpop.f32.mrb[0].mxu0
        %v2430 = vadd.f32 %v2295, %v2429
        %v2431 = vpop.f32.mrb[0].mxu0
        %v2432 = vadd.f32 %v2308, %v2431
        %v2433 = vpop.f32.mrb[0].mxu0
        %v2434 = vadd.f32 %v2307, %v2433
        %2435 = vmatprep.mubr.bf16.mxu0 0
        %2436 = vmatmul.mubr.bf16.gmra.mrb[0].mxu0 %v2026
        %v2437 = vpop.f32.mrb[0].mxu0
        %v2438 = vadd.f32 %v2320, %v2437
        %v2439 = vpop.f32.mrb[0].mxu0
        %v2440 = vadd.f32 %v2319, %v2439
        %v2441 = vpop.f32.mrb[0].mxu0
        %v2442 = vadd.f32 %v2332, %v2441
        %v2443 = vpop.f32.mrb[0].mxu0
        %v2444 = vadd.f32 %v2331, %v2443
        %2445 = vdwg.mxu0
        %v2446 = vadd.f32 %v2368, %v1923
        %v2447 = vadd.f32 %v2370, %v1924
        %v2448 = vadd.f32 %v2372, %v1925
        %v2449 = vadd.f32 %v2374, %v1926
        %v2450 = vadd.f32 %v2378, %v1927
        %v2451 = vadd.f32 %v2380, %v1928
        %v2452 = vadd.f32 %v2382, %v1929
        %v2453 = vadd.f32 %v2384, %v1930
        %v2454 = vadd.f32 %v2388, %v1931
        %v2455 = vadd.f32 %v2390, %v1932
        %v2456 = vadd.f32 %v2392, %v1933
        %v2457 = vadd.f32 %v2394, %v1934
        %v2458 = vadd.f32 %v2398, %v1935
        %v2459 = vadd.f32 %v2400, %v1936
        %v2460 = vadd.f32 %v2402, %v1937
        %v2461 = vadd.f32 %v2404, %v1938
        %v2462 = vadd.f32 %v2408, %v1939
        %v2463 = vadd.f32 %v2410, %v1940
        %v2464 = vadd.f32 %v2412, %v1941
        %v2465 = vadd.f32 %v2414, %v1942
        %v2466 = vadd.f32 %v2418, %v1943
        %v2467 = vadd.f32 %v2420, %v1944
        %v2468 = vadd.f32 %v2422, %v1945
        %v2469 = vadd.f32 %v2424, %v1946
        %v2470 = vadd.f32 %v2428, %v1947
        %v2471 = vadd.f32 %v2430, %v1948
        %v2472 = vadd.f32 %v2432, %v1949
        %v2473 = vadd.f32 %v2434, %v1950
        %v2474 = vadd.f32 %v2438, %v1951
        %v2475 = vadd.f32 %v2440, %v1952
        %v2476 = vadd.f32 %v2442, %v1953
        %v2477 = vadd.f32 %v2444, %v1954
        %v2478 = vmax.f32 %v2446, %v2447
        %2479 = vmax.xlane.f32.xlu0 %v2478
        %v2480 = vpop.xlane.xlu0 %2479
        %v2481 = vmax.f32 %v2448, %v2449
        %2482 = vmax.xlane.f32.xlu0 %v2481
        %v2483 = vpop.xlane.xlu0 %2482
        %v2484 = vmax.f32 %v2450, %v2451
        %2485 = vmax.xlane.f32.xlu0 %v2484
        %v2486 = vpop.xlane.xlu0 %2485
        %v2487 = vmax.f32 %v2452, %v2453
        %2488 = vmax.xlane.f32.xlu0 %v2487
        %v2489 = vpop.xlane.xlu0 %2488
        %v2490 = vmax.f32 %v2454, %v2455
        %2491 = vmax.xlane.f32.xlu0 %v2490
        %v2492 = vpop.xlane.xlu0 %2491
        %v2493 = vmax.f32 %v2456, %v2457
        %2494 = vmax.xlane.f32.xlu0 %v2493
        %v2495 = vpop.xlane.xlu0 %2494
        %v2496 = vmax.f32 %v2458, %v2459
        %2497 = vmax.xlane.f32.xlu0 %v2496
        %v2498 = vpop.xlane.xlu0 %2497
        %v2499 = vmax.f32 %v2460, %v2461
        %2500 = vmax.xlane.f32.xlu0 %v2499
        %v2501 = vpop.xlane.xlu0 %2500
        %v2502 = vmax.f32 %v2462, %v2463
        %2503 = vmax.xlane.f32.xlu0 %v2502
        %v2504 = vpop.xlane.xlu0 %2503
        %v2505 = vmax.f32 %v2464, %v2465
        %2506 = vmax.xlane.f32.xlu0 %v2505
        %v2507 = vpop.xlane.xlu0 %2506
        %v2508 = vmax.f32 %v2466, %v2467
        %2509 = vmax.xlane.f32.xlu0 %v2508
        %v2510 = vpop.xlane.xlu0 %2509
        %v2511 = vmax.f32 %v2468, %v2469
        %2512 = vmax.xlane.f32.xlu0 %v2511
        %v2513 = vpop.xlane.xlu0 %2512
        %v2514 = vmax.f32 %v2470, %v2471
        %2515 = vmax.xlane.f32.xlu0 %v2514
        %v2516 = vpop.xlane.xlu0 %2515
        %v2517 = vmax.f32 %v2472, %v2473
        %2518 = vmax.xlane.f32.xlu0 %v2517
        %v2519 = vpop.xlane.xlu0 %2518
        %v2520 = vmax.f32 %v2474, %v2475
        %2521 = vmax.xlane.f32.xlu0 %v2520
        %v2522 = vpop.xlane.xlu0 %2521
        %v2523 = vmax.f32 %v2476, %v2477
        %2524 = vmax.xlane.f32.xlu0 %v2523
        %v2525 = vpop.xlane.xlu0 %2524
        %v2526 = vsub.f32 %v2446, %v2480
        %v2527 = vsub.f32 %v2447, %v2480
        %v2528 = vsub.f32 %v2448, %v2483
        %v2529 = vsub.f32 %v2449, %v2483
        %v2530 = vsub.f32 %v2450, %v2486
        %v2531 = vsub.f32 %v2451, %v2486
        %v2532 = vsub.f32 %v2452, %v2489
        %v2533 = vsub.f32 %v2453, %v2489
        %v2534 = vsub.f32 %v2454, %v2492
        %v2535 = vsub.f32 %v2455, %v2492
        %v2536 = vsub.f32 %v2456, %v2495
        %v2537 = vsub.f32 %v2457, %v2495
        %v2538 = vsub.f32 %v2458, %v2498
        %v2539 = vsub.f32 %v2459, %v2498
        %v2540 = vsub.f32 %v2460, %v2501
        %v2541 = vsub.f32 %v2461, %v2501
        %v2542 = vsub.f32 %v2462, %v2504
        %v2543 = vsub.f32 %v2463, %v2504
        %v2544 = vsub.f32 %v2464, %v2507
        %v2545 = vsub.f32 %v2465, %v2507
        %v2546 = vsub.f32 %v2466, %v2510
        %v2547 = vsub.f32 %v2467, %v2510
        %v2548 = vsub.f32 %v2468, %v2513
        %v2549 = vsub.f32 %v2469, %v2513
        %v2550 = vsub.f32 %v2470, %v2516
        %v2551 = vsub.f32 %v2471, %v2516
        %v2552 = vsub.f32 %v2472, %v2519
        %v2553 = vsub.f32 %v2473, %v2519
        %v2554 = vsub.f32 %v2474, %v2522
        %v2555 = vsub.f32 %v2475, %v2522
        %v2556 = vsub.f32 %v2476, %v2525
        %v2557 = vsub.f32 %v2477, %v2525
        %v2558 = vmul.f32 %v2526, 1.442695
        %v2559 = vpow.pop %v2558
        %v2560 = vmul.f32 %v2527, 1.442695
        %v2561 = vpow.pop %v2560
        %v2562 = vmul.f32 %v2528, 1.442695
        %v2563 = vpow.pop %v2562
        %v2564 = vmul.f32 %v2529, 1.442695
        %v2565 = vpow.pop %v2564
        %v2566 = vmul.f32 %v2530, 1.442695
        %v2567 = vpow.pop %v2566
        %v2568 = vmul.f32 %v2531, 1.442695
        %v2569 = vpow.pop %v2568
        %v2570 = vmul.f32 %v2532, 1.442695
        %v2571 = vpow.pop %v2570
        %v2572 = vmul.f32 %v2533, 1.442695
        %v2573 = vpow.pop %v2572
        %v2574 = vmul.f32 %v2534, 1.442695
        %v2575 = vpow.pop %v2574
        %v2576 = vmul.f32 %v2535, 1.442695
        %v2577 = vpow.pop %v2576
        %v2578 = vmul.f32 %v2536, 1.442695
        %v2579 = vpow.pop %v2578
        %v2580 = vmul.f32 %v2537, 1.442695
        %v2581 = vpow.pop %v2580
        %v2582 = vmul.f32 %v2538, 1.442695
        %v2583 = vpow.pop %v2582
        %v2584 = vmul.f32 %v2539, 1.442695
        %v2585 = vpow.pop %v2584
        %v2586 = vmul.f32 %v2540, 1.442695
        %v2587 = vpow.pop %v2586
        %v2588 = vmul.f32 %v2541, 1.442695
        %v2589 = vpow.pop %v2588
        %v2590 = vmul.f32 %v2542, 1.442695
        %v2591 = vpow.pop %v2590
        %v2592 = vmul.f32 %v2543, 1.442695
        %v2593 = vpow.pop %v2592
        %v2594 = vmul.f32 %v2544, 1.442695
        %v2595 = vpow.pop %v2594
        %v2596 = vmul.f32 %v2545, 1.442695
        %v2597 = vpow.pop %v2596
        %v2598 = vmul.f32 %v2546, 1.442695
        %v2599 = vpow.pop %v2598
        %v2600 = vmul.f32 %v2547, 1.442695
        %v2601 = vpow.pop %v2600
        %v2602 = vmul.f32 %v2548, 1.442695
        %v2603 = vpow.pop %v2602
        %v2604 = vmul.f32 %v2549, 1.442695
        %v2605 = vpow.pop %v2604
        %v2606 = vmul.f32 %v2550, 1.442695
        %v2607 = vpow.pop %v2606
        %v2608 = vmul.f32 %v2551, 1.442695
        %v2609 = vpow.pop %v2608
        %v2610 = vmul.f32 %v2552, 1.442695
        %v2611 = vpow.pop %v2610
        %v2612 = vmul.f32 %v2553, 1.442695
        %v2613 = vpow.pop %v2612
        %v2614 = vmul.f32 %v2554, 1.442695
        %v2615 = vpow.pop %v2614
        %v2616 = vmul.f32 %v2555, 1.442695
        %v2617 = vpow.pop %v2616
        %v2618 = vmul.f32 %v2556, 1.442695
        %v2619 = vpow.pop %v2618
        %v2620 = vmul.f32 %v2557, 1.442695
        %v2621 = vpow.pop %v2620
        %v2622 = vadd.f32 %v2559, %v2561
        %2623 = vadd.xlane.f32.xlu0 %v2622
        %v2624 = vpop.xlane.xlu0 %2623
        %v2625 = vadd.f32 %v2563, %v2565
        %2626 = vadd.xlane.f32.xlu0 %v2625
        %v2627 = vpop.xlane.xlu0 %2626
        %v2628 = vadd.f32 %v2567, %v2569
        %2629 = vadd.xlane.f32.xlu0 %v2628
        %v2630 = vpop.xlane.xlu0 %2629
        %v2631 = vadd.f32 %v2571, %v2573
        %2632 = vadd.xlane.f32.xlu0 %v2631
        %v2633 = vpop.xlane.xlu0 %2632
        %v2634 = vadd.f32 %v2575, %v2577
        %2635 = vadd.xlane.f32.xlu0 %v2634
        %v2636 = vpop.xlane.xlu0 %2635
        %v2637 = vadd.f32 %v2579, %v2581
        %2638 = vadd.xlane.f32.xlu0 %v2637
        %v2639 = vpop.xlane.xlu0 %2638
        %v2640 = vadd.f32 %v2583, %v2585
        %2641 = vadd.xlane.f32.xlu0 %v2640
        %v2642 = vpop.xlane.xlu0 %2641
        %v2643 = vadd.f32 %v2587, %v2589
        %2644 = vadd.xlane.f32.xlu0 %v2643
        %v2645 = vpop.xlane.xlu0 %2644
        %v2646 = vadd.f32 %v2591, %v2593
        %2647 = vadd.xlane.f32.xlu0 %v2646
        %v2648 = vpop.xlane.xlu0 %2647
        %v2649 = vadd.f32 %v2595, %v2597
        %2650 = vadd.xlane.f32.xlu0 %v2649
        %v2651 = vpop.xlane.xlu0 %2650
        %v2652 = vadd.f32 %v2599, %v2601
        %2653 = vadd.xlane.f32.xlu0 %v2652
        %v2654 = vpop.xlane.xlu0 %2653
        %v2655 = vadd.f32 %v2603, %v2605
        %2656 = vadd.xlane.f32.xlu0 %v2655
        %v2657 = vpop.xlane.xlu0 %2656
        %v2658 = vadd.f32 %v2607, %v2609
        %2659 = vadd.xlane.f32.xlu0 %v2658
        %v2660 = vpop.xlane.xlu0 %2659
        %v2661 = vadd.f32 %v2611, %v2613
        %2662 = vadd.xlane.f32.xlu0 %v2661
        %v2663 = vpop.xlane.xlu0 %2662
        %v2664 = vadd.f32 %v2615, %v2617
        %2665 = vadd.xlane.f32.xlu0 %v2664
        %v2666 = vpop.xlane.xlu0 %2665
        %v2667 = vadd.f32 %v2619, %v2621
        %2668 = vadd.xlane.f32.xlu0 %v2667
        %v2669 = vpop.xlane.xlu0 %2668
        %v2670 = vpack.c.bf16 %v2563, %v2559
        %v2671 = vpack.c.bf16 %v2565, %v2561
        %v2672 = vpack.c.bf16 %v2571, %v2567
        %v2673 = vpack.c.bf16 %v2573, %v2569
        %v2674 = vpack.c.bf16 %v2579, %v2575
        %v2675 = vpack.c.bf16 %v2581, %v2577
        %v2676 = vpack.c.bf16 %v2587, %v2583
        %v2677 = vpack.c.bf16 %v2589, %v2585
        %v2678 = vpack.c.bf16 %v2595, %v2591
        %v2679 = vpack.c.bf16 %v2597, %v2593
        %v2680 = vpack.c.bf16 %v2603, %v2599
        %v2681 = vpack.c.bf16 %v2605, %v2601
        %v2682 = vpack.c.bf16 %v2611, %v2607
        %v2683 = vpack.c.bf16 %v2613, %v2609
        %v2684 = vpack.c.bf16 %v2619, %v2615
        %v2685 = vpack.c.bf16 %v2621, %v2617
        %v2686 = vld [vmem:[#allocation3] sm:$0xff]
        %v2687 = vld [vmem:[#allocation3 + $0x8] sm:$0xff]
        %v2688 = vld [vmem:[#allocation3 + $0x10] sm:$0xff]
        %v2689 = vld [vmem:[#allocation3 + $0x18] sm:$0xff]
        %v2690 = vld [vmem:[#allocation3 + $0x20] sm:$0xff]
        %v2691 = vld [vmem:[#allocation3 + $0x28] sm:$0xff]
        %v2692 = vld [vmem:[#allocation3 + $0x30] sm:$0xff]
        %v2693 = vld [vmem:[#allocation3 + $0x38] sm:$0xff]
        %v2694 = vld [vmem:[#allocation3 + $0x40] sm:$0xff]
        %v2695 = vld [vmem:[#allocation3 + $0x48] sm:$0xff]
        %v2696 = vld [vmem:[#allocation3 + $0x50] sm:$0xff]
        %v2697 = vld [vmem:[#allocation3 + $0x58] sm:$0xff]
        %v2698 = vld [vmem:[#allocation3 + $0x60] sm:$0xff]
        %v2699 = vld [vmem:[#allocation3 + $0x68] sm:$0xff]
        %v2700 = vld [vmem:[#allocation3 + $0x70] sm:$0xff]
        %v2701 = vld [vmem:[#allocation3 + $0x78] sm:$0xff]
        %2702 = vmatprep.subr.bf16.mxu0 0
        %2703 = vmatpush1.bf16.msra.mxu0 %v2686
        %2704 = vmatprep.subr.bf16.mxu0 0
        %2705 = vmatpush1.bf16.msra.mxu0 %v2687
        %2706 = vmatprep.subr.bf16.mxu0 0
        %2707 = vmatpush1.bf16.msra.mxu0 %v2688
        %2708 = vmatprep.subr.bf16.mxu0 0
        %2709 = vmatpush1.bf16.msra.mxu0 %v2689
        %2710 = vmatprep.subr.bf16.mxu0 0
        %2711 = vmatpush1.bf16.msra.mxu0 %v2690
        %2712 = vmatprep.subr.bf16.mxu0 0
        %2713 = vmatpush1.bf16.msra.mxu0 %v2691
        %2714 = vmatprep.subr.bf16.mxu0 0
        %2715 = vmatpush1.bf16.msra.mxu0 %v2692
        %2716 = vmatprep.subr.bf16.mxu0 0
        %2717 = vmatpush1.bf16.msra.mxu0 %v2693
        %2718 = vmatprep.subr.bf16.mxu0 0
        %2719 = vmatpush1.bf16.msra.mxu0 %v2694
        %2720 = vmatprep.subr.bf16.mxu0 0
        %2721 = vmatpush1.bf16.msra.mxu0 %v2695
        %2722 = vmatprep.subr.bf16.mxu0 0
        %2723 = vmatpush1.bf16.msra.mxu0 %v2696
        %2724 = vmatprep.subr.bf16.mxu0 0
        %2725 = vmatpush1.bf16.msra.mxu0 %v2697
        %2726 = vmatprep.subr.bf16.mxu0 0
        %2727 = vmatpush1.bf16.msra.mxu0 %v2698
        %2728 = vmatprep.subr.bf16.mxu0 0
        %2729 = vmatpush1.bf16.msra.mxu0 %v2699
        %2730 = vmatprep.subr.bf16.mxu0 0
        %2731 = vmatpush1.bf16.msra.mxu0 %v2700
        %2732 = vmatprep.subr.bf16.mxu0 0
        %2733 = vmatpush1.bf16.msra.mxu0 %v2701
        %2734 = vmatprep.mubr.bf16.mxu0 %v2671
        %2735 = vmatmul.mubr.bf16.gmra.mrb[0].mxu0 %v2670
        %v2736 = vpop.f32.mrb[0].mxu0
        %v2737 = vadd.f32 0.0, %v2736
        %v2738 = vpop.f32.mrb[0].mxu0
        %v2739 = vpop.f32.mrb[0].mxu0
        %v2740 = vadd.f32 0.0, %v2739
        %v2741 = vpop.f32.mrb[0].mxu0
        %2742 = vmatprep.mubr.bf16.mxu0 %v2673
        %2743 = vmatmul.mubr.bf16.gmra.mrb[0].mxu0 %v2672
        %v2744 = vpop.f32.mrb[0].mxu0
        %v2745 = vadd.f32 0.0, %v2744
        %v2746 = vpop.f32.mrb[0].mxu0
        %v2747 = vpop.f32.mrb[0].mxu0
        %v2748 = vadd.f32 0.0, %v2747
        %v2749 = vpop.f32.mrb[0].mxu0
        %2750 = vmatprep.mubr.bf16.mxu0 %v2675
        %2751 = vmatmul.mubr.bf16.gmra.mrb[0].mxu0 %v2674
        %v2752 = vpop.f32.mrb[0].mxu0
        %v2753 = vadd.f32 0.0, %v2752
        %v2754 = vpop.f32.mrb[0].mxu0
        %v2755 = vpop.f32.mrb[0].mxu0
        %v2756 = vadd.f32 0.0, %v2755
        %v2757 = vpop.f32.mrb[0].mxu0
        %2758 = vmatprep.mubr.bf16.mxu0 %v2677
        %2759 = vmatmul.mubr.bf16.gmra.mrb[0].mxu0 %v2676
        %v2760 = vpop.f32.mrb[0].mxu0
        %v2761 = vadd.f32 0.0, %v2760
        %v2762 = vpop.f32.mrb[0].mxu0
        %v2763 = vpop.f32.mrb[0].mxu0
        %v2764 = vadd.f32 0.0, %v2763
        %v2765 = vpop.f32.mrb[0].mxu0
        %2766 = vmatprep.mubr.bf16.mxu0 %v2679
        %2767 = vmatmul.mubr.bf16.gmra.mrb[0].mxu0 %v2678
        %v2768 = vpop.f32.mrb[0].mxu0
        %v2769 = vadd.f32 0.0, %v2768
        %v2770 = vpop.f32.mrb[0].mxu0
        %v2771 = vpop.f32.mrb[0].mxu0
        %v2772 = vadd.f32 0.0, %v2771
        %v2773 = vpop.f32.mrb[0].mxu0
        %2774 = vmatprep.mubr.bf16.mxu0 %v2681
        %2775 = vmatmul.mubr.bf16.gmra.mrb[0].mxu0 %v2680
        %v2776 = vpop.f32.mrb[0].mxu0
        %v2777 = vadd.f32 0.0, %v2776
        %v2778 = vpop.f32.mrb[0].mxu0
        %v2779 = vpop.f32.mrb[0].mxu0
        %v2780 = vadd.f32 0.0, %v2779
        %v2781 = vpop.f32.mrb[0].mxu0
        %2782 = vmatprep.mubr.bf16.mxu0 %v2683
        %2783 = vmatmul.mubr.bf16.gmra.mrb[0].mxu0 %v2682
        %v2784 = vpop.f32.mrb[0].mxu0
        %v2785 = vadd.f32 0.0, %v2784
        %v2786 = vpop.f32.mrb[0].mxu0
        %v2787 = vpop.f32.mrb[0].mxu0
        %v2788 = vadd.f32 0.0, %v2787
        %v2789 = vpop.f32.mrb[0].mxu0
        %2790 = vmatprep.mubr.bf16.mxu0 %v2685
        %2791 = vmatmul.mubr.bf16.gmra.mrb[0].mxu0 %v2684
        %v2792 = vpop.f32.mrb[0].mxu0
        %v2793 = vadd.f32 0.0, %v2792
        %v2794 = vpop.f32.mrb[0].mxu0
        %v2795 = vpop.f32.mrb[0].mxu0
        %v2796 = vadd.f32 0.0, %v2795
        %v2797 = vpop.f32.mrb[0].mxu0
        %2798 = vdwg.mxu0
        %v2799 = vrcp.pop %v2624
        %v2800 = vrcp.pop %v2627
        %v2801 = vrcp.pop %v2630
        %v2802 = vrcp.pop %v2633
        %v2803 = vrcp.pop %v2636
        %v2804 = vrcp.pop %v2639
        %v2805 = vrcp.pop %v2642
        %v2806 = vrcp.pop %v2645
        %v2807 = vrcp.pop %v2648
        %v2808 = vrcp.pop %v2651
        %v2809 = vrcp.pop %v2654
        %v2810 = vrcp.pop %v2657
        %v2811 = vrcp.pop %v2660
        %v2812 = vrcp.pop %v2663
        %v2813 = vrcp.pop %v2666
        %v2814 = vrcp.pop %v2669
        %v2815 = vmul.f32 %v2737, %v2799
        %v2816 = vmul.f32 %v2740, %v2800
        %v2817 = vmul.f32 %v2745, %v2801
        %v2818 = vmul.f32 %v2748, %v2802
        %v2819 = vmul.f32 %v2753, %v2803
        %v2820 = vmul.f32 %v2756, %v2804
        %v2821 = vmul.f32 %v2761, %v2805
        %v2822 = vmul.f32 %v2764, %v2806
        %v2823 = vmul.f32 %v2769, %v2807
        %v2824 = vmul.f32 %v2772, %v2808
        %v2825 = vmul.f32 %v2777, %v2809
        %v2826 = vmul.f32 %v2780, %v2810
        %v2827 = vmul.f32 %v2785, %v2811
        %v2828 = vmul.f32 %v2788, %v2812
        %v2829 = vmul.f32 %v2793, %v2813
        %v2830 = vmul.f32 %v2796, %v2814
        %2831 = vst.msk [vmem:[%s564] sm:$0xff] %vm2003, %v2815
        %2832 = vst.msk [vmem:[%s564 + $0x8] sm:$0xff] %vm2003, %v2816
        %2833 = vst.msk [vmem:[%s564 + $0x10] sm:$0xff] %vm2003, %v2817
        %2834 = vst.msk [vmem:[%s564 + $0x18] sm:$0xff] %vm2003, %v2818
        %2835 = vst.msk [vmem:[%s564 + $0x20] sm:$0xff] %vm2003, %v2819
        %2836 = vst.msk [vmem:[%s564 + $0x28] sm:$0xff] %vm2003, %v2820
        %2837 = vst.msk [vmem:[%s564 + $0x30] sm:$0xff] %vm2003, %v2821
        %2838 = vst.msk [vmem:[%s564 + $0x38] sm:$0xff] %vm2003, %v2822
        %2839 = vst.msk [vmem:[%s564 + $0x40] sm:$0xff] %vm2003, %v2823
        %2840 = vst.msk [vmem:[%s564 + $0x48] sm:$0xff] %vm2003, %v2824
        %2841 = vst.msk [vmem:[%s564 + $0x50] sm:$0xff] %vm2003, %v2825
        %2842 = vst.msk [vmem:[%s564 + $0x58] sm:$0xff] %vm2003, %v2826
        %2843 = vst.msk [vmem:[%s564 + $0x60] sm:$0xff] %vm2003, %v2827
        %2844 = vst.msk [vmem:[%s564 + $0x68] sm:$0xff] %vm2003, %v2828
        %2845 = vst.msk [vmem:[%s564 + $0x70] sm:$0xff] %vm2003, %v2829
        %2846 = vst.msk [vmem:[%s564 + $0x78] sm:$0xff] %vm2003, %v2830
        %v2847 = vld [vmem:[#allocation2 + $0x40] sm:$0xff]
        %v2848 = vld [vmem:[#allocation2 + $0x48] sm:$0xff]
        %v2849 = vld [vmem:[#allocation2 + $0x50] sm:$0xff]
        %v2850 = vld [vmem:[#allocation2 + $0x58] sm:$0xff]
        %v2851 = vld [vmem:[#allocation2 + $0x60] sm:$0xff]
        %v2852 = vld [vmem:[#allocation2 + $0x68] sm:$0xff]
        %v2853 = vld [vmem:[#allocation2 + $0x70] sm:$0xff]
        %v2854 = vld [vmem:[#allocation2 + $0x78] sm:$0xff]
        %2863 = vrot.lane.b32.xlu0 %v1837, 64
        %v2864 = vpop.permute.xlu0 %2863
        %2865 = vrot.lane.b32.xlu0 %v1838, 64
        %v2866 = vpop.permute.xlu0 %2865
        %2867 = vrot.lane.b32.xlu0 %v1839, 64
        %v2868 = vpop.permute.xlu0 %2867
        %2869 = vrot.lane.b32.xlu0 %v1840, 64
        %v2870 = vpop.permute.xlu0 %2869
        %2871 = vrot.lane.b32.xlu0 %v1841, 64
        %v2872 = vpop.permute.xlu0 %2871
        %2873 = vrot.lane.b32.xlu0 %v1842, 64
        %v2874 = vpop.permute.xlu0 %2873
        %2875 = vrot.lane.b32.xlu0 %v1843, 64
        %v2876 = vpop.permute.xlu0 %2875
        %2877 = vrot.lane.b32.xlu0 %v1844, 64
        %v2878 = vpop.permute.xlu0 %2877
        %v2880 = vsel %vm2003, %v2864, 0
        %v2883 = vsel %vm2003, %v2866, 0
        %v2886 = vsel %vm2003, %v2868, 0
        %v2889 = vsel %vm2003, %v2870, 0
        %v2892 = vsel %vm2003, %v2872, 0
        %v2895 = vsel %vm2003, %v2874, 0
        %v2898 = vsel %vm2003, %v2876, 0
        %v2901 = vsel %vm2003, %v2878, 0
        %2903 = vmatprep.subr.bf16.mxu0 %v1988
        %2904 = vmatpush1.bf16.msra.mxu0 %v1987
        %2905 = vmatprep.subr.bf16.mxu0 %v1990
        %2906 = vmatpush1.bf16.msra.mxu0 %v1989
        %2907 = vmatprep.subr.bf16.mxu0 %v1992
        %2908 = vmatpush1.bf16.msra.mxu0 %v1991
        %2909 = vmatprep.subr.bf16.mxu0 %v1994
        %2910 = vmatpush1.bf16.msra.mxu0 %v1993
        %2911 = vmatprep.subr.bf16.mxu0 0
        %2912 = vmatpush1.bf16.msra.mxu0 0
        %2913 = vmatprep.subr.bf16.mxu0 0
        %2914 = vmatpush1.bf16.msra.mxu0 0
        %2915 = vmatprep.subr.bf16.mxu0 0
        %2916 = vmatpush1.bf16.msra.mxu0 0
        %2917 = vmatprep.subr.bf16.mxu0 0
        %2918 = vmatpush1.bf16.msra.mxu0 0
        %2919 = vmatprep.subr.bf16.mxu0 0
        %2920 = vmatpush1.bf16.msra.mxu0 0
        %2921 = vmatprep.subr.bf16.mxu0 0
        %2922 = vmatpush1.bf16.msra.mxu0 0
        %2923 = vmatprep.subr.bf16.mxu0 0
        %2924 = vmatpush1.bf16.msra.mxu0 0
        %2925 = vmatprep.subr.bf16.mxu0 0
        %2926 = vmatpush1.bf16.msra.mxu0 0
        %2927 = vmatprep.subr.bf16.mxu0 0
        %2928 = vmatpush1.bf16.msra.mxu0 0
        %2929 = vmatprep.subr.bf16.mxu0 0
        %2930 = vmatpush1.bf16.msra.mxu0 0
        %2931 = vmatprep.subr.bf16.mxu0 0
        %2932 = vmatpush1.bf16.msra.mxu0 0
        %2933 = vmatprep.subr.bf16.mxu0 0
        %2934 = vmatpush1.bf16.msra.mxu0 0
        %2935 = vmatprep.mubr.bf16.mxu0 0
        %2936 = vmatmul.mubr.bf16.gmra.mrb[0].mxu0 %v2880
        %v2937 = vpop.f32.mrb[0].mxu0
        %v2938 = vadd.f32 0.0, %v2937
        %v2939 = vpop.f32.mrb[0].mxu0
        %v2940 = vadd.f32 0.0, %v2939
        %v2941 = vpop.f32.mrb[0].mxu0
        %v2942 = vadd.f32 0.0, %v2941
        %v2943 = vpop.f32.mrb[0].mxu0
        %v2944 = vadd.f32 0.0, %v2943
        %2945 = vmatprep.mubr.bf16.mxu0 0
        %2946 = vmatmul.mubr.bf16.gmra.mrb[0].mxu0 %v2883
        %v2947 = vpop.f32.mrb[0].mxu0
        %v2948 = vadd.f32 0.0, %v2947
        %v2949 = vpop.f32.mrb[0].mxu0
        %v2950 = vadd.f32 0.0, %v2949
        %v2951 = vpop.f32.mrb[0].mxu0
        %v2952 = vadd.f32 0.0, %v2951
        %v2953 = vpop.f32.mrb[0].mxu0
        %v2954 = vadd.f32 0.0, %v2953
        %2955 = vmatprep.mubr.bf16.mxu0 0
        %2956 = vmatmul.mubr.bf16.gmra.mrb[0].mxu0 %v2886
        %v2957 = vpop.f32.mrb[0].mxu0
        %v2958 = vadd.f32 0.0, %v2957
        %v2959 = vpop.f32.mrb[0].mxu0
        %v2960 = vadd.f32 0.0, %v2959
        %v2961 = vpop.f32.mrb[0].mxu0
        %v2962 = vadd.f32 0.0, %v2961
        %v2963 = vpop.f32.mrb[0].mxu0
        %v2964 = vadd.f32 0.0, %v2963
        %2965 = vmatprep.mubr.bf16.mxu0 0
        %2966 = vmatmul.mubr.bf16.gmra.mrb[0].mxu0 %v2889
        %v2967 = vpop.f32.mrb[0].mxu0
        %v2968 = vadd.f32 0.0, %v2967
        %v2969 = vpop.f32.mrb[0].mxu0
        %v2970 = vadd.f32 0.0, %v2969
        %v2971 = vpop.f32.mrb[0].mxu0
        %v2972 = vadd.f32 0.0, %v2971
        %v2973 = vpop.f32.mrb[0].mxu0
        %v2974 = vadd.f32 0.0, %v2973
        %2975 = vmatprep.mubr.bf16.mxu0 0
        %2976 = vmatmul.mubr.bf16.gmra.mrb[0].mxu0 %v2892
        %v2977 = vpop.f32.mrb[0].mxu0
        %v2978 = vadd.f32 0.0, %v2977
        %v2979 = vpop.f32.mrb[0].mxu0
        %v2980 = vadd.f32 0.0, %v2979
        %v2981 = vpop.f32.mrb[0].mxu0
        %v2982 = vadd.f32 0.0, %v2981
        %v2983 = vpop.f32.mrb[0].mxu0
        %v2984 = vadd.f32 0.0, %v2983
        %2985 = vmatprep.mubr.bf16.mxu0 0
        %2986 = vmatmul.mubr.bf16.gmra.mrb[0].mxu0 %v2895
        %v2987 = vpop.f32.mrb[0].mxu0
        %v2988 = vadd.f32 0.0, %v2987
        %v2989 = vpop.f32.mrb[0].mxu0
        %v2990 = vadd.f32 0.0, %v2989
        %v2991 = vpop.f32.mrb[0].mxu0
        %v2992 = vadd.f32 0.0, %v2991
        %v2993 = vpop.f32.mrb[0].mxu0
        %v2994 = vadd.f32 0.0, %v2993
        %2995 = vmatprep.mubr.bf16.mxu0 0
        %2996 = vmatmul.mubr.bf16.gmra.mrb[0].mxu0 %v2898
        %v2997 = vpop.f32.mrb[0].mxu0
        %v2998 = vadd.f32 0.0, %v2997
        %v2999 = vpop.f32.mrb[0].mxu0
        %v3000 = vadd.f32 0.0, %v2999
        %v3001 = vpop.f32.mrb[0].mxu0
        %v3002 = vadd.f32 0.0, %v3001
        %v3003 = vpop.f32.mrb[0].mxu0
        %v3004 = vadd.f32 0.0, %v3003
        %3005 = vmatprep.mubr.bf16.mxu0 0
        %3006 = vmatmul.mubr.bf16.gmra.mrb[0].mxu0 %v2901
        %v3007 = vpop.f32.mrb[0].mxu0
        %v3008 = vadd.f32 0.0, %v3007
        %v3009 = vpop.f32.mrb[0].mxu0
        %v3010 = vadd.f32 0.0, %v3009
        %v3011 = vpop.f32.mrb[0].mxu0
        %v3012 = vadd.f32 0.0, %v3011
        %v3013 = vpop.f32.mrb[0].mxu0
        %v3014 = vadd.f32 0.0, %v3013
        %3015 = vdwg.mxu0
        %s3017 = sor.u32 256, 1
        %3018 = vrot.lane.b32.xlu0 %v2938, %s3017
        %v3019 = vpop.permute.xlu0 %3018
        %s3021 = sor.u32 256, 1
        %3022 = vrot.lane.b32.xlu0 %v2940, %s3021
        %v3023 = vpop.permute.xlu0 %3022
        %v3024 = vsel %vm2150, %v3019, %v3023
        %v3025 = vsel %vm2150, %v3023, %v3019
        %s3027 = sor.u32 256, 9
        %3028 = vrot.lane.b32.xlu0 %v2942, %s3027
        %v3029 = vpop.permute.xlu0 %3028
        %s3031 = sor.u32 256, 9
        %3032 = vrot.lane.b32.xlu0 %v2944, %s3031
        %v3033 = vpop.permute.xlu0 %3032
        %v3034 = vsel %vm2162, %v3029, %v3033
        %v3035 = vsel %vm2162, %v3033, %v3029
        %s3037 = sor.u32 256, 17
        %3038 = vrot.lane.b32.xlu0 %v2948, %s3037
        %v3039 = vpop.permute.xlu0 %3038
        %s3041 = sor.u32 256, 17
        %3042 = vrot.lane.b32.xlu0 %v2950, %s3041
        %v3043 = vpop.permute.xlu0 %3042
        %v3044 = vsel %vm2174, %v3039, %v3043
        %v3045 = vsel %vm2174, %v3043, %v3039
        %s3047 = sor.u32 256, 25
        %3048 = vrot.lane.b32.xlu0 %v2952, %s3047
        %v3049 = vpop.permute.xlu0 %3048
        %s3051 = sor.u32 256, 25
        %3052 = vrot.lane.b32.xlu0 %v2954, %s3051
        %v3053 = vpop.permute.xlu0 %3052
        %v3054 = vsel %vm2186, %v3049, %v3053
        %v3055 = vsel %vm2186, %v3053, %v3049
        %s3057 = sor.u32 256, 33
        %3058 = vrot.lane.b32.xlu0 %v2958, %s3057
        %v3059 = vpop.permute.xlu0 %3058
        %s3061 = sor.u32 256, 33
        %3062 = vrot.lane.b32.xlu0 %v2960, %s3061
        %v3063 = vpop.permute.xlu0 %3062
        %v3064 = vsel %vm2198, %v3059, %v3063
        %v3065 = vsel %vm2198, %v3063, %v3059
        %s3067 = sor.u32 256, 41
        %3068 = vrot.lane.b32.xlu0 %v2962, %s3067
        %v3069 = vpop.permute.xlu0 %3068
        %s3071 = sor.u32 256, 41
        %3072 = vrot.lane.b32.xlu0 %v2964, %s3071
        %v3073 = vpop.permute.xlu0 %3072
        %v3074 = vsel %vm2210, %v3069, %v3073
        %v3075 = vsel %vm2210, %v3073, %v3069
        %s3077 = sor.u32 256, 49
        %3078 = vrot.lane.b32.xlu0 %v2968, %s3077
        %v3079 = vpop.permute.xlu0 %3078
        %s3081 = sor.u32 256, 49
        %3082 = vrot.lane.b32.xlu0 %v2970, %s3081
        %v3083 = vpop.permute.xlu0 %3082
        %v3084 = vsel %vm2222, %v3079, %v3083
        %v3085 = vsel %vm2222, %v3083, %v3079
        %s3087 = sor.u32 256, 57
        %3088 = vrot.lane.b32.xlu0 %v2972, %s3087
        %v3089 = vpop.permute.xlu0 %3088
        %s3091 = sor.u32 256, 57
        %3092 = vrot.lane.b32.xlu0 %v2974, %s3091
        %v3093 = vpop.permute.xlu0 %3092
        %v3094 = vsel %vm2234, %v3089, %v3093
        %v3095 = vsel %vm2234, %v3093, %v3089
        %s3097 = sor.u32 256, 65
        %3098 = vrot.lane.b32.xlu0 %v2978, %s3097
        %v3099 = vpop.permute.xlu0 %3098
        %s3101 = sor.u32 256, 65
        %3102 = vrot.lane.b32.xlu0 %v2980, %s3101
        %v3103 = vpop.permute.xlu0 %3102
        %v3104 = vsel %vm2246, %v3099, %v3103
        %v3105 = vsel %vm2246, %v3103, %v3099
        %s3107 = sor.u32 256, 73
        %3108 = vrot.lane.b32.xlu0 %v2982, %s3107
        %v3109 = vpop.permute.xlu0 %3108
        %s3111 = sor.u32 256, 73
        %3112 = vrot.lane.b32.xlu0 %v2984, %s3111
        %v3113 = vpop.permute.xlu0 %3112
        %v3114 = vsel %vm2258, %v3109, %v3113
        %v3115 = vsel %vm2258, %v3113, %v3109
        %s3117 = sor.u32 256, 81
        %3118 = vrot.lane.b32.xlu0 %v2988, %s3117
        %v3119 = vpop.permute.xlu0 %3118
        %s3121 = sor.u32 256, 81
        %3122 = vrot.lane.b32.xlu0 %v2990, %s3121
        %v3123 = vpop.permute.xlu0 %3122
        %v3124 = vsel %vm2270, %v3119, %v3123
        %v3125 = vsel %vm2270, %v3123, %v3119
        %s3127 = sor.u32 256, 89
        %3128 = vrot.lane.b32.xlu0 %v2992, %s3127
        %v3129 = vpop.permute.xlu0 %3128
        %s3131 = sor.u32 256, 89
        %3132 = vrot.lane.b32.xlu0 %v2994, %s3131
        %v3133 = vpop.permute.xlu0 %3132
        %v3134 = vsel %vm2282, %v3129, %v3133
        %v3135 = vsel %vm2282, %v3133, %v3129
        %s3137 = sor.u32 256, 97
        %3138 = vrot.lane.b32.xlu0 %v2998, %s3137
        %v3139 = vpop.permute.xlu0 %3138
        %s3141 = sor.u32 256, 97
        %3142 = vrot.lane.b32.xlu0 %v3000, %s3141
        %v3143 = vpop.permute.xlu0 %3142
        %v3144 = vsel %vm2294, %v3139, %v3143
        %v3145 = vsel %vm2294, %v3143, %v3139
        %s3147 = sor.u32 256, 105
        %3148 = vrot.lane.b32.xlu0 %v3002, %s3147
        %v3149 = vpop.permute.xlu0 %3148
        %s3151 = sor.u32 256, 105
        %3152 = vrot.lane.b32.xlu0 %v3004, %s3151
        %v3153 = vpop.permute.xlu0 %3152
        %v3154 = vsel %vm2306, %v3149, %v3153
        %v3155 = vsel %vm2306, %v3153, %v3149
        %s3157 = sor.u32 256, 113
        %3158 = vrot.lane.b32.xlu0 %v3008, %s3157
        %v3159 = vpop.permute.xlu0 %3158
        %s3161 = sor.u32 256, 113
        %3162 = vrot.lane.b32.xlu0 %v3010, %s3161
        %v3163 = vpop.permute.xlu0 %3162
        %v3164 = vsel %vm2318, %v3159, %v3163
        %v3165 = vsel %vm2318, %v3163, %v3159
        %s3167 = sor.u32 256, 121
        %3168 = vrot.lane.b32.xlu0 %v3012, %s3167
        %v3169 = vpop.permute.xlu0 %3168
        %s3171 = sor.u32 256, 121
        %3172 = vrot.lane.b32.xlu0 %v3014, %s3171
        %v3173 = vpop.permute.xlu0 %3172
        %v3174 = vsel %vm2330, %v3169, %v3173
        %v3175 = vsel %vm2330, %v3173, %v3169
        %3176 = vmatprep.subr.bf16.mxu0 %v2848
        %3177 = vmatpush1.bf16.msra.mxu0 %v2847
        %3178 = vmatprep.subr.bf16.mxu0 %v2850
        %3179 = vmatpush1.bf16.msra.mxu0 %v2849
        %3180 = vmatprep.subr.bf16.mxu0 %v2852
        %3181 = vmatpush1.bf16.msra.mxu0 %v2851
        %3182 = vmatprep.subr.bf16.mxu0 %v2854
        %3183 = vmatpush1.bf16.msra.mxu0 %v2853
        %3184 = vmatprep.subr.bf16.mxu0 0
        %3185 = vmatpush1.bf16.msra.mxu0 0
        %3186 = vmatprep.subr.bf16.mxu0 0
        %3187 = vmatpush1.bf16.msra.mxu0 0
        %3188 = vmatprep.subr.bf16.mxu0 0
        %3189 = vmatpush1.bf16.msra.mxu0 0
        %3190 = vmatprep.subr.bf16.mxu0 0
        %3191 = vmatpush1.bf16.msra.mxu0 0
        %3192 = vmatprep.subr.bf16.mxu0 0
        %3193 = vmatpush1.bf16.msra.mxu0 0
        %3194 = vmatprep.subr.bf16.mxu0 0
        %3195 = vmatpush1.bf16.msra.mxu0 0
        %3196 = vmatprep.subr.bf16.mxu0 0
        %3197 = vmatpush1.bf16.msra.mxu0 0
        %3198 = vmatprep.subr.bf16.mxu0 0
        %3199 = vmatpush1.bf16.msra.mxu0 0
        %3200 = vmatprep.subr.bf16.mxu0 0
        %3201 = vmatpush1.bf16.msra.mxu0 0
        %3202 = vmatprep.subr.bf16.mxu0 0
        %3203 = vmatpush1.bf16.msra.mxu0 0
        %3204 = vmatprep.subr.bf16.mxu0 0
        %3205 = vmatpush1.bf16.msra.mxu0 0
        %3206 = vmatprep.subr.bf16.mxu0 0
        %3207 = vmatpush1.bf16.msra.mxu0 0
        %3208 = vmatprep.mubr.bf16.mxu0 0
        %3209 = vmatmul.mubr.bf16.gmra.mrb[0].mxu0 %v2880
        %v3210 = vpop.f32.mrb[0].mxu0
        %v3211 = vadd.f32 %v3025, %v3210
        %v3212 = vpop.f32.mrb[0].mxu0
        %v3213 = vadd.f32 %v3024, %v3212
        %v3214 = vpop.f32.mrb[0].mxu0
        %v3215 = vadd.f32 %v3035, %v3214
        %v3216 = vpop.f32.mrb[0].mxu0
        %v3217 = vadd.f32 %v3034, %v3216
        %3218 = vmatprep.mubr.bf16.mxu0 0
        %3219 = vmatmul.mubr.bf16.gmra.mrb[0].mxu0 %v2883
        %v3220 = vpop.f32.mrb[0].mxu0
        %v3221 = vadd.f32 %v3045, %v3220
        %v3222 = vpop.f32.mrb[0].mxu0
        %v3223 = vadd.f32 %v3044, %v3222
        %v3224 = vpop.f32.mrb[0].mxu0
        %v3225 = vadd.f32 %v3055, %v3224
        %v3226 = vpop.f32.mrb[0].mxu0
        %v3227 = vadd.f32 %v3054, %v3226
        %3228 = vmatprep.mubr.bf16.mxu0 0
        %3229 = vmatmul.mubr.bf16.gmra.mrb[0].mxu0 %v2886
        %v3230 = vpop.f32.mrb[0].mxu0
        %v3231 = vadd.f32 %v3065, %v3230
        %v3232 = vpop.f32.mrb[0].mxu0
        %v3233 = vadd.f32 %v3064, %v3232
        %v3234 = vpop.f32.mrb[0].mxu0
        %v3235 = vadd.f32 %v3075, %v3234
        %v3236 = vpop.f32.mrb[0].mxu0
        %v3237 = vadd.f32 %v3074, %v3236
        %3238 = vmatprep.mubr.bf16.mxu0 0
        %3239 = vmatmul.mubr.bf16.gmra.mrb[0].mxu0 %v2889
        %v3240 = vpop.f32.mrb[0].mxu0
        %v3241 = vadd.f32 %v3085, %v3240
        %v3242 = vpop.f32.mrb[0].mxu0
        %v3243 = vadd.f32 %v3084, %v3242
        %v3244 = vpop.f32.mrb[0].mxu0
        %v3245 = vadd.f32 %v3095, %v3244
        %v3246 = vpop.f32.mrb[0].mxu0
        %v3247 = vadd.f32 %v3094, %v3246
        %3248 = vmatprep.mubr.bf16.mxu0 0
        %3249 = vmatmul.mubr.bf16.gmra.mrb[0].mxu0 %v2892
        %v3250 = vpop.f32.mrb[0].mxu0
        %v3251 = vadd.f32 %v3105, %v3250
        %v3252 = vpop.f32.mrb[0].mxu0
        %v3253 = vadd.f32 %v3104, %v3252
        %v3254 = vpop.f32.mrb[0].mxu0
        %v3255 = vadd.f32 %v3115, %v3254
        %v3256 = vpop.f32.mrb[0].mxu0
        %v3257 = vadd.f32 %v3114, %v3256
        %3258 = vmatprep.mubr.bf16.mxu0 0
        %3259 = vmatmul.mubr.bf16.gmra.mrb[0].mxu0 %v2895
        %v3260 = vpop.f32.mrb[0].mxu0
        %v3261 = vadd.f32 %v3125, %v3260
        %v3262 = vpop.f32.mrb[0].mxu0
        %v3263 = vadd.f32 %v3124, %v3262
        %v3264 = vpop.f32.mrb[0].mxu0
        %v3265 = vadd.f32 %v3135, %v3264
        %v3266 = vpop.f32.mrb[0].mxu0
        %v3267 = vadd.f32 %v3134, %v3266
        %3268 = vmatprep.mubr.bf16.mxu0 0
        %3269 = vmatmul.mubr.bf16.gmra.mrb[0].mxu0 %v2898
        %v3270 = vpop.f32.mrb[0].mxu0
        %v3271 = vadd.f32 %v3145, %v3270
        %v3272 = vpop.f32.mrb[0].mxu0
        %v3273 = vadd.f32 %v3144, %v3272
        %v3274 = vpop.f32.mrb[0].mxu0
        %v3275 = vadd.f32 %v3155, %v3274
        %v3276 = vpop.f32.mrb[0].mxu0
        %v3277 = vadd.f32 %v3154, %v3276
        %3278 = vmatprep.mubr.bf16.mxu0 0
        %3279 = vmatmul.mubr.bf16.gmra.mrb[0].mxu0 %v2901
        %v3280 = vpop.f32.mrb[0].mxu0
        %v3281 = vadd.f32 %v3165, %v3280
        %v3282 = vpop.f32.mrb[0].mxu0
        %v3283 = vadd.f32 %v3164, %v3282
        %v3284 = vpop.f32.mrb[0].mxu0
        %v3285 = vadd.f32 %v3175, %v3284
        %v3286 = vpop.f32.mrb[0].mxu0
        %v3287 = vadd.f32 %v3174, %v3286
        %3288 = vdwg.mxu0
        %v3289 = vadd.f32 %v3211, %v1923
        %v3290 = vadd.f32 %v3213, %v1924
        %v3291 = vadd.f32 %v3215, %v1925
        %v3292 = vadd.f32 %v3217, %v1926
        %v3293 = vadd.f32 %v3221, %v1927
        %v3294 = vadd.f32 %v3223, %v1928
        %v3295 = vadd.f32 %v3225, %v1929
        %v3296 = vadd.f32 %v3227, %v1930
        %v3297 = vadd.f32 %v3231, %v1931
        %v3298 = vadd.f32 %v3233, %v1932
        %v3299 = vadd.f32 %v3235, %v1933
        %v3300 = vadd.f32 %v3237, %v1934
        %v3301 = vadd.f32 %v3241, %v1935
        %v3302 = vadd.f32 %v3243, %v1936
        %v3303 = vadd.f32 %v3245, %v1937
        %v3304 = vadd.f32 %v3247, %v1938
        %v3305 = vadd.f32 %v3251, %v1939
        %v3306 = vadd.f32 %v3253, %v1940
        %v3307 = vadd.f32 %v3255, %v1941
        %v3308 = vadd.f32 %v3257, %v1942
        %v3309 = vadd.f32 %v3261, %v1943
        %v3310 = vadd.f32 %v3263, %v1944
        %v3311 = vadd.f32 %v3265, %v1945
        %v3312 = vadd.f32 %v3267, %v1946
        %v3313 = vadd.f32 %v3271, %v1947
        %v3314 = vadd.f32 %v3273, %v1948
        %v3315 = vadd.f32 %v3275, %v1949
        %v3316 = vadd.f32 %v3277, %v1950
        %v3317 = vadd.f32 %v3281, %v1951
        %v3318 = vadd.f32 %v3283, %v1952
        %v3319 = vadd.f32 %v3285, %v1953
        %v3320 = vadd.f32 %v3287, %v1954
        %v3321 = vmax.f32 %v3289, %v3290
        %3322 = vmax.xlane.f32.xlu0 %v3321
        %v3323 = vpop.xlane.xlu0 %3322
        %v3324 = vmax.f32 %v3291, %v3292
        %3325 = vmax.xlane.f32.xlu0 %v3324
        %v3326 = vpop.xlane.xlu0 %3325
        %v3327 = vmax.f32 %v3293, %v3294
        %3328 = vmax.xlane.f32.xlu0 %v3327
        %v3329 = vpop.xlane.xlu0 %3328
        %v3330 = vmax.f32 %v3295, %v3296
        %3331 = vmax.xlane.f32.xlu0 %v3330
        %v3332 = vpop.xlane.xlu0 %3331
        %v3333 = vmax.f32 %v3297, %v3298
        %3334 = vmax.xlane.f32.xlu0 %v3333
        %v3335 = vpop.xlane.xlu0 %3334
        %v3336 = vmax.f32 %v3299, %v3300
        %3337 = vmax.xlane.f32.xlu0 %v3336
        %v3338 = vpop.xlane.xlu0 %3337
        %v3339 = vmax.f32 %v3301, %v3302
        %3340 = vmax.xlane.f32.xlu0 %v3339
        %v3341 = vpop.xlane.xlu0 %3340
        %v3342 = vmax.f32 %v3303, %v3304
        %3343 = vmax.xlane.f32.xlu0 %v3342
        %v3344 = vpop.xlane.xlu0 %3343
        %v3345 = vmax.f32 %v3305, %v3306
        %3346 = vmax.xlane.f32.xlu0 %v3345
        %v3347 = vpop.xlane.xlu0 %3346
        %v3348 = vmax.f32 %v3307, %v3308
        %3349 = vmax.xlane.f32.xlu0 %v3348
        %v3350 = vpop.xlane.xlu0 %3349
        %v3351 = vmax.f32 %v3309, %v3310
        %3352 = vmax.xlane.f32.xlu0 %v3351
        %v3353 = vpop.xlane.xlu0 %3352
        %v3354 = vmax.f32 %v3311, %v3312
        %3355 = vmax.xlane.f32.xlu0 %v3354
        %v3356 = vpop.xlane.xlu0 %3355
        %v3357 = vmax.f32 %v3313, %v3314
        %3358 = vmax.xlane.f32.xlu0 %v3357
        %v3359 = vpop.xlane.xlu0 %3358
        %v3360 = vmax.f32 %v3315, %v3316
        %3361 = vmax.xlane.f32.xlu0 %v3360
        %v3362 = vpop.xlane.xlu0 %3361
        %v3363 = vmax.f32 %v3317, %v3318
        %3364 = vmax.xlane.f32.xlu0 %v3363
        %v3365 = vpop.xlane.xlu0 %3364
        %v3366 = vmax.f32 %v3319, %v3320
        %3367 = vmax.xlane.f32.xlu0 %v3366
        %v3368 = vpop.xlane.xlu0 %3367
        %v3369 = vsub.f32 %v3289, %v3323
        %v3370 = vsub.f32 %v3290, %v3323
        %v3371 = vsub.f32 %v3291, %v3326
        %v3372 = vsub.f32 %v3292, %v3326
        %v3373 = vsub.f32 %v3293, %v3329
        %v3374 = vsub.f32 %v3294, %v3329
        %v3375 = vsub.f32 %v3295, %v3332
        %v3376 = vsub.f32 %v3296, %v3332
        %v3377 = vsub.f32 %v3297, %v3335
        %v3378 = vsub.f32 %v3298, %v3335
        %v3379 = vsub.f32 %v3299, %v3338
        %v3380 = vsub.f32 %v3300, %v3338
        %v3381 = vsub.f32 %v3301, %v3341
        %v3382 = vsub.f32 %v3302, %v3341
        %v3383 = vsub.f32 %v3303, %v3344
        %v3384 = vsub.f32 %v3304, %v3344
        %v3385 = vsub.f32 %v3305, %v3347
        %v3386 = vsub.f32 %v3306, %v3347
        %v3387 = vsub.f32 %v3307, %v3350
        %v3388 = vsub.f32 %v3308, %v3350
        %v3389 = vsub.f32 %v3309, %v3353
        %v3390 = vsub.f32 %v3310, %v3353
        %v3391 = vsub.f32 %v3311, %v3356
        %v3392 = vsub.f32 %v3312, %v3356
        %v3393 = vsub.f32 %v3313, %v3359
        %v3394 = vsub.f32 %v3314, %v3359
        %v3395 = vsub.f32 %v3315, %v3362
        %v3396 = vsub.f32 %v3316, %v3362
        %v3397 = vsub.f32 %v3317, %v3365
        %v3398 = vsub.f32 %v3318, %v3365
        %v3399 = vsub.f32 %v3319, %v3368
        %v3400 = vsub.f32 %v3320, %v3368
        %v3401 = vmul.f32 %v3369, 1.442695
        %v3402 = vpow.pop %v3401
        %v3403 = vmul.f32 %v3370, 1.442695
        %v3404 = vpow.pop %v3403
        %v3405 = vmul.f32 %v3371, 1.442695
        %v3406 = vpow.pop %v3405
        %v3407 = vmul.f32 %v3372, 1.442695
        %v3408 = vpow.pop %v3407
        %v3409 = vmul.f32 %v3373, 1.442695
        %v3410 = vpow.pop %v3409
        %v3411 = vmul.f32 %v3374, 1.442695
        %v3412 = vpow.pop %v3411
        %v3413 = vmul.f32 %v3375, 1.442695
        %v3414 = vpow.pop %v3413
        %v3415 = vmul.f32 %v3376, 1.442695
        %v3416 = vpow.pop %v3415
        %v3417 = vmul.f32 %v3377, 1.442695
        %v3418 = vpow.pop %v3417
        %v3419 = vmul.f32 %v3378, 1.442695
        %v3420 = vpow.pop %v3419
        %v3421 = vmul.f32 %v3379, 1.442695
        %v3422 = vpow.pop %v3421
        %v3423 = vmul.f32 %v3380, 1.442695
        %v3424 = vpow.pop %v3423
        %v3425 = vmul.f32 %v3381, 1.442695
        %v3426 = vpow.pop %v3425
        %v3427 = vmul.f32 %v3382, 1.442695
        %v3428 = vpow.pop %v3427
        %v3429 = vmul.f32 %v3383, 1.442695
        %v3430 = vpow.pop %v3429
        %v3431 = vmul.f32 %v3384, 1.442695
        %v3432 = vpow.pop %v3431
        %v3433 = vmul.f32 %v3385, 1.442695
        %v3434 = vpow.pop %v3433
        %v3435 = vmul.f32 %v3386, 1.442695
        %v3436 = vpow.pop %v3435
        %v3437 = vmul.f32 %v3387, 1.442695
        %v3438 = vpow.pop %v3437
        %v3439 = vmul.f32 %v3388, 1.442695
        %v3440 = vpow.pop %v3439
        %v3441 = vmul.f32 %v3389, 1.442695
        %v3442 = vpow.pop %v3441
        %v3443 = vmul.f32 %v3390, 1.442695
        %v3444 = vpow.pop %v3443
        %v3445 = vmul.f32 %v3391, 1.442695
        %v3446 = vpow.pop %v3445
        %v3447 = vmul.f32 %v3392, 1.442695
        %v3448 = vpow.pop %v3447
        %v3449 = vmul.f32 %v3393, 1.442695
        %v3450 = vpow.pop %v3449
        %v3451 = vmul.f32 %v3394, 1.442695
        %v3452 = vpow.pop %v3451
        %v3453 = vmul.f32 %v3395, 1.442695
        %v3454 = vpow.pop %v3453
        %v3455 = vmul.f32 %v3396, 1.442695
        %v3456 = vpow.pop %v3455
        %v3457 = vmul.f32 %v3397, 1.442695
        %v3458 = vpow.pop %v3457
        %v3459 = vmul.f32 %v3398, 1.442695
        %v3460 = vpow.pop %v3459
        %v3461 = vmul.f32 %v3399, 1.442695
        %v3462 = vpow.pop %v3461
        %v3463 = vmul.f32 %v3400, 1.442695
        %v3464 = vpow.pop %v3463
        %v3465 = vadd.f32 %v3402, %v3404
        %3466 = vadd.xlane.f32.xlu0 %v3465
        %v3467 = vpop.xlane.xlu0 %3466
        %v3468 = vadd.f32 %v3406, %v3408
        %3469 = vadd.xlane.f32.xlu0 %v3468
        %v3470 = vpop.xlane.xlu0 %3469
        %v3471 = vadd.f32 %v3410, %v3412
        %3472 = vadd.xlane.f32.xlu0 %v3471
        %v3473 = vpop.xlane.xlu0 %3472
        %v3474 = vadd.f32 %v3414, %v3416
        %3475 = vadd.xlane.f32.xlu0 %v3474
        %v3476 = vpop.xlane.xlu0 %3475
        %v3477 = vadd.f32 %v3418, %v3420
        %3478 = vadd.xlane.f32.xlu0 %v3477
        %v3479 = vpop.xlane.xlu0 %3478
        %v3480 = vadd.f32 %v3422, %v3424
        %3481 = vadd.xlane.f32.xlu0 %v3480
        %v3482 = vpop.xlane.xlu0 %3481
        %v3483 = vadd.f32 %v3426, %v3428
        %3484 = vadd.xlane.f32.xlu0 %v3483
        %v3485 = vpop.xlane.xlu0 %3484
        %v3486 = vadd.f32 %v3430, %v3432
        %3487 = vadd.xlane.f32.xlu0 %v3486
        %v3488 = vpop.xlane.xlu0 %3487
        %v3489 = vadd.f32 %v3434, %v3436
        %3490 = vadd.xlane.f32.xlu0 %v3489
        %v3491 = vpop.xlane.xlu0 %3490
        %v3492 = vadd.f32 %v3438, %v3440
        %3493 = vadd.xlane.f32.xlu0 %v3492
        %v3494 = vpop.xlane.xlu0 %3493
        %v3495 = vadd.f32 %v3442, %v3444
        %3496 = vadd.xlane.f32.xlu0 %v3495
        %v3497 = vpop.xlane.xlu0 %3496
        %v3498 = vadd.f32 %v3446, %v3448
        %3499 = vadd.xlane.f32.xlu0 %v3498
        %v3500 = vpop.xlane.xlu0 %3499
        %v3501 = vadd.f32 %v3450, %v3452
        %3502 = vadd.xlane.f32.xlu0 %v3501
        %v3503 = vpop.xlane.xlu0 %3502
        %v3504 = vadd.f32 %v3454, %v3456
        %3505 = vadd.xlane.f32.xlu0 %v3504
        %v3506 = vpop.xlane.xlu0 %3505
        %v3507 = vadd.f32 %v3458, %v3460
        %3508 = vadd.xlane.f32.xlu0 %v3507
        %v3509 = vpop.xlane.xlu0 %3508
        %v3510 = vadd.f32 %v3462, %v3464
        %3511 = vadd.xlane.f32.xlu0 %v3510
        %v3512 = vpop.xlane.xlu0 %3511
        %v3513 = vpack.c.bf16 %v3406, %v3402
        %v3514 = vpack.c.bf16 %v3408, %v3404
        %v3515 = vpack.c.bf16 %v3414, %v3410
        %v3516 = vpack.c.bf16 %v3416, %v3412
        %v3517 = vpack.c.bf16 %v3422, %v3418
        %v3518 = vpack.c.bf16 %v3424, %v3420
        %v3519 = vpack.c.bf16 %v3430, %v3426
        %v3520 = vpack.c.bf16 %v3432, %v3428
        %v3521 = vpack.c.bf16 %v3438, %v3434
        %v3522 = vpack.c.bf16 %v3440, %v3436
        %v3523 = vpack.c.bf16 %v3446, %v3442
        %v3524 = vpack.c.bf16 %v3448, %v3444
        %v3525 = vpack.c.bf16 %v3454, %v3450
        %v3526 = vpack.c.bf16 %v3456, %v3452
        %v3527 = vpack.c.bf16 %v3462, %v3458
        %v3528 = vpack.c.bf16 %v3464, %v3460
        %v3529 = vld [vmem:[#allocation3] sm:$0xff]
        %v3530 = vld [vmem:[#allocation3 + $0x8] sm:$0xff]
        %v3531 = vld [vmem:[#allocation3 + $0x10] sm:$0xff]
        %v3532 = vld [vmem:[#allocation3 + $0x18] sm:$0xff]
        %v3533 = vld [vmem:[#allocation3 + $0x20] sm:$0xff]
        %v3534 = vld [vmem:[#allocation3 + $0x28] sm:$0xff]
        %v3535 = vld [vmem:[#allocation3 + $0x30] sm:$0xff]
        %v3536 = vld [vmem:[#allocation3 + $0x38] sm:$0xff]
        %v3537 = vld [vmem:[#allocation3 + $0x40] sm:$0xff]
        %v3538 = vld [vmem:[#allocation3 + $0x48] sm:$0xff]
        %v3539 = vld [vmem:[#allocation3 + $0x50] sm:$0xff]
        %v3540 = vld [vmem:[#allocation3 + $0x58] sm:$0xff]
        %v3541 = vld [vmem:[#allocation3 + $0x60] sm:$0xff]
        %v3542 = vld [vmem:[#allocation3 + $0x68] sm:$0xff]
        %v3543 = vld [vmem:[#allocation3 + $0x70] sm:$0xff]
        %v3544 = vld [vmem:[#allocation3 + $0x78] sm:$0xff]
        %3561 = vrot.lane.b32.xlu0 %v3529, 64
        %v3562 = vpop.permute.xlu0 %3561
        %3563 = vrot.lane.b32.xlu0 %v3530, 64
        %v3564 = vpop.permute.xlu0 %3563
        %3565 = vrot.lane.b32.xlu0 %v3531, 64
        %v3566 = vpop.permute.xlu0 %3565
        %3567 = vrot.lane.b32.xlu0 %v3532, 64
        %v3568 = vpop.permute.xlu0 %3567
        %3569 = vrot.lane.b32.xlu0 %v3533, 64
        %v3570 = vpop.permute.xlu0 %3569
        %3571 = vrot.lane.b32.xlu0 %v3534, 64
        %v3572 = vpop.permute.xlu0 %3571
        %3573 = vrot.lane.b32.xlu0 %v3535, 64
        %v3574 = vpop.permute.xlu0 %3573
        %3575 = vrot.lane.b32.xlu0 %v3536, 64
        %v3576 = vpop.permute.xlu0 %3575
        %3577 = vrot.lane.b32.xlu0 %v3537, 64
        %v3578 = vpop.permute.xlu0 %3577
        %3579 = vrot.lane.b32.xlu0 %v3538, 64
        %v3580 = vpop.permute.xlu0 %3579
        %3581 = vrot.lane.b32.xlu0 %v3539, 64
        %v3582 = vpop.permute.xlu0 %3581
        %3583 = vrot.lane.b32.xlu0 %v3540, 64
        %v3584 = vpop.permute.xlu0 %3583
        %3585 = vrot.lane.b32.xlu0 %v3541, 64
        %v3586 = vpop.permute.xlu0 %3585
        %3587 = vrot.lane.b32.xlu0 %v3542, 64
        %v3588 = vpop.permute.xlu0 %3587
        %3589 = vrot.lane.b32.xlu0 %v3543, 64
        %v3590 = vpop.permute.xlu0 %3589
        %3591 = vrot.lane.b32.xlu0 %v3544, 64
        %v3592 = vpop.permute.xlu0 %3591
        %3609 = vmatprep.subr.bf16.mxu0 0
        %3610 = vmatpush1.bf16.msra.mxu0 %v3562
        %3611 = vmatprep.subr.bf16.mxu0 0
        %3612 = vmatpush1.bf16.msra.mxu0 %v3564
        %3613 = vmatprep.subr.bf16.mxu0 0
        %3614 = vmatpush1.bf16.msra.mxu0 %v3566
        %3615 = vmatprep.subr.bf16.mxu0 0
        %3616 = vmatpush1.bf16.msra.mxu0 %v3568
        %3617 = vmatprep.subr.bf16.mxu0 0
        %3618 = vmatpush1.bf16.msra.mxu0 %v3570
        %3619 = vmatprep.subr.bf16.mxu0 0
        %3620 = vmatpush1.bf16.msra.mxu0 %v3572
        %3621 = vmatprep.subr.bf16.mxu0 0
        %3622 = vmatpush1.bf16.msra.mxu0 %v3574
        %3623 = vmatprep.subr.bf16.mxu0 0
        %3624 = vmatpush1.bf16.msra.mxu0 %v3576
        %3625 = vmatprep.subr.bf16.mxu0 0
        %3626 = vmatpush1.bf16.msra.mxu0 %v3578
        %3627 = vmatprep.subr.bf16.mxu0 0
        %3628 = vmatpush1.bf16.msra.mxu0 %v3580
        %3629 = vmatprep.subr.bf16.mxu0 0
        %3630 = vmatpush1.bf16.msra.mxu0 %v3582
        %3631 = vmatprep.subr.bf16.mxu0 0
        %3632 = vmatpush1.bf16.msra.mxu0 %v3584
        %3633 = vmatprep.subr.bf16.mxu0 0
        %3634 = vmatpush1.bf16.msra.mxu0 %v3586
        %3635 = vmatprep.subr.bf16.mxu0 0
        %3636 = vmatpush1.bf16.msra.mxu0 %v3588
        %3637 = vmatprep.subr.bf16.mxu0 0
        %3638 = vmatpush1.bf16.msra.mxu0 %v3590
        %3639 = vmatprep.subr.bf16.mxu0 0
        %3640 = vmatpush1.bf16.msra.mxu0 %v3592
        %3641 = vmatprep.mubr.bf16.mxu0 %v3514
        %3642 = vmatmul.mubr.bf16.gmra.mrb[0].mxu0 %v3513
        %v3643 = vpop.f32.mrb[0].mxu0
        %v3644 = vadd.f32 0.0, %v3643
        %v3645 = vpop.f32.mrb[0].mxu0
        %v3646 = vpop.f32.mrb[0].mxu0
        %v3647 = vadd.f32 0.0, %v3646
        %v3648 = vpop.f32.mrb[0].mxu0
        %3649 = vmatprep.mubr.bf16.mxu0 %v3516
        %3650 = vmatmul.mubr.bf16.gmra.mrb[0].mxu0 %v3515
        %v3651 = vpop.f32.mrb[0].mxu0
        %v3652 = vadd.f32 0.0, %v3651
        %v3653 = vpop.f32.mrb[0].mxu0
        %v3654 = vpop.f32.mrb[0].mxu0
        %v3655 = vadd.f32 0.0, %v3654
        %v3656 = vpop.f32.mrb[0].mxu0
        %3657 = vmatprep.mubr.bf16.mxu0 %v3518
        %3658 = vmatmul.mubr.bf16.gmra.mrb[0].mxu0 %v3517
        %v3659 = vpop.f32.mrb[0].mxu0
        %v3660 = vadd.f32 0.0, %v3659
        %v3661 = vpop.f32.mrb[0].mxu0
        %v3662 = vpop.f32.mrb[0].mxu0
        %v3663 = vadd.f32 0.0, %v3662
        %v3664 = vpop.f32.mrb[0].mxu0
        %3665 = vmatprep.mubr.bf16.mxu0 %v3520
        %3666 = vmatmul.mubr.bf16.gmra.mrb[0].mxu0 %v3519
        %v3667 = vpop.f32.mrb[0].mxu0
        %v3668 = vadd.f32 0.0, %v3667
        %v3669 = vpop.f32.mrb[0].mxu0
        %v3670 = vpop.f32.mrb[0].mxu0
        %v3671 = vadd.f32 0.0, %v3670
        %v3672 = vpop.f32.mrb[0].mxu0
        %3673 = vmatprep.mubr.bf16.mxu0 %v3522
        %3674 = vmatmul.mubr.bf16.gmra.mrb[0].mxu0 %v3521
        %v3675 = vpop.f32.mrb[0].mxu0
        %v3676 = vadd.f32 0.0, %v3675
        %v3677 = vpop.f32.mrb[0].mxu0
        %v3678 = vpop.f32.mrb[0].mxu0
        %v3679 = vadd.f32 0.0, %v3678
        %v3680 = vpop.f32.mrb[0].mxu0
        %3681 = vmatprep.mubr.bf16.mxu0 %v3524
        %3682 = vmatmul.mubr.bf16.gmra.mrb[0].mxu0 %v3523
        %v3683 = vpop.f32.mrb[0].mxu0
        %v3684 = vadd.f32 0.0, %v3683
        %v3685 = vpop.f32.mrb[0].mxu0
        %v3686 = vpop.f32.mrb[0].mxu0
        %v3687 = vadd.f32 0.0, %v3686
        %v3688 = vpop.f32.mrb[0].mxu0
        %3689 = vmatprep.mubr.bf16.mxu0 %v3526
        %3690 = vmatmul.mubr.bf16.gmra.mrb[0].mxu0 %v3525
        %v3691 = vpop.f32.mrb[0].mxu0
        %v3692 = vadd.f32 0.0, %v3691
        %v3693 = vpop.f32.mrb[0].mxu0
        %v3694 = vpop.f32.mrb[0].mxu0
        %v3695 = vadd.f32 0.0, %v3694
        %v3696 = vpop.f32.mrb[0].mxu0
        %3697 = vmatprep.mubr.bf16.mxu0 %v3528
        %3698 = vmatmul.mubr.bf16.gmra.mrb[0].mxu0 %v3527
        %v3699 = vpop.f32.mrb[0].mxu0
        %v3700 = vadd.f32 0.0, %v3699
        %v3701 = vpop.f32.mrb[0].mxu0
        %v3702 = vpop.f32.mrb[0].mxu0
        %v3703 = vadd.f32 0.0, %v3702
        %v3704 = vpop.f32.mrb[0].mxu0
        %3705 = vdwg.mxu0
        %v3706 = vrcp.pop %v3467
        %v3707 = vrcp.pop %v3470
        %v3708 = vrcp.pop %v3473
        %v3709 = vrcp.pop %v3476
        %v3710 = vrcp.pop %v3479
        %v3711 = vrcp.pop %v3482
        %v3712 = vrcp.pop %v3485
        %v3713 = vrcp.pop %v3488
        %v3714 = vrcp.pop %v3491
        %v3715 = vrcp.pop %v3494
        %v3716 = vrcp.pop %v3497
        %v3717 = vrcp.pop %v3500
        %v3718 = vrcp.pop %v3503
        %v3719 = vrcp.pop %v3506
        %v3720 = vrcp.pop %v3509
        %v3721 = vrcp.pop %v3512
        %v3722 = vmul.f32 %v3644, %v3706
        %v3723 = vmul.f32 %v3647, %v3707
        %v3724 = vmul.f32 %v3652, %v3708
        %v3725 = vmul.f32 %v3655, %v3709
        %v3726 = vmul.f32 %v3660, %v3710
        %v3727 = vmul.f32 %v3663, %v3711
        %v3728 = vmul.f32 %v3668, %v3712
        %v3729 = vmul.f32 %v3671, %v3713
        %v3730 = vmul.f32 %v3676, %v3714
        %v3731 = vmul.f32 %v3679, %v3715
        %v3732 = vmul.f32 %v3684, %v3716
        %v3733 = vmul.f32 %v3687, %v3717
        %v3734 = vmul.f32 %v3692, %v3718
        %v3735 = vmul.f32 %v3695, %v3719
        %v3736 = vmul.f32 %v3700, %v3720
        %v3737 = vmul.f32 %v3703, %v3721
        %3754 = vrot.lane.b32.xlu0 %v3722, 64
        %v3755 = vpop.permute.xlu0 %3754
        %3756 = vrot.lane.b32.xlu0 %v3723, 64
        %v3757 = vpop.permute.xlu0 %3756
        %3758 = vrot.lane.b32.xlu0 %v3724, 64
        %v3759 = vpop.permute.xlu0 %3758
        %3760 = vrot.lane.b32.xlu0 %v3725, 64
        %v3761 = vpop.permute.xlu0 %3760
        %3762 = vrot.lane.b32.xlu0 %v3726, 64
        %v3763 = vpop.permute.xlu0 %3762
        %3764 = vrot.lane.b32.xlu0 %v3727, 64
        %v3765 = vpop.permute.xlu0 %3764
        %3766 = vrot.lane.b32.xlu0 %v3728, 64
        %v3767 = vpop.permute.xlu0 %3766
        %3768 = vrot.lane.b32.xlu0 %v3729, 64
        %v3769 = vpop.permute.xlu0 %3768
        %3770 = vrot.lane.b32.xlu0 %v3730, 64
        %v3771 = vpop.permute.xlu0 %3770
        %3772 = vrot.lane.b32.xlu0 %v3731, 64
        %v3773 = vpop.permute.xlu0 %3772
        %3774 = vrot.lane.b32.xlu0 %v3732, 64
        %v3775 = vpop.permute.xlu0 %3774
        %3776 = vrot.lane.b32.xlu0 %v3733, 64
        %v3777 = vpop.permute.xlu0 %3776
        %3778 = vrot.lane.b32.xlu0 %v3734, 64
        %v3779 = vpop.permute.xlu0 %3778
        %3780 = vrot.lane.b32.xlu0 %v3735, 64
        %v3781 = vpop.permute.xlu0 %3780
        %3782 = vrot.lane.b32.xlu0 %v3736, 64
        %v3783 = vpop.permute.xlu0 %3782
        %3784 = vrot.lane.b32.xlu0 %v3737, 64
        %v3785 = vpop.permute.xlu0 %3784
        %vm3802 = vcmask 1048064
        %3803 = vst.msk [vmem:[%s564] sm:$0xff] %vm3802, %v3755
        %3804 = vst.msk [vmem:[%s564 + $0x8] sm:$0xff] %vm3802, %v3757
        %3805 = vst.msk [vmem:[%s564 + $0x10] sm:$0xff] %vm3802, %v3759
        %3806 = vst.msk [vmem:[%s564 + $0x18] sm:$0xff] %vm3802, %v3761
        %3807 = vst.msk [vmem:[%s564 + $0x20] sm:$0xff] %vm3802, %v3763
        %3808 = vst.msk [vmem:[%s564 + $0x28] sm:$0xff] %vm3802, %v3765
        %3809 = vst.msk [vmem:[%s564 + $0x30] sm:$0xff] %vm3802, %v3767
        %3810 = vst.msk [vmem:[%s564 + $0x38] sm:$0xff] %vm3802, %v3769
        %3811 = vst.msk [vmem:[%s564 + $0x40] sm:$0xff] %vm3802, %v3771
        %3812 = vst.msk [vmem:[%s564 + $0x48] sm:$0xff] %vm3802, %v3773
        %3813 = vst.msk [vmem:[%s564 + $0x50] sm:$0xff] %vm3802, %v3775
        %3814 = vst.msk [vmem:[%s564 + $0x58] sm:$0xff] %vm3802, %v3777
        %3815 = vst.msk [vmem:[%s564 + $0x60] sm:$0xff] %vm3802, %v3779
        %3816 = vst.msk [vmem:[%s564 + $0x68] sm:$0xff] %vm3802, %v3781
        %3817 = vst.msk [vmem:[%s564 + $0x70] sm:$0xff] %vm3802, %v3783
        %3818 = vst.msk [vmem:[%s564 + $0x78] sm:$0xff] %vm3802, %v3785
        %s3819 = sand.u32 %s284, 1
        %s3820 = scalar_lea.sflag [#allocation6], %s3819
        %s3821 = sand.u32 %s284, 1
        %s3822 = smul.addr %s3821, 128
        %s3823 = scalar_lea.vmem [#allocation15], %s3822
        // Predicated region
        $region85: #{tpu_custom_call.1} parent=55 // pred_check
          %p3824 = pneg %p294
        $region86: #{tpu_custom_call.1} parent=55 // pred_check_branch
          %3826 = sbr.rel (%p3824) target = $region88
        $region87: #{tpu_custom_call.1} parent=55 // pred_region
          %s3827 = smul.u32 16, %s38
          %s3829 = ssub.s32 2048, 2048
          %3830 = vsyncadd %s3820, %s3829
          %s3831 = smul.addr %s3827, 2
          %s3832 = sadd.s32 %s37, %s3831
          %s3833 = smul.addr %s3832, 128
          %s3834 = scalar_lea.hbm %s9, %s3833
          %s3835 = sshll.u32 %s3823, 4
          %s3836 = int_to_ptr.vmem [resolvable:$true] %s3835
          %3841 = dma.vmem_to_hbm [thread:$0]  %s3836, 2048, %s3834, %s3820, 128, 256, 8
        $region88: #{tpu_custom_call.1} parent=55 // pred_fallthru
          _
      $region56: #{tpu_custom_call.1} parent=5 // pred_fallthru
        _
      %p3842 = scmp.le.s32.totalorder 2, %s28
      // Predicated region
      $region89: #{tpu_custom_call.1} parent=5 // pred_check
        %p3843 = pneg %p3842
      $region90: #{tpu_custom_call.1} parent=5 // pred_check_branch
        %3845 = sbr.rel (%p3843) target = $region92
      $region91: #{tpu_custom_call.1} parent=5 // pred_region
        %s3846 = ssub.s32 %s28, 2
        // Predicated region
        $region93: #{tpu_custom_call.1} parent=91 // pred_check
          %p3847 = pneg %p300
        $region94: #{tpu_custom_call.1} parent=91 // pred_check_branch
          %3849 = sbr.rel (%p3847) target = $region96
        $region95: #{tpu_custom_call.1} parent=91 // pred_region
          %s3850 = sand.u32 %s285, 1
          %s3851 = scalar_lea.sflag [#allocation6], %s3850
          %s3852 = sand.u32 %s285, 1
          %s3853 = smul.addr %s3852, 128
          %s3854 = scalar_lea.vmem [#allocation15], %s3853
          %3855 = dma.done %s3851, 2048
        $region96: #{tpu_custom_call.1} parent=91 // pred_fallthru
          _
      $region92: #{tpu_custom_call.1} parent=5 // pred_fallthru
        _
    $region6: #{tpu_custom_call.1} parent=1 // loop_footer
      %s32 = sadd.s32 1, %s28
    $region7: #{tpu_custom_call.1} parent=1 // loop_footer_branch
      %27 = sbr.rel target = $region3
    $region8: #{tpu_custom_call.1} parent=1 // loop_exit
      _
    %3856 = vsyncpa [#allocation5], 1
    %s3857 = scalar_lea.sflag [#allocation5], 1
    %3858 = vsyncpa %s3857, 1
    %3859 = vsyncpa [#allocation8], 1
    %s3860 = scalar_lea.sflag [#allocation8], 1
    %3861 = vsyncpa %s3860, 1
    %3862 = vsyncpa [#allocation11], 1
    %s3863 = scalar_lea.sflag [#allocation11], 1
    %3864 = vsyncpa %s3863, 1
    %3865 = vsyncpa [#allocation14], 1
    %s3866 = scalar_lea.sflag [#allocation14], 1
    %3867 = vsyncpa %s3866, 1
    %3868 = vsyncpa [#allocation6], 1
    %s3869 = scalar_lea.sflag [#allocation6], 1
    %3870 = vsyncpa %s3869, 1

</llo_original>
